<compile_context>
chip_gen: v6e
topology: v6e:2x2x1
jax: 0.10.0
libtpu: 0.0.40
codegen_flags: <defaults>
</compile_context>

<pallas_src>
import functools

import jax
import jax.numpy as jnp
from jax.experimental import pallas as pl
from jax.experimental.pallas import tpu as pltpu


# --------------------------- shared layer math --------------------------------
def _layer_forward(x, p, *, n_head, d_k, d_v, batch, seq):
    """One EncoderLayer on flattened tokens x: (batch*seq, d_model), float32.

    `p` holds kernel-format params: bf16 matmul weights (1/sqrt(d_k) folded
    into wq) and f32 LayerNorm params / biases.  Shared between the Pallas
    kernel body and the pure-JAX matched reference -> identical math.
    """
    f32, bf16 = jnp.float32, jnp.bfloat16
    n_tok = batch * seq
    d_model = x.shape[-1]

    def layer_norm(h, g, b):
        mu = jnp.mean(h, axis=-1, keepdims=True)
        var = jnp.mean((h - mu) ** 2, axis=-1, keepdims=True)
        return (h - mu) * jax.lax.rsqrt(var + 1e-6) * g + b

    xb = x.astype(bf16)
    # QKV projections: bf16 inputs, f32 MXU accumulation.
    q = jnp.dot(xb, p["wq"], preferred_element_type=f32)          # (N, H*dk)
    k = jnp.dot(xb, p["wk"], preferred_element_type=f32)          # (N, H*dk)
    v = jnp.dot(xb, p["wv"], preferred_element_type=f32)          # (N, H*dv)

    def split_heads(t, dh):
        # (N, H*dh) f32 -> (H*B, S, dh) bf16.  One cast for the full tensor,
        # 128-lane-aligned head slices, leading-axis concat (no lane relayout).
        tb = t.astype(bf16)
        parts = [tb[:, h * dh:(h + 1) * dh].reshape(batch, seq, dh)
                 for h in range(n_head)]
        return parts[0] if n_head == 1 else jnp.concatenate(parts, axis=0)

    qh = split_heads(q, d_k)                                      # (H*B, S, dk)
    kh = split_heads(k, d_k)
    vh = split_heads(v, d_v)

    # Single batched contraction over the merged (head, batch) axis per layer.
    logits = jnp.einsum("bqd,bkd->bqk", qh, kh,
                        preferred_element_type=f32)               # (H*B, S, S)
    logits = logits - jnp.max(logits, axis=-1, keepdims=True)
    e = jnp.exp(logits)
    prob = e / jnp.sum(e, axis=-1, keepdims=True)                 # exact softmax
    oh = jnp.einsum("bqk,bkd->bqd", prob.astype(bf16), vh,
                    preferred_element_type=f32)                   # (H*B, S, dv)

    # Output projection: batched over heads and summed (equivalent to the
    # concat-heads @ Wo formulation, but with no lane concatenation).
    oh = oh.reshape(n_head, n_tok, d_v).astype(bf16)              # (H, N, dv)
    wo = p["wo"].reshape(n_head, d_v, d_model)                    # (H, dv, D)
    att = jnp.einsum("hnd,hde->hne", oh, wo,
                     preferred_element_type=f32).sum(axis=0)      # (N, D)

    out1 = layer_norm(x + att, p["ln1_g"], p["ln1_b"])            # residual + LN1

    hid = jnp.dot(out1.astype(bf16), p["w1"],
                  preferred_element_type=f32) + p["b1"]           # (N, d_inner)
    hid = jnp.maximum(hid, 0.0)                                   # ReLU
    ffn = jnp.dot(hid.astype(bf16), p["w2"],
                  preferred_element_type=f32) + p["b2"]           # (N, D)

    return layer_norm(out1 + ffn, p["ln2_g"], p["ln2_b"])         # residual + LN2


# ------------------------------ Pallas kernel ---------------------------------
def transformer_kernel(x_ref, wq_ref, wk_ref, wv_ref, wo_ref,
                       ln1g_ref, ln1b_ref, w1_ref, b1_ref,
                       w2_ref, b2_ref, ln2g_ref, ln2b_ref,
                       out_ref, carry_ref,
                       *, n_head, d_k, d_v, batch, seq):
    """Grid step = one encoder layer.  Weights for layer l are the current
    blocks (layer l+1 is prefetched by the pipeline); activations live in the
    VMEM `carry_ref` scratch across steps."""
    l = pl.program_id(0)

    @pl.when(l == 0)
    def _():
        carry_ref[...] = x_ref[...]

    p = dict(wq=wq_ref[...], wk=wk_ref[...], wv=wv_ref[...], wo=wo_ref[...],
             ln1_g=ln1g_ref[...], ln1_b=ln1b_ref[...],
             w1=w1_ref[...], b1=b1_ref[...], w2=w2_ref[...], b2=b2_ref[...],
             ln2_g=ln2g_ref[...], ln2_b=ln2b_ref[...])
    y = _layer_forward(carry_ref[...], p, n_head=n_head, d_k=d_k, d_v=d_v,
                       batch=batch, seq=seq)
    carry_ref[...] = y

    @pl.when(l == pl.num_programs(0) - 1)
    def _():
        out_ref[...] = y.astype(out_ref.dtype)


# -------------------------------- Wrapper --------------------------------------
def transformer_forward(x, kernel_params, *, n_head, d_k, d_v):
    """x: (B, S, d_model) f32.  kernel_params: list (len = n_layers) of dicts
    from prepare_kernel_params().  Returns (B, S, d_model) f32."""
    B, S, D = x.shape
    L = len(kernel_params)
    N = B * S
    d_inner = kernel_params[0]["w1"].shape[-1]

    # Stack each weight kind across layers -> one input array per kind.
    stacked = {k: jnp.stack([p[k] for p in kernel_params])
               for k in kernel_params[0]}
    x2d = x.reshape(N, D)                       # wrapper reshape: free metadata

    def per_layer(arr):
        # stacked (L, a, b): squeeze the layer dim, full extent on the rest.
        return pl.BlockSpec((None,) + arr.shape[1:], lambda l: (l, 0, 0))

    def full(arr):
        return pl.BlockSpec(arr.shape, lambda l: (0,) * arr.ndim)

    weight_order = ("wq", "wk", "wv", "wo", "ln1_g", "ln1_b",
                    "w1", "b1", "w2", "b2", "ln2_g", "ln2_b")
    in_specs = [full(x2d)] + [per_layer(stacked[k]) for k in weight_order]

    # Advisory cost estimate (matmul flops + exp/rsqrt + weight/activation bytes).
    flops = L * (6 * N * D * n_head * d_k
                 + 2 * B * n_head * S * S * (d_k + d_v)
                 + 2 * N * n_head * d_v * D
                 + 4 * N * D * d_inner)
    transcendentals = L * (B * n_head * S * S + 2 * N)
    bytes_accessed = 2 * N * D * 4 + sum(int(v.size) * v.dtype.itemsize
                                         for v in stacked.values())

    kernel = functools.partial(transformer_kernel, n_head=n_head, d_k=d_k,
                               d_v=d_v, batch=B, seq=S)
    out2d = pl.pallas_call(
        kernel,
        grid=(L,),
        out_shape=jax.ShapeDtypeStruct((N, D), x.dtype),
        in_specs=in_specs,
        out_specs=pl.BlockSpec((N, D), lambda l: (0, 0)),
        scratch_shapes=[pltpu.VMEM((N, D), jnp.float32)],
        compiler_params=pltpu.CompilerParams(
            dimension_semantics=("arbitrary",)),
        cost_estimate=pl.CostEstimate(flops=flops,
                                      transcendentals=transcendentals,
                                      bytes_accessed=bytes_accessed),
    )(x2d, *[stacked[k] for k in weight_order])
    return out2d.reshape(B, S, D)


# --------------------------- parameter preparation -----------------------------
def init_layer_params(key, d_model, d_inner, n_head, d_k, d_v):
    """Deterministic f32 parameters with torch-like layout (y = x @ W + b)."""
    ks = jax.random.split(key, 10)
    s = 0.05
    return {
        "wq": s * jax.random.normal(ks[0], (d_model, n_head * d_k), jnp.float32),
        "wk": s * jax.random.normal(ks[1], (d_model, n_head * d_k), jnp.float32),
        "wv": s * jax.random.normal(ks[2], (d_model, n_head * d_v), jnp.float32),
        "wo": s * jax.random.normal(ks[3], (n_head * d_v, d_model), jnp.float32),
        "w1": s * jax.random.normal(ks[4], (d_model, d_inner), jnp.float32),
        "b1": s * jax.random.normal(ks[5], (1, d_inner), jnp.float32),
        "w2": s * jax.random.normal(ks[6], (d_inner, d_model), jnp.float32),
        "b2": s * jax.random.normal(ks[7], (1, d_model), jnp.float32),
        "ln1_g": jnp.ones((1, d_model), jnp.float32)
                 + 0.1 * jax.random.normal(ks[8], (1, d_model), jnp.float32),
        "ln1_b": 0.1 * jax.random.normal(ks[9], (1, d_model), jnp.float32),
        "ln2_g": jnp.ones((1, d_model), jnp.float32),
        "ln2_b": jnp.zeros((1, d_model), jnp.float32),
    }


def prepare_kernel_params(p, *, d_k):
    """Fold 1/sqrt(d_k) into Wq and cast the six big matmul weights to bf16
    (MXU-native); LayerNorm params and biases stay f32."""
    bf16 = jnp.bfloat16
    scale = 1.0 / float(d_k) ** 0.5
    return {
        "wq": (p["wq"] * scale).astype(bf16),
        "wk": p["wk"].astype(bf16),
        "wv": p["wv"].astype(bf16),
        "wo": p["wo"].astype(bf16),
        "w1": p["w1"].astype(bf16),
        "w2": p["w2"].astype(bf16),
        "b1": p["b1"], "b2": p["b2"],
        "ln1_g": p["ln1_g"], "ln1_b": p["ln1_b"],
        "ln2_g": p["ln2_g"], "ln2_b": p["ln2_b"],
    }


# ------------------------ pure-f32 module reference ----------------------------
def transformer_ref_f32(x, params_list, *, n_head, d_k, d_v):
    """Full-f32 reference of the original PyTorch module (eval mode, mask=None)."""
    hp = jax.lax.Precision.HIGHEST

    def ln(h, g, b):
        mu = jnp.mean(h, axis=-1, keepdims=True)
        var = jnp.mean((h - mu) ** 2, axis=-1, keepdims=True)
        return (h - mu) / jnp.sqrt(var + 1e-6) * g + b

    B, S, _ = x.shape
    out = x
    for p in params_list:
        q = jnp.einsum("bsd,de->bse", out, p["wq"], precision=hp)
        k = jnp.einsum("bsd,de->bse", out, p["wk"], precision=hp)
        v = jnp.einsum("bsd,de->bse", out, p["wv"], precision=hp)
        q = q.reshape(B, S, n_head, d_k).transpose(0, 2, 1, 3) / (d_k ** 0.5)
        k = k.reshape(B, S, n_head, d_k).transpose(0, 2, 1, 3)
        v = v.reshape(B, S, n_head, d_v).transpose(0, 2, 1, 3)
        logits = jnp.einsum("bhqd,bhkd->bhqk", q, k, precision=hp)
        attn = jax.nn.softmax(logits, axis=-1)
        o = jnp.einsum("bhqk,bhkd->bhqd", attn, v, precision=hp)
        o = o.transpose(0, 2, 1, 3).reshape(B, S, n_head * d_v)
        att = jnp.einsum("bse,ed->bsd", o, p["wo"], precision=hp)
        out1 = ln(out + att, p["ln1_g"][0], p["ln1_b"][0])
        hid = jnp.maximum(
            jnp.einsum("bsd,df->bsf", out1, p["w1"], precision=hp) + p["b1"][0], 0.0)
        ffn = jnp.einsum("bsf,fd->bsd", hid, p["w2"], precision=hp) + p["b2"][0]
        out = ln(out1 + ffn, p["ln2_g"][0], p["ln2_b"][0])
    return out


# ----------------------------------- main ---------------------------------------
if __name__ == "__main__":
    # Module-default feature sizes, small batch/seq:
    B, S = 2, 8
    d_model, d_inner = 256, 1024
    n_layers, n_head, d_k, d_v = 3, 2, 128, 128

    key = jax.random.PRNGKey(0)
    kx, kp = jax.random.split(key)
    x = jax.random.normal(kx, (B, S, d_model), jnp.float32)

    layer_keys = jax.random.split(kp, n_layers)
    raw_params = [init_layer_params(k, d_model, d_inner, n_head, d_k, d_v)
                  for k in layer_keys]
    kparams = [prepare_kernel_params(p, d_k=d_k) for p in raw_params]

    out = transformer_forward(x, kparams, n_head=n_head, d_k=d_k, d_v=d_v)
    out = jax.block_until_ready(out)
    assert out.shape == (B, S, d_model)

    # (1) Matched pure-JAX reference: identical bf16-input / f32-accumulate
    #     math (exact softmax division in both places).
    ref = x.reshape(B * S, d_model)
    for p in kparams:
        ref = _layer_forward(ref, p, n_head=n_head, d_k=d_k, d_v=d_v,
                             batch=B, seq=S)
    ref = ref.reshape(B, S, d_model)
    assert jnp.allclose(out, ref, atol=2e-2, rtol=2e-2), \
        float(jnp.max(jnp.abs(out - ref)))

    # (2) Full-f32 reference of the original module; loose tolerance bounds the
    #     drift introduced by running the big matmuls with bf16 inputs.
    ref32 = transformer_ref_f32(x, raw_params, n_head=n_head, d_k=d_k, d_v=d_v)
    assert jnp.allclose(out, ref32, atol=1e-1, rtol=1e-1), \
        float(jnp.max(jnp.abs(out - ref32)))

    print("KERNEL_OK")
</pallas_src>

<mosaic_0001>
module attributes {stable_mosaic.version = 11 : i64} {
  func.func @transformer_kernel(%arg0: i32, %arg1: memref<16x256xf32, #tpu.memory_space<vmem>>, %arg2: memref<1x256x256xbf16, #tpu.memory_space<vmem>>, %arg3: memref<1x256x256xbf16, #tpu.memory_space<vmem>>, %arg4: memref<1x256x256xbf16, #tpu.memory_space<vmem>>, %arg5: memref<1x256x256xbf16, #tpu.memory_space<vmem>>, %arg6: memref<1x1x256xf32, #tpu.memory_space<vmem>>, %arg7: memref<1x1x256xf32, #tpu.memory_space<vmem>>, %arg8: memref<1x256x1024xbf16, #tpu.memory_space<vmem>>, %arg9: memref<1x1x1024xf32, #tpu.memory_space<vmem>>, %arg10: memref<1x1024x256xbf16, #tpu.memory_space<vmem>>, %arg11: memref<1x1x256xf32, #tpu.memory_space<vmem>>, %arg12: memref<1x1x256xf32, #tpu.memory_space<vmem>>, %arg13: memref<1x1x256xf32, #tpu.memory_space<vmem>>, %arg14: memref<16x256xf32, #tpu.memory_space<vmem>>, %arg15: memref<16x256xf32, #tpu.memory_space<vmem>>) attributes {dimension_semantics = [#tpu.dimension_semantics<arbitrary>], iteration_bounds = array<i64: 3>, scalar_prefetch = 0 : i64, scratch_operands = 1 : i64, tpu.core_type = #tpu.core_type<tc>, window_params = [{pipeline_mode = #tpu.pipeline_mode<synchronous>, transform_indices = @transform_0, window_bounds = array<i64: 16, 256>}, {transform_indices = @transform_1, window_bounds = array<i64: 1, 256, 256>}, {transform_indices = @transform_2, window_bounds = array<i64: 1, 256, 256>}, {transform_indices = @transform_3, window_bounds = array<i64: 1, 256, 256>}, {transform_indices = @transform_4, window_bounds = array<i64: 1, 256, 256>}, {transform_indices = @transform_5, window_bounds = array<i64: 1, 1, 256>}, {transform_indices = @transform_6, window_bounds = array<i64: 1, 1, 256>}, {transform_indices = @transform_7, window_bounds = array<i64: 1, 256, 1024>}, {transform_indices = @transform_8, window_bounds = array<i64: 1, 1, 1024>}, {transform_indices = @transform_9, window_bounds = array<i64: 1, 1024, 256>}, {transform_indices = @transform_10, window_bounds = array<i64: 1, 1, 256>}, {transform_indices = @transform_11, window_bounds = array<i64: 1, 1, 256>}, {transform_indices = @transform_12, window_bounds = array<i64: 1, 1, 256>}, {pipeline_mode = #tpu.pipeline_mode<synchronous>, transform_indices = @transform_13, window_bounds = array<i64: 16, 256>}]} {
    %c0_i32 = arith.constant 0 : i32
    %0 = arith.cmpi eq, %arg0, %c0_i32 : i32
    %1 = arith.extui %0 : i1 to i32
    %c0_i32_0 = arith.constant 0 : i32
    %2 = arith.cmpi ne, %1, %c0_i32_0 : i32
    scf.if %2 {
      %c0_62 = arith.constant 0 : index
      %c0_63 = arith.constant 0 : index
      %127 = vector.load %arg1[%c0_62, %c0_63] : memref<16x256xf32, #tpu.memory_space<vmem>>, vector<16x256xf32>
      %c0_64 = arith.constant 0 : index
      %c0_65 = arith.constant 0 : index
      %128 = vector.load %arg15[%c0_64, %c0_65] : memref<16x256xf32, #tpu.memory_space<vmem>>, vector<16x256xf32>
      tpu.vector_store %arg15[%c0_64, %c0_65], %127 {strides = array<i32>} : memref<16x256xf32, #tpu.memory_space<vmem>>, vector<16x256xf32>,
    } else {
    }
    %c0 = arith.constant 0 : index
    %c0_1 = arith.constant 0 : index
    %c0_2 = arith.constant 0 : index
    %3 = vector.load %arg2[%c0, %c0_1, %c0_2] : memref<1x256x256xbf16, #tpu.memory_space<vmem>>, vector<1x256x256xbf16>
    %4 = vector.shape_cast %3 : vector<1x256x256xbf16> to vector<256x256xbf16>
    %c0_3 = arith.constant 0 : index
    %c0_4 = arith.constant 0 : index
    %c0_5 = arith.constant 0 : index
    %5 = vector.load %arg3[%c0_3, %c0_4, %c0_5] : memref<1x256x256xbf16, #tpu.memory_space<vmem>>, vector<1x256x256xbf16>
    %6 = vector.shape_cast %5 : vector<1x256x256xbf16> to vector<256x256xbf16>
    %c0_6 = arith.constant 0 : index
    %c0_7 = arith.constant 0 : index
    %c0_8 = arith.constant 0 : index
    %7 = vector.load %arg4[%c0_6, %c0_7, %c0_8] : memref<1x256x256xbf16, #tpu.memory_space<vmem>>, vector<1x256x256xbf16>
    %8 = vector.shape_cast %7 : vector<1x256x256xbf16> to vector<256x256xbf16>
    %c0_9 = arith.constant 0 : index
    %c0_10 = arith.constant 0 : index
    %c0_11 = arith.constant 0 : index
    %9 = vector.load %arg5[%c0_9, %c0_10, %c0_11] : memref<1x256x256xbf16, #tpu.memory_space<vmem>>, vector<1x256x256xbf16>
    %10 = vector.shape_cast %9 : vector<1x256x256xbf16> to vector<256x256xbf16>
    %c0_12 = arith.constant 0 : index
    %c0_13 = arith.constant 0 : index
    %c0_14 = arith.constant 0 : index
    %11 = vector.load %arg6[%c0_12, %c0_13, %c0_14] : memref<1x1x256xf32, #tpu.memory_space<vmem>>, vector<1x1x256xf32>
    %12 = vector.shape_cast %11 : vector<1x1x256xf32> to vector<1x256xf32>
    %c0_15 = arith.constant 0 : index
    %c0_16 = arith.constant 0 : index
    %c0_17 = arith.constant 0 : index
    %13 = vector.load %arg7[%c0_15, %c0_16, %c0_17] : memref<1x1x256xf32, #tpu.memory_space<vmem>>, vector<1x1x256xf32>
    %14 = vector.shape_cast %13 : vector<1x1x256xf32> to vector<1x256xf32>
    %c0_18 = arith.constant 0 : index
    %c0_19 = arith.constant 0 : index
    %c0_20 = arith.constant 0 : index
    %15 = vector.load %arg8[%c0_18, %c0_19, %c0_20] : memref<1x256x1024xbf16, #tpu.memory_space<vmem>>, vector<1x256x1024xbf16>
    %16 = vector.shape_cast %15 : vector<1x256x1024xbf16> to vector<256x1024xbf16>
    %c0_21 = arith.constant 0 : index
    %c0_22 = arith.constant 0 : index
    %c0_23 = arith.constant 0 : index
    %17 = vector.load %arg9[%c0_21, %c0_22, %c0_23] : memref<1x1x1024xf32, #tpu.memory_space<vmem>>, vector<1x1x1024xf32>
    %18 = vector.shape_cast %17 : vector<1x1x1024xf32> to vector<1x1024xf32>
    %c0_24 = arith.constant 0 : index
    %c0_25 = arith.constant 0 : index
    %c0_26 = arith.constant 0 : index
    %19 = vector.load %arg10[%c0_24, %c0_25, %c0_26] : memref<1x1024x256xbf16, #tpu.memory_space<vmem>>, vector<1x1024x256xbf16>
    %20 = vector.shape_cast %19 : vector<1x1024x256xbf16> to vector<1024x256xbf16>
    %c0_27 = arith.constant 0 : index
    %c0_28 = arith.constant 0 : index
    %c0_29 = arith.constant 0 : index
    %21 = vector.load %arg11[%c0_27, %c0_28, %c0_29] : memref<1x1x256xf32, #tpu.memory_space<vmem>>, vector<1x1x256xf32>
    %22 = vector.shape_cast %21 : vector<1x1x256xf32> to vector<1x256xf32>
    %c0_30 = arith.constant 0 : index
    %c0_31 = arith.constant 0 : index
    %c0_32 = arith.constant 0 : index
    %23 = vector.load %arg12[%c0_30, %c0_31, %c0_32] : memref<1x1x256xf32, #tpu.memory_space<vmem>>, vector<1x1x256xf32>
    %24 = vector.shape_cast %23 : vector<1x1x256xf32> to vector<1x256xf32>
    %c0_33 = arith.constant 0 : index
    %c0_34 = arith.constant 0 : index
    %c0_35 = arith.constant 0 : index
    %25 = vector.load %arg13[%c0_33, %c0_34, %c0_35] : memref<1x1x256xf32, #tpu.memory_space<vmem>>, vector<1x1x256xf32>
    %26 = vector.shape_cast %25 : vector<1x1x256xf32> to vector<1x256xf32>
    %c0_36 = arith.constant 0 : index
    %c0_37 = arith.constant 0 : index
    %27 = vector.load %arg15[%c0_36, %c0_37] : memref<16x256xf32, #tpu.memory_space<vmem>>, vector<16x256xf32>
    %28 = arith.truncf %27 : vector<16x256xf32> to vector<16x256xbf16>
    %cst = arith.constant dense<0.000000e+00> : vector<16x256xf32>
    %29 = tpu.matmul %28, %4, %cst {dimension_numbers = #tpu.dot_dimension_numbers<[1], [0], [0], [1], [0, 0, 1, 1], [], []>} : vector<16x256xbf16>, vector<256x256xbf16>, vector<16x256xf32> -> vector<16x256xf32>
    %cst_38 = arith.constant dense<0.000000e+00> : vector<16x256xf32>
    %30 = tpu.matmul %28, %6, %cst_38 {dimension_numbers = #tpu.dot_dimension_numbers<[1], [0], [0], [1], [0, 0, 1, 1], [], []>} : vector<16x256xbf16>, vector<256x256xbf16>, vector<16x256xf32> -> vector<16x256xf32>
    %cst_39 = arith.constant dense<0.000000e+00> : vector<16x256xf32>
    %31 = tpu.matmul %28, %8, %cst_39 {dimension_numbers = #tpu.dot_dimension_numbers<[1], [0], [0], [1], [0, 0, 1, 1], [], []>} : vector<16x256xbf16>, vector<256x256xbf16>, vector<16x256xf32> -> vector<16x256xf32>
    %32 = arith.truncf %29 : vector<16x256xf32> to vector<16x256xbf16>
    %33 = vector.extract_strided_slice %32 {offsets = [0, 0], sizes = [16, 128], strides = [1, 1]} : vector<16x256xbf16> to vector<16x128xbf16>
    %34 = vector.shape_cast %33 : vector<16x128xbf16> to vector<2x8x128xbf16>
    %35 = vector.extract_strided_slice %32 {offsets = [0, 128], sizes = [16, 128], strides = [1, 1]} : vector<16x256xbf16> to vector<16x128xbf16>
    %36 = vector.shape_cast %35 : vector<16x128xbf16> to vector<2x8x128xbf16>
    %37 = tpu.concatenate %34, %36 in 0 : vector<2x8x128xbf16>, vector<2x8x128xbf16> -> vector<4x8x128xbf16>
    %38 = arith.truncf %30 : vector<16x256xf32> to vector<16x256xbf16>
    %39 = vector.extract_strided_slice %38 {offsets = [0, 0], sizes = [16, 128], strides = [1, 1]} : vector<16x256xbf16> to vector<16x128xbf16>
    %40 = vector.shape_cast %39 : vector<16x128xbf16> to vector<2x8x128xbf16>
    %41 = vector.extract_strided_slice %38 {offsets = [0, 128], sizes = [16, 128], strides = [1, 1]} : vector<16x256xbf16> to vector<16x128xbf16>
    %42 = vector.shape_cast %41 : vector<16x128xbf16> to vector<2x8x128xbf16>
    %43 = tpu.concatenate %40, %42 in 0 : vector<2x8x128xbf16>, vector<2x8x128xbf16> -> vector<4x8x128xbf16>
    %44 = arith.truncf %31 : vector<16x256xf32> to vector<16x256xbf16>
    %45 = vector.extract_strided_slice %44 {offsets = [0, 0], sizes = [16, 128], strides = [1, 1]} : vector<16x256xbf16> to vector<16x128xbf16>
    %46 = vector.shape_cast %45 : vector<16x128xbf16> to vector<2x8x128xbf16>
    %47 = vector.extract_strided_slice %44 {offsets = [0, 128], sizes = [16, 128], strides = [1, 1]} : vector<16x256xbf16> to vector<16x128xbf16>
    %48 = vector.shape_cast %47 : vector<16x128xbf16> to vector<2x8x128xbf16>
    %49 = tpu.concatenate %46, %48 in 0 : vector<2x8x128xbf16>, vector<2x8x128xbf16> -> vector<4x8x128xbf16>
    "tpu.trace_start"() <{level = 10 : i32, message = "bqd,bkd->bqk"}> : () -> ()
    %cst_40 = arith.constant dense<0.000000e+00> : vector<4x8x8xf32>
    %50 = tpu.matmul %37, %43, %cst_40 {dimension_numbers = #tpu.dot_dimension_numbers<[2], [2], [1], [1], [0, 0, 0, 1, 1, 1], [0], [0]>} : vector<4x8x128xbf16>, vector<4x8x128xbf16>, vector<4x8x8xf32> -> vector<4x8x8xf32>
    "tpu.trace_stop"() : () -> ()
    %cst_41 = arith.constant dense<0xFF800000> : vector<4x8xf32>
    %51 = vector.multi_reduction <maximumf>, %50, %cst_41 [2] : vector<4x8x8xf32> to vector<4x8xf32>
    %52 = vector.shape_cast %51 : vector<4x8xf32> to vector<4x8x1xf32>
    %53 = vector.broadcast %52 : vector<4x8x1xf32> to vector<4x8x8xf32>
    %54 = arith.subf %50, %53 : vector<4x8x8xf32>
    %55 = math.exp %54 : vector<4x8x8xf32>
    %cst_42 = arith.constant dense<0.000000e+00> : vector<4x8xf32>
    %56 = vector.multi_reduction <add>, %55, %cst_42 [2] : vector<4x8x8xf32> to vector<4x8xf32>
    %57 = vector.shape_cast %56 : vector<4x8xf32> to vector<4x8x1xf32>
    %58 = vector.broadcast %57 : vector<4x8x1xf32> to vector<4x8x8xf32>
    %59 = arith.divf %55, %58 : vector<4x8x8xf32>
    %60 = arith.truncf %59 : vector<4x8x8xf32> to vector<4x8x8xbf16>
    "tpu.trace_start"() <{level = 10 : i32, message = "bqk,bkd->bqd"}> : () -> ()
    %cst_43 = arith.constant dense<0.000000e+00> : vector<4x8x128xf32>
    %61 = tpu.matmul %60, %49, %cst_43 {dimension_numbers = #tpu.dot_dimension_numbers<[2], [1], [1], [2], [0, 0, 0, 1, 1, 2], [0], [0]>} : vector<4x8x8xbf16>, vector<4x8x128xbf16>, vector<4x8x128xf32> -> vector<4x8x128xf32>
    "tpu.trace_stop"() : () -> ()
    %62 = vector.shape_cast %61 : vector<4x8x128xf32> to vector<2x16x128xf32>
    %63 = arith.truncf %62 : vector<2x16x128xf32> to vector<2x16x128xbf16>
    %64 = vector.shape_cast %10 : vector<256x256xbf16> to vector<2x128x256xbf16>
    "tpu.trace_start"() <{level = 10 : i32, message = "hnd,hde->hne"}> : () -> ()
    %cst_44 = arith.constant dense<0.000000e+00> : vector<2x16x256xf32>
    %65 = tpu.matmul %63, %64, %cst_44 {dimension_numbers = #tpu.dot_dimension_numbers<[2], [1], [1], [2], [0, 0, 0, 1, 1, 2], [0], [0]>} : vector<2x16x128xbf16>, vector<2x128x256xbf16>, vector<2x16x256xf32> -> vector<2x16x256xf32>
    "tpu.trace_stop"() : () -> ()
    %cst_45 = arith.constant dense<0.000000e+00> : vector<16x256xf32>
    %66 = vector.multi_reduction <add>, %65, %cst_45 [0] : vector<2x16x256xf32> to vector<16x256xf32>
    %67 = arith.addf %27, %66 : vector<16x256xf32>
    %cst_46 = arith.constant dense<0.000000e+00> : vector<16xf32>
    %68 = vector.multi_reduction <add>, %67, %cst_46 [1] : vector<16x256xf32> to vector<16xf32>
    %69 = vector.shape_cast %68 : vector<16xf32> to vector<16x1xf32>
    %cst_47 = arith.constant 2.560000e+02 : f32
    %70 = vector.broadcast %cst_47 : f32 to vector<16x1xf32>
    %71 = arith.divf %69, %70 : vector<16x1xf32>
    %72 = vector.broadcast %71 : vector<16x1xf32> to vector<16x256xf32>
    %73 = arith.subf %67, %72 : vector<16x256xf32>
    %74 = arith.mulf %73, %73 : vector<16x256xf32>
    %cst_48 = arith.constant dense<0.000000e+00> : vector<16xf32>
    %75 = vector.multi_reduction <add>, %74, %cst_48 [1] : vector<16x256xf32> to vector<16xf32>
    %76 = vector.shape_cast %75 : vector<16xf32> to vector<16x1xf32>
    %cst_49 = arith.constant 2.560000e+02 : f32
    %77 = vector.broadcast %cst_49 : f32 to vector<16x1xf32>
    %78 = arith.divf %76, %77 : vector<16x1xf32>
    %79 = vector.broadcast %71 : vector<16x1xf32> to vector<16x256xf32>
    %80 = arith.subf %67, %79 : vector<16x256xf32>
    %cst_50 = arith.constant 9.99999997E-7 : f32
    %81 = vector.broadcast %cst_50 : f32 to vector<16x1xf32>
    %82 = arith.addf %78, %81 : vector<16x1xf32>
    %83 = math.rsqrt %82 : vector<16x1xf32>
    %84 = vector.broadcast %83 : vector<16x1xf32> to vector<16x256xf32>
    %85 = arith.mulf %80, %84 : vector<16x256xf32>
    %86 = vector.broadcast %12 : vector<1x256xf32> to vector<16x256xf32>
    %87 = arith.mulf %85, %86 : vector<16x256xf32>
    %88 = vector.broadcast %14 : vector<1x256xf32> to vector<16x256xf32>
    %89 = arith.addf %87, %88 : vector<16x256xf32>
    %90 = arith.truncf %89 : vector<16x256xf32> to vector<16x256xbf16>
    %cst_51 = arith.constant dense<0.000000e+00> : vector<16x1024xf32>
    %91 = tpu.matmul %90, %16, %cst_51 {dimension_numbers = #tpu.dot_dimension_numbers<[1], [0], [0], [1], [0, 0, 1, 1], [], []>} : vector<16x256xbf16>, vector<256x1024xbf16>, vector<16x1024xf32> -> vector<16x1024xf32>
    %92 = vector.broadcast %18 : vector<1x1024xf32> to vector<16x1024xf32>
    %93 = arith.addf %91, %92 : vector<16x1024xf32>
    %cst_52 = arith.constant 0.000000e+00 : f32
    %94 = vector.broadcast %cst_52 : f32 to vector<16x1024xf32>
    %95 = arith.maximumf %93, %94 : vector<16x1024xf32>
    %96 = arith.truncf %95 : vector<16x1024xf32> to vector<16x1024xbf16>
    %cst_53 = arith.constant dense<0.000000e+00> : vector<16x256xf32>
    %97 = tpu.matmul %96, %20, %cst_53 {dimension_numbers = #tpu.dot_dimension_numbers<[1], [0], [0], [1], [0, 0, 1, 1], [], []>} : vector<16x1024xbf16>, vector<1024x256xbf16>, vector<16x256xf32> -> vector<16x256xf32>
    %98 = vector.broadcast %22 : vector<1x256xf32> to vector<16x256xf32>
    %99 = arith.addf %97, %98 : vector<16x256xf32>
    %100 = arith.addf %89, %99 : vector<16x256xf32>
    %cst_54 = arith.constant dense<0.000000e+00> : vector<16xf32>
    %101 = vector.multi_reduction <add>, %100, %cst_54 [1] : vector<16x256xf32> to vector<16xf32>
    %102 = vector.shape_cast %101 : vector<16xf32> to vector<16x1xf32>
    %cst_55 = arith.constant 2.560000e+02 : f32
    %103 = vector.broadcast %cst_55 : f32 to vector<16x1xf32>
    %104 = arith.divf %102, %103 : vector<16x1xf32>
    %105 = vector.broadcast %104 : vector<16x1xf32> to vector<16x256xf32>
    %106 = arith.subf %100, %105 : vector<16x256xf32>
    %107 = arith.mulf %106, %106 : vector<16x256xf32>
    %cst_56 = arith.constant dense<0.000000e+00> : vector<16xf32>
    %108 = vector.multi_reduction <add>, %107, %cst_56 [1] : vector<16x256xf32> to vector<16xf32>
    %109 = vector.shape_cast %108 : vector<16xf32> to vector<16x1xf32>
    %cst_57 = arith.constant 2.560000e+02 : f32
    %110 = vector.broadcast %cst_57 : f32 to vector<16x1xf32>
    %111 = arith.divf %109, %110 : vector<16x1xf32>
    %112 = vector.broadcast %104 : vector<16x1xf32> to vector<16x256xf32>
    %113 = arith.subf %100, %112 : vector<16x256xf32>
    %cst_58 = arith.constant 9.99999997E-7 : f32
    %114 = vector.broadcast %cst_58 : f32 to vector<16x1xf32>
    %115 = arith.addf %111, %114 : vector<16x1xf32>
    %116 = math.rsqrt %115 : vector<16x1xf32>
    %117 = vector.broadcast %116 : vector<16x1xf32> to vector<16x256xf32>
    %118 = arith.mulf %113, %117 : vector<16x256xf32>
    %119 = vector.broadcast %24 : vector<1x256xf32> to vector<16x256xf32>
    %120 = arith.mulf %118, %119 : vector<16x256xf32>
    %121 = vector.broadcast %26 : vector<1x256xf32> to vector<16x256xf32>
    %122 = arith.addf %120, %121 : vector<16x256xf32>
    %c0_59 = arith.constant 0 : index
    %c0_60 = arith.constant 0 : index
    %123 = vector.load %arg15[%c0_59, %c0_60] : memref<16x256xf32, #tpu.memory_space<vmem>>, vector<16x256xf32>
    tpu.vector_store %arg15[%c0_59, %c0_60], %122 {strides = array<i32>} : memref<16x256xf32, #tpu.memory_space<vmem>>, vector<16x256xf32>,
    %c2_i32 = arith.constant 2 : i32
    %124 = arith.cmpi eq, %arg0, %c2_i32 : i32
    %125 = arith.extui %124 : i1 to i32
    %c0_i32_61 = arith.constant 0 : i32
    %126 = arith.cmpi ne, %125, %c0_i32_61 : i32
    scf.if %126 {
      %c0_62 = arith.constant 0 : index
      %c0_63 = arith.constant 0 : index
      %127 = vector.load %arg14[%c0_62, %c0_63] : memref<16x256xf32, #tpu.memory_space<vmem>>, vector<16x256xf32>
      tpu.vector_store %arg14[%c0_62, %c0_63], %122 {strides = array<i32>} : memref<16x256xf32, #tpu.memory_space<vmem>>, vector<16x256xf32>,
    } else {
    }
    return
  }
  func.func @transform_0(%arg0: i32) -> (i32, i32) {
    %c0_i32 = arith.constant 0 : i32
    %c0_i32_0 = arith.constant 0 : i32
    %c0_i32_1 = arith.constant 0 : i32
    return %c0_i32, %c0_i32_0 : i32, i32
  }
  func.func @transform_1(%arg0: i32) -> (i32, i32, i32) {
    %c0_i32 = arith.constant 0 : i32
    %c0_i32_0 = arith.constant 0 : i32
    %c0_i32_1 = arith.constant 0 : i32
    return %arg0, %c0_i32, %c0_i32_0 : i32, i32, i32
  }
  func.func @transform_2(%arg0: i32) -> (i32, i32, i32) {
    %c0_i32 = arith.constant 0 : i32
    %c0_i32_0 = arith.constant 0 : i32
    %c0_i32_1 = arith.constant 0 : i32
    return %arg0, %c0_i32, %c0_i32_0 : i32, i32, i32
  }
  func.func @transform_3(%arg0: i32) -> (i32, i32, i32) {
    %c0_i32 = arith.constant 0 : i32
    %c0_i32_0 = arith.constant 0 : i32
    %c0_i32_1 = arith.constant 0 : i32
    return %arg0, %c0_i32, %c0_i32_0 : i32, i32, i32
  }
  func.func @transform_4(%arg0: i32) -> (i32, i32, i32) {
    %c0_i32 = arith.constant 0 : i32
    %c0_i32_0 = arith.constant 0 : i32
    %c0_i32_1 = arith.constant 0 : i32
    return %arg0, %c0_i32, %c0_i32_0 : i32, i32, i32
  }
  func.func @transform_5(%arg0: i32) -> (i32, i32, i32) {
    %c0_i32 = arith.constant 0 : i32
    %c0_i32_0 = arith.constant 0 : i32
    %c0_i32_1 = arith.constant 0 : i32
    return %arg0, %c0_i32, %c0_i32_0 : i32, i32, i32
  }
  func.func @transform_6(%arg0: i32) -> (i32, i32, i32) {
    %c0_i32 = arith.constant 0 : i32
    %c0_i32_0 = arith.constant 0 : i32
    %c0_i32_1 = arith.constant 0 : i32
    return %arg0, %c0_i32, %c0_i32_0 : i32, i32, i32
  }
  func.func @transform_7(%arg0: i32) -> (i32, i32, i32) {
    %c0_i32 = arith.constant 0 : i32
    %c0_i32_0 = arith.constant 0 : i32
    %c0_i32_1 = arith.constant 0 : i32
    return %arg0, %c0_i32, %c0_i32_0 : i32, i32, i32
  }
  func.func @transform_8(%arg0: i32) -> (i32, i32, i32) {
    %c0_i32 = arith.constant 0 : i32
    %c0_i32_0 = arith.constant 0 : i32
    %c0_i32_1 = arith.constant 0 : i32
    return %arg0, %c0_i32, %c0_i32_0 : i32, i32, i32
  }
  func.func @transform_9(%arg0: i32) -> (i32, i32, i32) {
    %c0_i32 = arith.constant 0 : i32
    %c0_i32_0 = arith.constant 0 : i32
    %c0_i32_1 = arith.constant 0 : i32
    return %arg0, %c0_i32, %c0_i32_0 : i32, i32, i32
  }
  func.func @transform_10(%arg0: i32) -> (i32, i32, i32) {
    %c0_i32 = arith.constant 0 : i32
    %c0_i32_0 = arith.constant 0 : i32
    %c0_i32_1 = arith.constant 0 : i32
    return %arg0, %c0_i32, %c0_i32_0 : i32, i32, i32
  }
  func.func @transform_11(%arg0: i32) -> (i32, i32, i32) {
    %c0_i32 = arith.constant 0 : i32
    %c0_i32_0 = arith.constant 0 : i32
    %c0_i32_1 = arith.constant 0 : i32
    return %arg0, %c0_i32, %c0_i32_0 : i32, i32, i32
  }
  func.func @transform_12(%arg0: i32) -> (i32, i32, i32) {
    %c0_i32 = arith.constant 0 : i32
    %c0_i32_0 = arith.constant 0 : i32
    %c0_i32_1 = arith.constant 0 : i32
    return %arg0, %c0_i32, %c0_i32_0 : i32, i32, i32
  }
  func.func @transform_13(%arg0: i32) -> (i32, i32) {
    %c0_i32 = arith.constant 0 : i32
    %c0_i32_0 = arith.constant 0 : i32
    %c0_i32_1 = arith.constant 0 : i32
    return %c0_i32, %c0_i32_0 : i32, i32
  }
}

</mosaic_0001>

<llo_original>
// kernel: tpu_custom_call.1
$region0: #{tpu_custom_call.1}
  #allocation0 [shape = 'u32[]', space=smem, size = 0x4, offset = 0x4, fixed_abs, tag = 'smem constant byte address 0x4 - core index']
  #allocation1 [shape = 'u32[144,128]{1,0:T(1,128)}', space=vmem, size = 0x12000, scoped, tag = 'internal scratch']
  #allocation2 [shape = 'f32[16,256]{1,0:T(8,128)}', space=vmem, size = 0x4000, scoped, tag = 'scratch operand']
  %s0 = inlined_call_operand.hbm [shape: f32[16,256], index: 0, kind: input, shape index: {}]
  %s1 = inlined_call_operand.hbm [shape: bf16[3,256,256], index: 1, kind: input, shape index: {}]
  %s2 = inlined_call_operand.hbm [shape: bf16[3,256,256], index: 2, kind: input, shape index: {}]
  %s3 = inlined_call_operand.hbm [shape: bf16[3,256,256], index: 3, kind: input, shape index: {}]
  %s4 = inlined_call_operand.hbm [shape: bf16[3,256,256], index: 4, kind: input, shape index: {}]
  %s5 = inlined_call_operand.hbm [shape: f32[3,1,256], index: 5, kind: input, shape index: {}]
  %s6 = inlined_call_operand.hbm [shape: f32[3,1,256], index: 6, kind: input, shape index: {}]
  %s7 = inlined_call_operand.hbm [shape: bf16[3,256,1024], index: 7, kind: input, shape index: {}]
  %s8 = inlined_call_operand.hbm [shape: f32[3,1,1024], index: 8, kind: input, shape index: {}]
  %s9 = inlined_call_operand.hbm [shape: bf16[3,1024,256], index: 9, kind: input, shape index: {}]
  %s10 = inlined_call_operand.hbm [shape: f32[3,1,256], index: 10, kind: input, shape index: {}]
  %s11 = inlined_call_operand.hbm [shape: f32[3,1,256], index: 11, kind: input, shape index: {}]
  %s12 = inlined_call_operand.hbm [shape: f32[3,1,256], index: 12, kind: input, shape index: {}]
  %s13 = inlined_call_operand.hbm [shape: f32[16,256], index: 13, kind: output, shape index: {}]
  %s14 = sld [smem:[#allocation0]]
  $region145: #{tpu_custom_call.1} parent=0
    _
  %s16 = ssub.s32 1, %s14
  %s17 = scalar_select 0, %s16, %s14
  $region1: #{tpu_custom_call.1} parent=0
    #allocation3 [shape = 'u8[16384]{0}', space=vmem, size = 0x4000, scoped, tag = 'input window, operand 0, single buffered']
    #allocation4 [shape = 's32[2]{0}', space=sflag, size = 0x8, scoped, tag = 'scoped memory for tpu_custom_call.1']
    #allocation5 [shape = 's32[2]{0}', space=sflag, size = 0x8, scoped, tag = 'scoped memory for tpu_custom_call.1']
    #allocation6 [shape = 'u8[262144]{0}', space=vmem, size = 0x40000, scoped, tag = 'input window, operand 1']
    #allocation7 [shape = 's32[2]{0}', space=sflag, size = 0x8, scoped, tag = 'scoped memory for tpu_custom_call.1']
    #allocation8 [shape = 'u8[262144]{0}', space=vmem, size = 0x40000, scoped, tag = 'input window, operand 2']
    #allocation9 [shape = 'u8[262144]{0}', space=vmem, size = 0x40000, scoped, tag = 'input window, operand 3']
    #allocation10 [shape = 's32[2]{0}', space=sflag, size = 0x8, scoped, tag = 'scoped memory for tpu_custom_call.1']
    #allocation11 [shape = 'u8[262144]{0}', space=vmem, size = 0x40000, scoped, tag = 'input window, operand 4']
    #allocation12 [shape = 'u8[2048]{0}', space=vmem, size = 0x800, scoped, tag = 'input window, operand 5']
    #allocation13 [shape = 's32[2]{0}', space=sflag, size = 0x8, scoped, tag = 'scoped memory for tpu_custom_call.1']
    #allocation14 [shape = 'u8[2048]{0}', space=vmem, size = 0x800, scoped, tag = 'input window, operand 6']
    #allocation15 [shape = 'u8[1048576]{0}', space=vmem, size = 0x100000, scoped, tag = 'input window, operand 7']
    #allocation16 [shape = 's32[2]{0}', space=sflag, size = 0x8, scoped, tag = 'scoped memory for tpu_custom_call.1']
    #allocation17 [shape = 'u8[8192]{0}', space=vmem, size = 0x2000, scoped, tag = 'input window, operand 8']
    #allocation18 [shape = 'u8[1048576]{0}', space=vmem, size = 0x100000, scoped, tag = 'input window, operand 9']
    #allocation19 [shape = 's32[2]{0}', space=sflag, size = 0x8, scoped, tag = 'scoped memory for tpu_custom_call.1']
    #allocation20 [shape = 'u8[2048]{0}', space=vmem, size = 0x800, scoped, tag = 'input window, operand 10']
    #allocation21 [shape = 'u8[2048]{0}', space=vmem, size = 0x800, scoped, tag = 'input window, operand 11']
    #allocation22 [shape = 's32[2]{0}', space=sflag, size = 0x8, scoped, tag = 'scoped memory for tpu_custom_call.1']
    #allocation23 [shape = 'u8[2048]{0}', space=vmem, size = 0x800, scoped, tag = 'input window, operand 12']
    #allocation24 [shape = 'u8[16384]{0}', space=vmem, size = 0x4000, scoped, tag = 'output window, operand 0, single buffered']
    %18 = vsyncpa [#allocation4], 0
    %19 = vsyncpa [#allocation7], 0
    %s20 = scalar_lea.sflag [#allocation7], 1
    %21 = vsyncpa %s20, 0
    %22 = vsyncpa [#allocation10], 0
    %s23 = scalar_lea.sflag [#allocation10], 1
    %24 = vsyncpa %s23, 0
    %25 = vsyncpa [#allocation13], 0
    %s26 = scalar_lea.sflag [#allocation13], 1
    %27 = vsyncpa %s26, 0
    %28 = vsyncpa [#allocation16], 0
    %s29 = scalar_lea.sflag [#allocation16], 1
    %30 = vsyncpa %s29, 0
    %31 = vsyncpa [#allocation19], 0
    %s32 = scalar_lea.sflag [#allocation19], 1
    %33 = vsyncpa %s32, 0
    %34 = vsyncpa [#allocation22], 0
    %s35 = scalar_lea.sflag [#allocation22], 1
    %36 = vsyncpa %s35, 0
    %37 = vsyncpa [#allocation5], 0
    loop: start=0, step=1, limit=5
    $region2: #{tpu_custom_call.1} parent=1 // loop_pre_header
      _
    $region3: #{tpu_custom_call.1} parent=1 // loop_header
      %s39 = sphi 0, %s43
      %p40 = scmp.ge.s32.totalorder %s39, 5
      %s47 = sphi 0, %s47
      %s49 = sphi 0, %s47
      %s50 = sphi 0, %s49
      %s64 = sphi 0, %s50
      %s70 = sphi 0, %s72
      %s73 = sphi 0, %s70
      %s74 = sphi 0, %s73
      %s90 = sphi 0, %s74
      %s96 = sphi 0, %s98
      %s99 = sphi 0, %s96
      %s100 = sphi 0, %s99
      %s116 = sphi 0, %s100
      %s122 = sphi 0, %s124
      %s125 = sphi 0, %s122
      %s126 = sphi 0, %s125
      %s142 = sphi 0, %s126
      %s148 = sphi 0, %s150
      %s151 = sphi 0, %s148
      %s152 = sphi 0, %s151
      %s168 = sphi 0, %s152
      %s174 = sphi 0, %s176
      %s177 = sphi 0, %s174
      %s178 = sphi 0, %s177
      %s194 = sphi 0, %s178
      %s200 = sphi 0, %s202
      %s203 = sphi 0, %s200
      %s204 = sphi 0, %s203
      %s220 = sphi 0, %s204
      %s226 = sphi 0, %s228
      %s229 = sphi 0, %s226
      %s230 = sphi 0, %s229
      %s246 = sphi 0, %s230
      %s252 = sphi 0, %s254
      %s255 = sphi 0, %s252
      %s256 = sphi 0, %s255
      %s272 = sphi 0, %s256
      %s278 = sphi 0, %s280
      %s281 = sphi 0, %s278
      %s282 = sphi 0, %s281
      %s298 = sphi 0, %s282
      %s304 = sphi 0, %s306
      %s307 = sphi 0, %s304
      %s308 = sphi 0, %s307
      %s324 = sphi 0, %s308
      %s330 = sphi 0, %s332
      %s333 = sphi 0, %s330
      %s334 = sphi 0, %s333
      %s350 = sphi 0, %s334
      %s356 = sphi 0, %s358
      %s359 = sphi 0, %s356
      %s360 = sphi 0, %s359
      %s376 = sphi 0, %s360
      %s380 = sphi 0, %s380
      %s382 = sphi 0, %s380
      %s383 = sphi 0, %s382
      %s397 = sphi 0, %s383
    $region4: #{tpu_custom_call.1} parent=1 // loop_header_branch
      %42 = sbr.rel (%p40) target = $region8
    $region5: #{tpu_custom_call.1} parent=1 // loop_body
      %s44 = ssub.s32 %s39, 1
      %s45 = ssub.s32 %s39, 2
      %s46 = sadd.s32 %s39, 1
      %s48 = sadd.s32 %s47, 1
      %p51 = scmp.eq.s32.totalorder %s39, 2
      %p52 = scmp.ne.s32.totalorder %s47, %s49
      %p53 = scmp.eq.s32.totalorder %s39, 0
      %p54 = por %p52, %p53
      %p55 = scmp.ne.s32.totalorder %s47, %s49
      %p56 = scmp.eq.s32.totalorder %s44, 2
      %p57 = por %p55, %p56
      %p58 = scmp.ne.s32.totalorder %s49, %s50
      %p59 = scmp.eq.s32.totalorder %s44, 0
      %p60 = por %p58, %p59
      %p61 = scmp.ne.s32.totalorder %s49, %s50
      %p62 = scmp.eq.s32.totalorder %s45, 2
      %p63 = por %p61, %p62
      %p65 = scmp.ne.s32.totalorder %s50, %s64
      %p66 = scmp.eq.s32.totalorder %s45, 0
      %p67 = por %p65, %p66
      %s68 = ssub.s32 %s39, %s46
      %p69 = scmp.eq.s32.totalorder %s68, 0
      %s71 = sadd.s32 %s70, 1
      %s72 = scalar_select %p69, %s70, %s71
      %p75 = pneg %p69
      %p76 = scmp.eq.s32.totalorder %s39, 2
      %p77 = por %p75, %p76
      %p78 = scmp.ne.s32.totalorder %s70, %s73
      %p79 = scmp.eq.s32.totalorder %s39, 0
      %p80 = por %p78, %p79
      %p81 = scmp.ne.s32.totalorder %s70, %s73
      %p82 = scmp.eq.s32.totalorder %s44, 2
      %p83 = por %p81, %p82
      %p84 = scmp.ne.s32.totalorder %s73, %s74
      %p85 = scmp.eq.s32.totalorder %s44, 0
      %p86 = por %p84, %p85
      %p87 = scmp.ne.s32.totalorder %s73, %s74
      %p88 = scmp.eq.s32.totalorder %s45, 2
      %p89 = por %p87, %p88
      %p91 = scmp.ne.s32.totalorder %s74, %s90
      %p92 = scmp.eq.s32.totalorder %s45, 0
      %p93 = por %p91, %p92
      %s94 = ssub.s32 %s39, %s46
      %p95 = scmp.eq.s32.totalorder %s94, 0
      %s97 = sadd.s32 %s96, 1
      %s98 = scalar_select %p95, %s96, %s97
      %p101 = pneg %p95
      %p102 = scmp.eq.s32.totalorder %s39, 2
      %p103 = por %p101, %p102
      %p104 = scmp.ne.s32.totalorder %s96, %s99
      %p105 = scmp.eq.s32.totalorder %s39, 0
      %p106 = por %p104, %p105
      %p107 = scmp.ne.s32.totalorder %s96, %s99
      %p108 = scmp.eq.s32.totalorder %s44, 2
      %p109 = por %p107, %p108
      %p110 = scmp.ne.s32.totalorder %s99, %s100
      %p111 = scmp.eq.s32.totalorder %s44, 0
      %p112 = por %p110, %p111
      %p113 = scmp.ne.s32.totalorder %s99, %s100
      %p114 = scmp.eq.s32.totalorder %s45, 2
      %p115 = por %p113, %p114
      %p117 = scmp.ne.s32.totalorder %s100, %s116
      %p118 = scmp.eq.s32.totalorder %s45, 0
      %p119 = por %p117, %p118
      %s120 = ssub.s32 %s39, %s46
      %p121 = scmp.eq.s32.totalorder %s120, 0
      %s123 = sadd.s32 %s122, 1
      %s124 = scalar_select %p121, %s122, %s123
      %p127 = pneg %p121
      %p128 = scmp.eq.s32.totalorder %s39, 2
      %p129 = por %p127, %p128
      %p130 = scmp.ne.s32.totalorder %s122, %s125
      %p131 = scmp.eq.s32.totalorder %s39, 0
      %p132 = por %p130, %p131
      %p133 = scmp.ne.s32.totalorder %s122, %s125
      %p134 = scmp.eq.s32.totalorder %s44, 2
      %p135 = por %p133, %p134
      %p136 = scmp.ne.s32.totalorder %s125, %s126
      %p137 = scmp.eq.s32.totalorder %s44, 0
      %p138 = por %p136, %p137
      %p139 = scmp.ne.s32.totalorder %s125, %s126
      %p140 = scmp.eq.s32.totalorder %s45, 2
      %p141 = por %p139, %p140
      %p143 = scmp.ne.s32.totalorder %s126, %s142
      %p144 = scmp.eq.s32.totalorder %s45, 0
      %p145 = por %p143, %p144
      %s146 = ssub.s32 %s39, %s46
      %p147 = scmp.eq.s32.totalorder %s146, 0
      %s149 = sadd.s32 %s148, 1
      %s150 = scalar_select %p147, %s148, %s149
      %p153 = pneg %p147
      %p154 = scmp.eq.s32.totalorder %s39, 2
      %p155 = por %p153, %p154
      %p156 = scmp.ne.s32.totalorder %s148, %s151
      %p157 = scmp.eq.s32.totalorder %s39, 0
      %p158 = por %p156, %p157
      %p159 = scmp.ne.s32.totalorder %s148, %s151
      %p160 = scmp.eq.s32.totalorder %s44, 2
      %p161 = por %p159, %p160
      %p162 = scmp.ne.s32.totalorder %s151, %s152
      %p163 = scmp.eq.s32.totalorder %s44, 0
      %p164 = por %p162, %p163
      %p165 = scmp.ne.s32.totalorder %s151, %s152
      %p166 = scmp.eq.s32.totalorder %s45, 2
      %p167 = por %p165, %p166
      %p169 = scmp.ne.s32.totalorder %s152, %s168
      %p170 = scmp.eq.s32.totalorder %s45, 0
      %p171 = por %p169, %p170
      %s172 = ssub.s32 %s39, %s46
      %p173 = scmp.eq.s32.totalorder %s172, 0
      %s175 = sadd.s32 %s174, 1
      %s176 = scalar_select %p173, %s174, %s175
      %p179 = pneg %p173
      %p180 = scmp.eq.s32.totalorder %s39, 2
      %p181 = por %p179, %p180
      %p182 = scmp.ne.s32.totalorder %s174, %s177
      %p183 = scmp.eq.s32.totalorder %s39, 0
      %p184 = por %p182, %p183
      %p185 = scmp.ne.s32.totalorder %s174, %s177
      %p186 = scmp.eq.s32.totalorder %s44, 2
      %p187 = por %p185, %p186
      %p188 = scmp.ne.s32.totalorder %s177, %s178
      %p189 = scmp.eq.s32.totalorder %s44, 0
      %p190 = por %p188, %p189
      %p191 = scmp.ne.s32.totalorder %s177, %s178
      %p192 = scmp.eq.s32.totalorder %s45, 2
      %p193 = por %p191, %p192
      %p195 = scmp.ne.s32.totalorder %s178, %s194
      %p196 = scmp.eq.s32.totalorder %s45, 0
      %p197 = por %p195, %p196
      %s198 = ssub.s32 %s39, %s46
      %p199 = scmp.eq.s32.totalorder %s198, 0
      %s201 = sadd.s32 %s200, 1
      %s202 = scalar_select %p199, %s200, %s201
      %p205 = pneg %p199
      %p206 = scmp.eq.s32.totalorder %s39, 2
      %p207 = por %p205, %p206
      %p208 = scmp.ne.s32.totalorder %s200, %s203
      %p209 = scmp.eq.s32.totalorder %s39, 0
      %p210 = por %p208, %p209
      %p211 = scmp.ne.s32.totalorder %s200, %s203
      %p212 = scmp.eq.s32.totalorder %s44, 2
      %p213 = por %p211, %p212
      %p214 = scmp.ne.s32.totalorder %s203, %s204
      %p215 = scmp.eq.s32.totalorder %s44, 0
      %p216 = por %p214, %p215
      %p217 = scmp.ne.s32.totalorder %s203, %s204
      %p218 = scmp.eq.s32.totalorder %s45, 2
      %p219 = por %p217, %p218
      %p221 = scmp.ne.s32.totalorder %s204, %s220
      %p222 = scmp.eq.s32.totalorder %s45, 0
      %p223 = por %p221, %p222
      %s224 = ssub.s32 %s39, %s46
      %p225 = scmp.eq.s32.totalorder %s224, 0
      %s227 = sadd.s32 %s226, 1
      %s228 = scalar_select %p225, %s226, %s227
      %p231 = pneg %p225
      %p232 = scmp.eq.s32.totalorder %s39, 2
      %p233 = por %p231, %p232
      %p234 = scmp.ne.s32.totalorder %s226, %s229
      %p235 = scmp.eq.s32.totalorder %s39, 0
      %p236 = por %p234, %p235
      %p237 = scmp.ne.s32.totalorder %s226, %s229
      %p238 = scmp.eq.s32.totalorder %s44, 2
      %p239 = por %p237, %p238
      %p240 = scmp.ne.s32.totalorder %s229, %s230
      %p241 = scmp.eq.s32.totalorder %s44, 0
      %p242 = por %p240, %p241
      %p243 = scmp.ne.s32.totalorder %s229, %s230
      %p244 = scmp.eq.s32.totalorder %s45, 2
      %p245 = por %p243, %p244
      %p247 = scmp.ne.s32.totalorder %s230, %s246
      %p248 = scmp.eq.s32.totalorder %s45, 0
      %p249 = por %p247, %p248
      %s250 = ssub.s32 %s39, %s46
      %p251 = scmp.eq.s32.totalorder %s250, 0
      %s253 = sadd.s32 %s252, 1
      %s254 = scalar_select %p251, %s252, %s253
      %p257 = pneg %p251
      %p258 = scmp.eq.s32.totalorder %s39, 2
      %p259 = por %p257, %p258
      %p260 = scmp.ne.s32.totalorder %s252, %s255
      %p261 = scmp.eq.s32.totalorder %s39, 0
      %p262 = por %p260, %p261
      %p263 = scmp.ne.s32.totalorder %s252, %s255
      %p264 = scmp.eq.s32.totalorder %s44, 2
      %p265 = por %p263, %p264
      %p266 = scmp.ne.s32.totalorder %s255, %s256
      %p267 = scmp.eq.s32.totalorder %s44, 0
      %p268 = por %p266, %p267
      %p269 = scmp.ne.s32.totalorder %s255, %s256
      %p270 = scmp.eq.s32.totalorder %s45, 2
      %p271 = por %p269, %p270
      %p273 = scmp.ne.s32.totalorder %s256, %s272
      %p274 = scmp.eq.s32.totalorder %s45, 0
      %p275 = por %p273, %p274
      %s276 = ssub.s32 %s39, %s46
      %p277 = scmp.eq.s32.totalorder %s276, 0
      %s279 = sadd.s32 %s278, 1
      %s280 = scalar_select %p277, %s278, %s279
      %p283 = pneg %p277
      %p284 = scmp.eq.s32.totalorder %s39, 2
      %p285 = por %p283, %p284
      %p286 = scmp.ne.s32.totalorder %s278, %s281
      %p287 = scmp.eq.s32.totalorder %s39, 0
      %p288 = por %p286, %p287
      %p289 = scmp.ne.s32.totalorder %s278, %s281
      %p290 = scmp.eq.s32.totalorder %s44, 2
      %p291 = por %p289, %p290
      %p292 = scmp.ne.s32.totalorder %s281, %s282
      %p293 = scmp.eq.s32.totalorder %s44, 0
      %p294 = por %p292, %p293
      %p295 = scmp.ne.s32.totalorder %s281, %s282
      %p296 = scmp.eq.s32.totalorder %s45, 2
      %p297 = por %p295, %p296
      %p299 = scmp.ne.s32.totalorder %s282, %s298
      %p300 = scmp.eq.s32.totalorder %s45, 0
      %p301 = por %p299, %p300
      %s302 = ssub.s32 %s39, %s46
      %p303 = scmp.eq.s32.totalorder %s302, 0
      %s305 = sadd.s32 %s304, 1
      %s306 = scalar_select %p303, %s304, %s305
      %p309 = pneg %p303
      %p310 = scmp.eq.s32.totalorder %s39, 2
      %p311 = por %p309, %p310
      %p312 = scmp.ne.s32.totalorder %s304, %s307
      %p313 = scmp.eq.s32.totalorder %s39, 0
      %p314 = por %p312, %p313
      %p315 = scmp.ne.s32.totalorder %s304, %s307
      %p316 = scmp.eq.s32.totalorder %s44, 2
      %p317 = por %p315, %p316
      %p318 = scmp.ne.s32.totalorder %s307, %s308
      %p319 = scmp.eq.s32.totalorder %s44, 0
      %p320 = por %p318, %p319
      %p321 = scmp.ne.s32.totalorder %s307, %s308
      %p322 = scmp.eq.s32.totalorder %s45, 2
      %p323 = por %p321, %p322
      %p325 = scmp.ne.s32.totalorder %s308, %s324
      %p326 = scmp.eq.s32.totalorder %s45, 0
      %p327 = por %p325, %p326
      %s328 = ssub.s32 %s39, %s46
      %p329 = scmp.eq.s32.totalorder %s328, 0
      %s331 = sadd.s32 %s330, 1
      %s332 = scalar_select %p329, %s330, %s331
      %p335 = pneg %p329
      %p336 = scmp.eq.s32.totalorder %s39, 2
      %p337 = por %p335, %p336
      %p338 = scmp.ne.s32.totalorder %s330, %s333
      %p339 = scmp.eq.s32.totalorder %s39, 0
      %p340 = por %p338, %p339
      %p341 = scmp.ne.s32.totalorder %s330, %s333
      %p342 = scmp.eq.s32.totalorder %s44, 2
      %p343 = por %p341, %p342
      %p344 = scmp.ne.s32.totalorder %s333, %s334
      %p345 = scmp.eq.s32.totalorder %s44, 0
      %p346 = por %p344, %p345
      %p347 = scmp.ne.s32.totalorder %s333, %s334
      %p348 = scmp.eq.s32.totalorder %s45, 2
      %p349 = por %p347, %p348
      %p351 = scmp.ne.s32.totalorder %s334, %s350
      %p352 = scmp.eq.s32.totalorder %s45, 0
      %p353 = por %p351, %p352
      %s354 = ssub.s32 %s39, %s46
      %p355 = scmp.eq.s32.totalorder %s354, 0
      %s357 = sadd.s32 %s356, 1
      %s358 = scalar_select %p355, %s356, %s357
      %p361 = pneg %p355
      %p362 = scmp.eq.s32.totalorder %s39, 2
      %p363 = por %p361, %p362
      %p364 = scmp.ne.s32.totalorder %s356, %s359
      %p365 = scmp.eq.s32.totalorder %s39, 0
      %p366 = por %p364, %p365
      %p367 = scmp.ne.s32.totalorder %s356, %s359
      %p368 = scmp.eq.s32.totalorder %s44, 2
      %p369 = por %p367, %p368
      %p370 = scmp.ne.s32.totalorder %s359, %s360
      %p371 = scmp.eq.s32.totalorder %s44, 0
      %p372 = por %p370, %p371
      %p373 = scmp.ne.s32.totalorder %s359, %s360
      %p374 = scmp.eq.s32.totalorder %s45, 2
      %p375 = por %p373, %p374
      %p377 = scmp.ne.s32.totalorder %s360, %s376
      %p378 = scmp.eq.s32.totalorder %s45, 0
      %p379 = por %p377, %p378
      %s381 = sadd.s32 %s380, 1
      %p384 = scmp.eq.s32.totalorder %s39, 2
      %p385 = scmp.ne.s32.totalorder %s380, %s382
      %p386 = scmp.eq.s32.totalorder %s39, 0
      %p387 = por %p385, %p386
      %p388 = scmp.ne.s32.totalorder %s380, %s382
      %p389 = scmp.eq.s32.totalorder %s44, 2
      %p390 = por %p388, %p389
      %p391 = scmp.ne.s32.totalorder %s382, %s383
      %p392 = scmp.eq.s32.totalorder %s44, 0
      %p393 = por %p391, %p392
      %p394 = scmp.ne.s32.totalorder %s382, %s383
      %p395 = scmp.eq.s32.totalorder %s45, 2
      %p396 = por %p394, %p395
      %p398 = scmp.ne.s32.totalorder %s383, %s397
      %p399 = scmp.eq.s32.totalorder %s45, 0
      %p400 = por %p398, %p399
      %p401 = scmp.le.s32.totalorder 1, %s39
      %p402 = scmp.lt.s32.totalorder %s39, 4
      %p403 = pnand %p401, %p402
      %p404 = pneg %p403
      // Predicated region
      $region9: #{tpu_custom_call.1} parent=5 // pred_check
        _
      $region10: #{tpu_custom_call.1} parent=5 // pred_check_branch
        %406 = sbr.rel (%p403) target = $region12
      $region11: #{tpu_custom_call.1} parent=5 // pred_region
        %s407 = ssub.s32 %s39, 1
        // Predicated region
        $region13: #{tpu_custom_call.1} parent=11 // pred_check
          %p408 = pneg %p60
        $region14: #{tpu_custom_call.1} parent=11 // pred_check_branch
          %410 = sbr.rel (%p408) target = $region16
        $region15: #{tpu_custom_call.1} parent=11 // pred_region
          %s412 = ssub.s32 512, 512
          %413 = vsyncadd [#allocation4], %s412
          %s414 = sshll.u32 [#allocation3], 4
          %s415 = int_to_ptr.vmem [resolvable:$true] %s414
          %420 = dma.hbm_to_vmem [thread:$0]  %s0, 512, %s415, [#allocation4], 256, 256, 16
        $region16: #{tpu_custom_call.1} parent=11 // pred_fallthru
          _
      $region12: #{tpu_custom_call.1} parent=5 // pred_fallthru
        _
      %p421 = scmp.lt.s32.totalorder %s39, 3
      // Predicated region
      $region17: #{tpu_custom_call.1} parent=5 // pred_check
        %p422 = pneg %p421
      $region18: #{tpu_custom_call.1} parent=5 // pred_check_branch
        %424 = sbr.rel (%p422) target = $region20
      $region19: #{tpu_custom_call.1} parent=5 // pred_region
        // Predicated region
        $region21: #{tpu_custom_call.1} parent=19 // pred_check
          %p425 = pneg %p80
        $region22: #{tpu_custom_call.1} parent=19 // pred_check_branch
          %427 = sbr.rel (%p425) target = $region24
        $region23: #{tpu_custom_call.1} parent=19 // pred_region
          %s428 = sand.u32 %s39, 1
          %s429 = scalar_lea.sflag [#allocation7], %s428
          %s430 = sand.u32 %s70, 1
          %s431 = smul.addr %s430, 256
          %s432 = scalar_lea.vmem [#allocation6], %s431
          %s434 = ssub.s32 4096, 4096
          %435 = vsyncadd %s429, %s434
          %s436 = smul.addr %s39, 64
          %s437 = smul.addr %s436, 64
          %s438 = scalar_lea.hbm %s1, %s437
          %s439 = sshll.u32 %s432, 4
          %s440 = int_to_ptr.vmem [resolvable:$true] %s439
          %445 = dma.hbm_to_vmem [thread:$0]  %s438, 4096, %s440, %s429, 128, 128, 8
        $region24: #{tpu_custom_call.1} parent=19 // pred_fallthru
          _
        // Predicated region
        $region25: #{tpu_custom_call.1} parent=19 // pred_check
          %p446 = pneg %p106
        $region26: #{tpu_custom_call.1} parent=19 // pred_check_branch
          %448 = sbr.rel (%p446) target = $region28
        $region27: #{tpu_custom_call.1} parent=19 // pred_region
          %s449 = sand.u32 %s39, 1
          %s450 = scalar_lea.sflag [#allocation7], %s449
          %s451 = sand.u32 %s96, 1
          %s452 = smul.addr %s451, 256
          %s453 = scalar_lea.vmem [#allocation8], %s452
          %s455 = ssub.s32 4096, 4096
          %456 = vsyncadd %s450, %s455
          %s457 = smul.addr %s39, 64
          %s458 = smul.addr %s457, 64
          %s459 = scalar_lea.hbm %s2, %s458
          %s460 = sshll.u32 %s453, 4
          %s461 = int_to_ptr.vmem [resolvable:$true] %s460
          %466 = dma.hbm_to_vmem [thread:$0]  %s459, 4096, %s461, %s450, 128, 128, 8
        $region28: #{tpu_custom_call.1} parent=19 // pred_fallthru
          _
        // Predicated region
        $region29: #{tpu_custom_call.1} parent=19 // pred_check
          %p467 = pneg %p132
        $region30: #{tpu_custom_call.1} parent=19 // pred_check_branch
          %469 = sbr.rel (%p467) target = $region32
        $region31: #{tpu_custom_call.1} parent=19 // pred_region
          %s470 = sand.u32 %s39, 1
          %s471 = scalar_lea.sflag [#allocation10], %s470
          %s472 = sand.u32 %s122, 1
          %s473 = smul.addr %s472, 256
          %s474 = scalar_lea.vmem [#allocation9], %s473
          %s476 = ssub.s32 4096, 4096
          %477 = vsyncadd %s471, %s476
          %s478 = smul.addr %s39, 64
          %s479 = smul.addr %s478, 64
          %s480 = scalar_lea.hbm %s3, %s479
          %s481 = sshll.u32 %s474, 4
          %s482 = int_to_ptr.vmem [resolvable:$true] %s481
          %487 = dma.hbm_to_vmem [thread:$0]  %s480, 4096, %s482, %s471, 128, 128, 8
        $region32: #{tpu_custom_call.1} parent=19 // pred_fallthru
          _
        // Predicated region
        $region33: #{tpu_custom_call.1} parent=19 // pred_check
          %p488 = pneg %p158
        $region34: #{tpu_custom_call.1} parent=19 // pred_check_branch
          %490 = sbr.rel (%p488) target = $region36
        $region35: #{tpu_custom_call.1} parent=19 // pred_region
          %s491 = sand.u32 %s39, 1
          %s492 = scalar_lea.sflag [#allocation10], %s491
          %s493 = sand.u32 %s148, 1
          %s494 = smul.addr %s493, 256
          %s495 = scalar_lea.vmem [#allocation11], %s494
          %s497 = ssub.s32 4096, 4096
          %498 = vsyncadd %s492, %s497
          %s499 = smul.addr %s39, 64
          %s500 = smul.addr %s499, 64
          %s501 = scalar_lea.hbm %s4, %s500
          %s502 = sshll.u32 %s495, 4
          %s503 = int_to_ptr.vmem [resolvable:$true] %s502
          %508 = dma.hbm_to_vmem [thread:$0]  %s501, 4096, %s503, %s492, 128, 128, 8
        $region36: #{tpu_custom_call.1} parent=19 // pred_fallthru
          _
        // Predicated region
        $region37: #{tpu_custom_call.1} parent=19 // pred_check
          %p509 = pneg %p184
        $region38: #{tpu_custom_call.1} parent=19 // pred_check_branch
          %511 = sbr.rel (%p509) target = $region40
        $region39: #{tpu_custom_call.1} parent=19 // pred_region
          %s512 = sand.u32 %s39, 1
          %s513 = scalar_lea.sflag [#allocation13], %s512
          %s514 = sand.u32 %s174, 1
          %s515 = smul.addr %s514, 2
          %s516 = scalar_lea.vmem [#allocation12], %s515
          %s518 = ssub.s32 32, 32
          %519 = vsyncadd %s513, %s518
          %s520 = smul.addr %s39, 2
          %s521 = smul.addr %s520, 16
          %s522 = scalar_lea.hbm %s5, %s521
          %s524 = sshll.u32 %s516, 4
          %s525 = int_to_ptr.vmem [resolvable:$true] %s524
          %527 = dma.hbm_to_vmem [thread:$0]  %s522, 32, %s525, %s513
        $region40: #{tpu_custom_call.1} parent=19 // pred_fallthru
          _
        // Predicated region
        $region41: #{tpu_custom_call.1} parent=19 // pred_check
          %p528 = pneg %p210
        $region42: #{tpu_custom_call.1} parent=19 // pred_check_branch
          %530 = sbr.rel (%p528) target = $region44
        $region43: #{tpu_custom_call.1} parent=19 // pred_region
          %s531 = sand.u32 %s39, 1
          %s532 = scalar_lea.sflag [#allocation13], %s531
          %s533 = sand.u32 %s200, 1
          %s534 = smul.addr %s533, 2
          %s535 = scalar_lea.vmem [#allocation14], %s534
          %s537 = ssub.s32 32, 32
          %538 = vsyncadd %s532, %s537
          %s539 = smul.addr %s39, 2
          %s540 = smul.addr %s539, 16
          %s541 = scalar_lea.hbm %s6, %s540
          %s543 = sshll.u32 %s535, 4
          %s544 = int_to_ptr.vmem [resolvable:$true] %s543
          %546 = dma.hbm_to_vmem [thread:$0]  %s541, 32, %s544, %s532
        $region44: #{tpu_custom_call.1} parent=19 // pred_fallthru
          _
        // Predicated region
        $region45: #{tpu_custom_call.1} parent=19 // pred_check
          %p547 = pneg %p236
        $region46: #{tpu_custom_call.1} parent=19 // pred_check_branch
          %549 = sbr.rel (%p547) target = $region48
        $region47: #{tpu_custom_call.1} parent=19 // pred_region
          %s550 = sand.u32 %s39, 1
          %s551 = scalar_lea.sflag [#allocation16], %s550
          %s552 = sand.u32 %s226, 1
          %s553 = smul.addr %s552, 1024
          %s554 = scalar_lea.vmem [#allocation15], %s553
          %s556 = ssub.s32 16384, 16384
          %557 = vsyncadd %s551, %s556
          %s558 = smul.addr %s39, 256
          %s559 = smul.addr %s558, 64
          %s560 = scalar_lea.hbm %s7, %s559
          %s561 = sshll.u32 %s554, 4
          %s562 = int_to_ptr.vmem [resolvable:$true] %s561
          %567 = dma.hbm_to_vmem [thread:$0]  %s560, 16384, %s562, %s551, 512, 512, 32
        $region48: #{tpu_custom_call.1} parent=19 // pred_fallthru
          _
        // Predicated region
        $region49: #{tpu_custom_call.1} parent=19 // pred_check
          %p568 = pneg %p262
        $region50: #{tpu_custom_call.1} parent=19 // pred_check_branch
          %570 = sbr.rel (%p568) target = $region52
        $region51: #{tpu_custom_call.1} parent=19 // pred_region
          %s571 = sand.u32 %s39, 1
          %s572 = scalar_lea.sflag [#allocation16], %s571
          %s573 = sand.u32 %s252, 1
          %s574 = smul.addr %s573, 8
          %s575 = scalar_lea.vmem [#allocation17], %s574
          %s577 = ssub.s32 128, 128
          %578 = vsyncadd %s572, %s577
          %s579 = smul.addr %s39, 8
          %s580 = smul.addr %s579, 16
          %s581 = scalar_lea.hbm %s8, %s580
          %s583 = sshll.u32 %s575, 4
          %s584 = int_to_ptr.vmem [resolvable:$true] %s583
          %586 = dma.hbm_to_vmem [thread:$0]  %s581, 128, %s584, %s572
        $region52: #{tpu_custom_call.1} parent=19 // pred_fallthru
          _
        // Predicated region
        $region53: #{tpu_custom_call.1} parent=19 // pred_check
          %p587 = pneg %p288
        $region54: #{tpu_custom_call.1} parent=19 // pred_check_branch
          %589 = sbr.rel (%p587) target = $region56
        $region55: #{tpu_custom_call.1} parent=19 // pred_region
          %s590 = sand.u32 %s39, 1
          %s591 = scalar_lea.sflag [#allocation19], %s590
          %s592 = sand.u32 %s278, 1
          %s593 = smul.addr %s592, 1024
          %s594 = scalar_lea.vmem [#allocation18], %s593
          %s596 = ssub.s32 16384, 16384
          %597 = vsyncadd %s591, %s596
          %s598 = smul.addr %s39, 256
          %s599 = smul.addr %s598, 64
          %s600 = scalar_lea.hbm %s9, %s599
          %s601 = sshll.u32 %s594, 4
          %s602 = int_to_ptr.vmem [resolvable:$true] %s601
          %607 = dma.hbm_to_vmem [thread:$0]  %s600, 16384, %s602, %s591, 128, 128, 8
        $region56: #{tpu_custom_call.1} parent=19 // pred_fallthru
          _
        // Predicated region
        $region57: #{tpu_custom_call.1} parent=19 // pred_check
          %p608 = pneg %p314
        $region58: #{tpu_custom_call.1} parent=19 // pred_check_branch
          %610 = sbr.rel (%p608) target = $region60
        $region59: #{tpu_custom_call.1} parent=19 // pred_region
          %s611 = sand.u32 %s39, 1
          %s612 = scalar_lea.sflag [#allocation19], %s611
          %s613 = sand.u32 %s304, 1
          %s614 = smul.addr %s613, 2
          %s615 = scalar_lea.vmem [#allocation20], %s614
          %s617 = ssub.s32 32, 32
          %618 = vsyncadd %s612, %s617
          %s619 = smul.addr %s39, 2
          %s620 = smul.addr %s619, 16
          %s621 = scalar_lea.hbm %s10, %s620
          %s623 = sshll.u32 %s615, 4
          %s624 = int_to_ptr.vmem [resolvable:$true] %s623
          %626 = dma.hbm_to_vmem [thread:$0]  %s621, 32, %s624, %s612
        $region60: #{tpu_custom_call.1} parent=19 // pred_fallthru
          _
        // Predicated region
        $region61: #{tpu_custom_call.1} parent=19 // pred_check
          %p627 = pneg %p340
        $region62: #{tpu_custom_call.1} parent=19 // pred_check_branch
          %629 = sbr.rel (%p627) target = $region64
        $region63: #{tpu_custom_call.1} parent=19 // pred_region
          %s630 = sand.u32 %s39, 1
          %s631 = scalar_lea.sflag [#allocation22], %s630
          %s632 = sand.u32 %s330, 1
          %s633 = smul.addr %s632, 2
          %s634 = scalar_lea.vmem [#allocation21], %s633
          %s636 = ssub.s32 32, 32
          %637 = vsyncadd %s631, %s636
          %s638 = smul.addr %s39, 2
          %s639 = smul.addr %s638, 16
          %s640 = scalar_lea.hbm %s11, %s639
          %s642 = sshll.u32 %s634, 4
          %s643 = int_to_ptr.vmem [resolvable:$true] %s642
          %645 = dma.hbm_to_vmem [thread:$0]  %s640, 32, %s643, %s631
        $region64: #{tpu_custom_call.1} parent=19 // pred_fallthru
          _
        // Predicated region
        $region65: #{tpu_custom_call.1} parent=19 // pred_check
          %p646 = pneg %p366
        $region66: #{tpu_custom_call.1} parent=19 // pred_check_branch
          %648 = sbr.rel (%p646) target = $region68
        $region67: #{tpu_custom_call.1} parent=19 // pred_region
          %s649 = sand.u32 %s39, 1
          %s650 = scalar_lea.sflag [#allocation22], %s649
          %s651 = sand.u32 %s356, 1
          %s652 = smul.addr %s651, 2
          %s653 = scalar_lea.vmem [#allocation23], %s652
          %s655 = ssub.s32 32, 32
          %656 = vsyncadd %s650, %s655
          %s657 = smul.addr %s39, 2
          %s658 = smul.addr %s657, 16
          %s659 = scalar_lea.hbm %s12, %s658
          %s661 = sshll.u32 %s653, 4
          %s662 = int_to_ptr.vmem [resolvable:$true] %s661
          %664 = dma.hbm_to_vmem [thread:$0]  %s659, 32, %s662, %s650
        $region68: #{tpu_custom_call.1} parent=19 // pred_fallthru
          _
      $region20: #{tpu_custom_call.1} parent=5 // pred_fallthru
        _
      %p665 = scmp.le.s32.totalorder 1, %s39
      %p666 = scmp.lt.s32.totalorder %s39, 4
      %p667 = pnand %p665, %p666
      %p668 = pneg %p667
      // Predicated region
      $region69: #{tpu_custom_call.1} parent=5 // pred_check
        _
      $region70: #{tpu_custom_call.1} parent=5 // pred_check_branch
        %670 = sbr.rel (%p667) target = $region72
      $region71: #{tpu_custom_call.1} parent=5 // pred_region
        %s671 = ssub.s32 %s39, 1
        // Predicated region
        $region73: #{tpu_custom_call.1} parent=71 // pred_check
          %p672 = pneg %p60
        $region74: #{tpu_custom_call.1} parent=71 // pred_check_branch
          %674 = sbr.rel (%p672) target = $region76
        $region75: #{tpu_custom_call.1} parent=71 // pred_region
          %675 = dma.done [#allocation4], 512
        $region76: #{tpu_custom_call.1} parent=71 // pred_fallthru
          _
        %s676 = sand.u32 %s44, 1
        %s677 = scalar_lea.sflag [#allocation7], %s676
        %s678 = sand.u32 %s73, 1
        %s679 = smul.addr %s678, 256
        %s680 = scalar_lea.vmem [#allocation6], %s679
        // Predicated region
        $region77: #{tpu_custom_call.1} parent=71 // pred_check
          %p681 = pneg %p86
        $region78: #{tpu_custom_call.1} parent=71 // pred_check_branch
          %683 = sbr.rel (%p681) target = $region80
        $region79: #{tpu_custom_call.1} parent=71 // pred_region
          %684 = dma.done %s677, 4096
        $region80: #{tpu_custom_call.1} parent=71 // pred_fallthru
          _
        %s685 = sand.u32 %s44, 1
        %s686 = scalar_lea.sflag [#allocation7], %s685
        %s687 = sand.u32 %s99, 1
        %s688 = smul.addr %s687, 256
        %s689 = scalar_lea.vmem [#allocation8], %s688
        // Predicated region
        $region81: #{tpu_custom_call.1} parent=71 // pred_check
          %p690 = pneg %p112
        $region82: #{tpu_custom_call.1} parent=71 // pred_check_branch
          %692 = sbr.rel (%p690) target = $region84
        $region83: #{tpu_custom_call.1} parent=71 // pred_region
          %693 = dma.done %s686, 4096
        $region84: #{tpu_custom_call.1} parent=71 // pred_fallthru
          _
        %s694 = sand.u32 %s44, 1
        %s695 = scalar_lea.sflag [#allocation10], %s694
        %s696 = sand.u32 %s125, 1
        %s697 = smul.addr %s696, 256
        %s698 = scalar_lea.vmem [#allocation9], %s697
        // Predicated region
        $region85: #{tpu_custom_call.1} parent=71 // pred_check
          %p699 = pneg %p138
        $region86: #{tpu_custom_call.1} parent=71 // pred_check_branch
          %701 = sbr.rel (%p699) target = $region88
        $region87: #{tpu_custom_call.1} parent=71 // pred_region
          %702 = dma.done %s695, 4096
        $region88: #{tpu_custom_call.1} parent=71 // pred_fallthru
          _
        %s703 = sand.u32 %s44, 1
        %s704 = scalar_lea.sflag [#allocation10], %s703
        %s705 = sand.u32 %s151, 1
        %s706 = smul.addr %s705, 256
        %s707 = scalar_lea.vmem [#allocation11], %s706
        // Predicated region
        $region89: #{tpu_custom_call.1} parent=71 // pred_check
          %p708 = pneg %p164
        $region90: #{tpu_custom_call.1} parent=71 // pred_check_branch
          %710 = sbr.rel (%p708) target = $region92
        $region91: #{tpu_custom_call.1} parent=71 // pred_region
          %711 = dma.done %s704, 4096
        $region92: #{tpu_custom_call.1} parent=71 // pred_fallthru
          _
        %s712 = sand.u32 %s44, 1
        %s713 = scalar_lea.sflag [#allocation13], %s712
        %s714 = sand.u32 %s177, 1
        %s715 = smul.addr %s714, 2
        %s716 = scalar_lea.vmem [#allocation12], %s715
        // Predicated region
        $region93: #{tpu_custom_call.1} parent=71 // pred_check
          %p717 = pneg %p190
        $region94: #{tpu_custom_call.1} parent=71 // pred_check_branch
          %719 = sbr.rel (%p717) target = $region96
        $region95: #{tpu_custom_call.1} parent=71 // pred_region
          %720 = dma.done %s713, 32
        $region96: #{tpu_custom_call.1} parent=71 // pred_fallthru
          _
        %s721 = sand.u32 %s44, 1
        %s722 = scalar_lea.sflag [#allocation13], %s721
        %s723 = sand.u32 %s203, 1
        %s724 = smul.addr %s723, 2
        %s725 = scalar_lea.vmem [#allocation14], %s724
        // Predicated region
        $region97: #{tpu_custom_call.1} parent=71 // pred_check
          %p726 = pneg %p216
        $region98: #{tpu_custom_call.1} parent=71 // pred_check_branch
          %728 = sbr.rel (%p726) target = $region100
        $region99: #{tpu_custom_call.1} parent=71 // pred_region
          %729 = dma.done %s722, 32
        $region100: #{tpu_custom_call.1} parent=71 // pred_fallthru
          _
        %s730 = sand.u32 %s44, 1
        %s731 = scalar_lea.sflag [#allocation16], %s730
        %s732 = sand.u32 %s229, 1
        %s733 = smul.addr %s732, 1024
        %s734 = scalar_lea.vmem [#allocation15], %s733
        // Predicated region
        $region101: #{tpu_custom_call.1} parent=71 // pred_check
          %p735 = pneg %p242
        $region102: #{tpu_custom_call.1} parent=71 // pred_check_branch
          %737 = sbr.rel (%p735) target = $region104
        $region103: #{tpu_custom_call.1} parent=71 // pred_region
          %738 = dma.done %s731, 16384
        $region104: #{tpu_custom_call.1} parent=71 // pred_fallthru
          _
        %s739 = sand.u32 %s44, 1
        %s740 = scalar_lea.sflag [#allocation16], %s739
        %s741 = sand.u32 %s255, 1
        %s742 = smul.addr %s741, 8
        %s743 = scalar_lea.vmem [#allocation17], %s742
        // Predicated region
        $region105: #{tpu_custom_call.1} parent=71 // pred_check
          %p744 = pneg %p268
        $region106: #{tpu_custom_call.1} parent=71 // pred_check_branch
          %746 = sbr.rel (%p744) target = $region108
        $region107: #{tpu_custom_call.1} parent=71 // pred_region
          %747 = dma.done %s740, 128
        $region108: #{tpu_custom_call.1} parent=71 // pred_fallthru
          _
        %s748 = sand.u32 %s44, 1
        %s749 = scalar_lea.sflag [#allocation19], %s748
        %s750 = sand.u32 %s281, 1
        %s751 = smul.addr %s750, 1024
        %s752 = scalar_lea.vmem [#allocation18], %s751
        // Predicated region
        $region109: #{tpu_custom_call.1} parent=71 // pred_check
          %p753 = pneg %p294
        $region110: #{tpu_custom_call.1} parent=71 // pred_check_branch
          %755 = sbr.rel (%p753) target = $region112
        $region111: #{tpu_custom_call.1} parent=71 // pred_region
          %756 = dma.done %s749, 16384
        $region112: #{tpu_custom_call.1} parent=71 // pred_fallthru
          _
        %s757 = sand.u32 %s44, 1
        %s758 = scalar_lea.sflag [#allocation19], %s757
        %s759 = sand.u32 %s307, 1
        %s760 = smul.addr %s759, 2
        %s761 = scalar_lea.vmem [#allocation20], %s760
        // Predicated region
        $region113: #{tpu_custom_call.1} parent=71 // pred_check
          %p762 = pneg %p320
        $region114: #{tpu_custom_call.1} parent=71 // pred_check_branch
          %764 = sbr.rel (%p762) target = $region116
        $region115: #{tpu_custom_call.1} parent=71 // pred_region
          %765 = dma.done %s758, 32
        $region116: #{tpu_custom_call.1} parent=71 // pred_fallthru
          _
        %s766 = sand.u32 %s44, 1
        %s767 = scalar_lea.sflag [#allocation22], %s766
        %s768 = sand.u32 %s333, 1
        %s769 = smul.addr %s768, 2
        %s770 = scalar_lea.vmem [#allocation21], %s769
        // Predicated region
        $region117: #{tpu_custom_call.1} parent=71 // pred_check
          %p771 = pneg %p346
        $region118: #{tpu_custom_call.1} parent=71 // pred_check_branch
          %773 = sbr.rel (%p771) target = $region120
        $region119: #{tpu_custom_call.1} parent=71 // pred_region
          %774 = dma.done %s767, 32
        $region120: #{tpu_custom_call.1} parent=71 // pred_fallthru
          _
        %s775 = sand.u32 %s44, 1
        %s776 = scalar_lea.sflag [#allocation22], %s775
        %s777 = sand.u32 %s359, 1
        %s778 = smul.addr %s777, 2
        %s779 = scalar_lea.vmem [#allocation23], %s778
        // Predicated region
        $region121: #{tpu_custom_call.1} parent=71 // pred_check
          %p780 = pneg %p372
        $region122: #{tpu_custom_call.1} parent=71 // pred_check_branch
          %782 = sbr.rel (%p780) target = $region124
        $region123: #{tpu_custom_call.1} parent=71 // pred_region
          %783 = dma.done %s776, 32
        $region124: #{tpu_custom_call.1} parent=71 // pred_fallthru
          _
        %p784 = pneg %p60
        %p785 = pneg %p57
        %s786 = sand.u32 %s44, 1
        %s787 = scalar_lea.sflag [#allocation7], %s786
        %s788 = sand.u32 %s73, 1
        %s789 = smul.addr %s788, 256
        %s790 = scalar_lea.vmem [#allocation6], %s789
        %p791 = pneg %p86
        %p792 = pneg %p83
        %s793 = sand.u32 %s44, 1
        %s794 = scalar_lea.sflag [#allocation7], %s793
        %s795 = sand.u32 %s99, 1
        %s796 = smul.addr %s795, 256
        %s797 = scalar_lea.vmem [#allocation8], %s796
        %p798 = pneg %p112
        %p799 = pneg %p109
        %s800 = sand.u32 %s44, 1
        %s801 = scalar_lea.sflag [#allocation10], %s800
        %s802 = sand.u32 %s125, 1
        %s803 = smul.addr %s802, 256
        %s804 = scalar_lea.vmem [#allocation9], %s803
        %p805 = pneg %p138
        %p806 = pneg %p135
        %s807 = sand.u32 %s44, 1
        %s808 = scalar_lea.sflag [#allocation10], %s807
        %s809 = sand.u32 %s151, 1
        %s810 = smul.addr %s809, 256
        %s811 = scalar_lea.vmem [#allocation11], %s810
        %p812 = pneg %p164
        %p813 = pneg %p161
        %s814 = sand.u32 %s44, 1
        %s815 = scalar_lea.sflag [#allocation13], %s814
        %s816 = sand.u32 %s177, 1
        %s817 = smul.addr %s816, 2
        %s818 = scalar_lea.vmem [#allocation12], %s817
        %p819 = pneg %p190
        %p820 = pneg %p187
        %s821 = sand.u32 %s44, 1
        %s822 = scalar_lea.sflag [#allocation13], %s821
        %s823 = sand.u32 %s203, 1
        %s824 = smul.addr %s823, 2
        %s825 = scalar_lea.vmem [#allocation14], %s824
        %p826 = pneg %p216
        %p827 = pneg %p213
        %s828 = sand.u32 %s44, 1
        %s829 = scalar_lea.sflag [#allocation16], %s828
        %s830 = sand.u32 %s229, 1
        %s831 = smul.addr %s830, 1024
        %s832 = scalar_lea.vmem [#allocation15], %s831
        %p833 = pneg %p242
        %p834 = pneg %p239
        %s835 = sand.u32 %s44, 1
        %s836 = scalar_lea.sflag [#allocation16], %s835
        %s837 = sand.u32 %s255, 1
        %s838 = smul.addr %s837, 8
        %s839 = scalar_lea.vmem [#allocation17], %s838
        %p840 = pneg %p268
        %p841 = pneg %p265
        %s842 = sand.u32 %s44, 1
        %s843 = scalar_lea.sflag [#allocation19], %s842
        %s844 = sand.u32 %s281, 1
        %s845 = smul.addr %s844, 1024
        %s846 = scalar_lea.vmem [#allocation18], %s845
        %p847 = pneg %p294
        %p848 = pneg %p291
        %s849 = sand.u32 %s44, 1
        %s850 = scalar_lea.sflag [#allocation19], %s849
        %s851 = sand.u32 %s307, 1
        %s852 = smul.addr %s851, 2
        %s853 = scalar_lea.vmem [#allocation20], %s852
        %p854 = pneg %p320
        %p855 = pneg %p317
        %s856 = sand.u32 %s44, 1
        %s857 = scalar_lea.sflag [#allocation22], %s856
        %s858 = sand.u32 %s333, 1
        %s859 = smul.addr %s858, 2
        %s860 = scalar_lea.vmem [#allocation21], %s859
        %p861 = pneg %p346
        %p862 = pneg %p343
        %s863 = sand.u32 %s44, 1
        %s864 = scalar_lea.sflag [#allocation22], %s863
        %s865 = sand.u32 %s359, 1
        %s866 = smul.addr %s865, 2
        %s867 = scalar_lea.vmem [#allocation23], %s866
        %p868 = pneg %p372
        %p869 = pneg %p369
        %p870 = pneg %p393
        %p871 = pneg %p390
        %p873 = scmp.eq.s32.totalorder %s44, 0
        // Predicated region
        $region125: #{tpu_custom_call.1} parent=71 // pred_check
          %p874 = pneg %p873
        $region126: #{tpu_custom_call.1} parent=71 // pred_check_branch
          %876 = sbr.rel (%p874) target = $region128
        $region127: #{tpu_custom_call.1} parent=71 // pred_region
          %v877 = vld [vmem:[#allocation3] sm:$0xff]
          %v878 = vld [vmem:[#allocation3 + $0x8] sm:$0xff]
          %v879 = vld [vmem:[#allocation3 + $0x10] sm:$0xff]
          %v880 = vld [vmem:[#allocation3 + $0x18] sm:$0xff]
          %881 = vst [vmem:[#allocation2] sm:$0xff] %v877
          %882 = vst [vmem:[#allocation2 + $0x8] sm:$0xff] %v878
          %883 = vst [vmem:[#allocation2 + $0x10] sm:$0xff] %v879
          %884 = vst [vmem:[#allocation2 + $0x18] sm:$0xff] %v880
        $region128: #{tpu_custom_call.1} parent=71 // pred_fallthru
          _
        %v885 = vld [vmem:[%s680] sm:$0xff]
        %v886 = vld [vmem:[%s680 + $0x8] sm:$0xff]
        %v887 = vld [vmem:[%s680 + $0x10] sm:$0xff]
        %v888 = vld [vmem:[%s680 + $0x18] sm:$0xff]
        %v889 = vld [vmem:[%s680 + $0x20] sm:$0xff]
        %v890 = vld [vmem:[%s680 + $0x28] sm:$0xff]
        %v891 = vld [vmem:[%s680 + $0x30] sm:$0xff]
        %v892 = vld [vmem:[%s680 + $0x38] sm:$0xff]
        %v893 = vld [vmem:[%s680 + $0x40] sm:$0xff]
        %v894 = vld [vmem:[%s680 + $0x48] sm:$0xff]
        %v895 = vld [vmem:[%s680 + $0x50] sm:$0xff]
        %v896 = vld [vmem:[%s680 + $0x58] sm:$0xff]
        %v897 = vld [vmem:[%s680 + $0x60] sm:$0xff]
        %v898 = vld [vmem:[%s680 + $0x68] sm:$0xff]
        %v899 = vld [vmem:[%s680 + $0x70] sm:$0xff]
        %v900 = vld [vmem:[%s680 + $0x78] sm:$0xff]
        %v901 = vld [vmem:[%s680 + $0x80] sm:$0xff]
        %v902 = vld [vmem:[%s680 + $0x88] sm:$0xff]
        %v903 = vld [vmem:[%s680 + $0x90] sm:$0xff]
        %v904 = vld [vmem:[%s680 + $0x98] sm:$0xff]
        %v905 = vld [vmem:[%s680 + $0xa0] sm:$0xff]
        %v906 = vld [vmem:[%s680 + $0xa8] sm:$0xff]
        %v907 = vld [vmem:[%s680 + $0xb0] sm:$0xff]
        %v908 = vld [vmem:[%s680 + $0xb8] sm:$0xff]
        %v909 = vld [vmem:[%s680 + $0xc0] sm:$0xff]
        %v910 = vld [vmem:[%s680 + $0xc8] sm:$0xff]
        %v911 = vld [vmem:[%s680 + $0xd0] sm:$0xff]
        %v912 = vld [vmem:[%s680 + $0xd8] sm:$0xff]
        %v913 = vld [vmem:[%s680 + $0xe0] sm:$0xff]
        %v914 = vld [vmem:[%s680 + $0xe8] sm:$0xff]
        %v915 = vld [vmem:[%s680 + $0xf0] sm:$0xff]
        %v916 = vld [vmem:[%s680 + $0xf8] sm:$0xff]
        %v917 = vld [vmem:[%s689] sm:$0xff]
        %v918 = vld [vmem:[%s689 + $0x8] sm:$0xff]
        %v919 = vld [vmem:[%s689 + $0x10] sm:$0xff]
        %v920 = vld [vmem:[%s689 + $0x18] sm:$0xff]
        %v921 = vld [vmem:[%s689 + $0x20] sm:$0xff]
        %v922 = vld [vmem:[%s689 + $0x28] sm:$0xff]
        %v923 = vld [vmem:[%s689 + $0x30] sm:$0xff]
        %v924 = vld [vmem:[%s689 + $0x38] sm:$0xff]
        %v925 = vld [vmem:[%s689 + $0x40] sm:$0xff]
        %v926 = vld [vmem:[%s689 + $0x48] sm:$0xff]
        %v927 = vld [vmem:[%s689 + $0x50] sm:$0xff]
        %v928 = vld [vmem:[%s689 + $0x58] sm:$0xff]
        %v929 = vld [vmem:[%s689 + $0x60] sm:$0xff]
        %v930 = vld [vmem:[%s689 + $0x68] sm:$0xff]
        %v931 = vld [vmem:[%s689 + $0x70] sm:$0xff]
        %v932 = vld [vmem:[%s689 + $0x78] sm:$0xff]
        %v933 = vld [vmem:[%s689 + $0x80] sm:$0xff]
        %v934 = vld [vmem:[%s689 + $0x88] sm:$0xff]
        %v935 = vld [vmem:[%s689 + $0x90] sm:$0xff]
        %v936 = vld [vmem:[%s689 + $0x98] sm:$0xff]
        %v937 = vld [vmem:[%s689 + $0xa0] sm:$0xff]
        %v938 = vld [vmem:[%s689 + $0xa8] sm:$0xff]
        %v939 = vld [vmem:[%s689 + $0xb0] sm:$0xff]
        %v940 = vld [vmem:[%s689 + $0xb8] sm:$0xff]
        %v941 = vld [vmem:[%s689 + $0xc0] sm:$0xff]
        %v942 = vld [vmem:[%s689 + $0xc8] sm:$0xff]
        %v943 = vld [vmem:[%s689 + $0xd0] sm:$0xff]
        %v944 = vld [vmem:[%s689 + $0xd8] sm:$0xff]
        %v945 = vld [vmem:[%s689 + $0xe0] sm:$0xff]
        %v946 = vld [vmem:[%s689 + $0xe8] sm:$0xff]
        %v947 = vld [vmem:[%s689 + $0xf0] sm:$0xff]
        %v948 = vld [vmem:[%s689 + $0xf8] sm:$0xff]
        %v949 = vld [vmem:[%s698] sm:$0xff]
        %v950 = vld [vmem:[%s698 + $0x8] sm:$0xff]
        %v951 = vld [vmem:[%s698 + $0x10] sm:$0xff]
        %v952 = vld [vmem:[%s698 + $0x18] sm:$0xff]
        %v953 = vld [vmem:[%s698 + $0x20] sm:$0xff]
        %v954 = vld [vmem:[%s698 + $0x28] sm:$0xff]
        %v955 = vld [vmem:[%s698 + $0x30] sm:$0xff]
        %v956 = vld [vmem:[%s698 + $0x38] sm:$0xff]
        %v957 = vld [vmem:[%s698 + $0x40] sm:$0xff]
        %v958 = vld [vmem:[%s698 + $0x48] sm:$0xff]
        %v959 = vld [vmem:[%s698 + $0x50] sm:$0xff]
        %v960 = vld [vmem:[%s698 + $0x58] sm:$0xff]
        %v961 = vld [vmem:[%s698 + $0x60] sm:$0xff]
        %v962 = vld [vmem:[%s698 + $0x68] sm:$0xff]
        %v963 = vld [vmem:[%s698 + $0x70] sm:$0xff]
        %v964 = vld [vmem:[%s698 + $0x78] sm:$0xff]
        %v965 = vld [vmem:[%s698 + $0x80] sm:$0xff]
        %v966 = vld [vmem:[%s698 + $0x88] sm:$0xff]
        %v967 = vld [vmem:[%s698 + $0x90] sm:$0xff]
        %v968 = vld [vmem:[%s698 + $0x98] sm:$0xff]
        %v969 = vld [vmem:[%s698 + $0xa0] sm:$0xff]
        %v970 = vld [vmem:[%s698 + $0xa8] sm:$0xff]
        %v971 = vld [vmem:[%s698 + $0xb0] sm:$0xff]
        %v972 = vld [vmem:[%s698 + $0xb8] sm:$0xff]
        %v973 = vld [vmem:[%s698 + $0xc0] sm:$0xff]
        %v974 = vld [vmem:[%s698 + $0xc8] sm:$0xff]
        %v975 = vld [vmem:[%s698 + $0xd0] sm:$0xff]
        %v976 = vld [vmem:[%s698 + $0xd8] sm:$0xff]
        %v977 = vld [vmem:[%s698 + $0xe0] sm:$0xff]
        %v978 = vld [vmem:[%s698 + $0xe8] sm:$0xff]
        %v979 = vld [vmem:[%s698 + $0xf0] sm:$0xff]
        %v980 = vld [vmem:[%s698 + $0xf8] sm:$0xff]
        %v981 = vld [vmem:[%s707] sm:$0xff]
        %v982 = vld [vmem:[%s707 + $0x8] sm:$0xff]
        %v983 = vld [vmem:[%s707 + $0x10] sm:$0xff]
        %v984 = vld [vmem:[%s707 + $0x18] sm:$0xff]
        %v985 = vld [vmem:[%s707 + $0x20] sm:$0xff]
        %v986 = vld [vmem:[%s707 + $0x28] sm:$0xff]
        %v987 = vld [vmem:[%s707 + $0x30] sm:$0xff]
        %v988 = vld [vmem:[%s707 + $0x38] sm:$0xff]
        %v989 = vld [vmem:[%s707 + $0x40] sm:$0xff]
        %v990 = vld [vmem:[%s707 + $0x48] sm:$0xff]
        %v991 = vld [vmem:[%s707 + $0x50] sm:$0xff]
        %v992 = vld [vmem:[%s707 + $0x58] sm:$0xff]
        %v993 = vld [vmem:[%s707 + $0x60] sm:$0xff]
        %v994 = vld [vmem:[%s707 + $0x68] sm:$0xff]
        %v995 = vld [vmem:[%s707 + $0x70] sm:$0xff]
        %v996 = vld [vmem:[%s707 + $0x78] sm:$0xff]
        %v997 = vld [vmem:[%s707 + $0x80] sm:$0xff]
        %v998 = vld [vmem:[%s707 + $0x88] sm:$0xff]
        %v999 = vld [vmem:[%s707 + $0x90] sm:$0xff]
        %v1000 = vld [vmem:[%s707 + $0x98] sm:$0xff]
        %v1001 = vld [vmem:[%s707 + $0xa0] sm:$0xff]
        %v1002 = vld [vmem:[%s707 + $0xa8] sm:$0xff]
        %v1003 = vld [vmem:[%s707 + $0xb0] sm:$0xff]
        %v1004 = vld [vmem:[%s707 + $0xb8] sm:$0xff]
        %v1005 = vld [vmem:[%s707 + $0xc0] sm:$0xff]
        %v1006 = vld [vmem:[%s707 + $0xc8] sm:$0xff]
        %v1007 = vld [vmem:[%s707 + $0xd0] sm:$0xff]
        %v1008 = vld [vmem:[%s707 + $0xd8] sm:$0xff]
        %v1009 = vld [vmem:[%s707 + $0xe0] sm:$0xff]
        %v1010 = vld [vmem:[%s707 + $0xe8] sm:$0xff]
        %v1011 = vld [vmem:[%s707 + $0xf0] sm:$0xff]
        %v1012 = vld [vmem:[%s707 + $0xf8] sm:$0xff]
        %v1013 = vld [vmem:[%s716] sm:$0x3]
        %v1014 = vld [vmem:[%s725] sm:$0x3]
        %v1015 = vld [vmem:[%s734] sm:$0xff]
        %v1016 = vld [vmem:[%s734 + $0x8] sm:$0xff]
        %v1017 = vld [vmem:[%s734 + $0x10] sm:$0xff]
        %v1018 = vld [vmem:[%s734 + $0x18] sm:$0xff]
        %v1019 = vld [vmem:[%s734 + $0x20] sm:$0xff]
        %v1020 = vld [vmem:[%s734 + $0x28] sm:$0xff]
        %v1021 = vld [vmem:[%s734 + $0x30] sm:$0xff]
        %v1022 = vld [vmem:[%s734 + $0x38] sm:$0xff]
        %v1023 = vld [vmem:[%s734 + $0x40] sm:$0xff]
        %v1024 = vld [vmem:[%s734 + $0x48] sm:$0xff]
        %v1025 = vld [vmem:[%s734 + $0x50] sm:$0xff]
        %v1026 = vld [vmem:[%s734 + $0x58] sm:$0xff]
        %v1027 = vld [vmem:[%s734 + $0x60] sm:$0xff]
        %v1028 = vld [vmem:[%s734 + $0x68] sm:$0xff]
        %v1029 = vld [vmem:[%s734 + $0x70] sm:$0xff]
        %v1030 = vld [vmem:[%s734 + $0x78] sm:$0xff]
        %v1031 = vld [vmem:[%s734 + $0x80] sm:$0xff]
        %v1032 = vld [vmem:[%s734 + $0x88] sm:$0xff]
        %v1033 = vld [vmem:[%s734 + $0x90] sm:$0xff]
        %v1034 = vld [vmem:[%s734 + $0x98] sm:$0xff]
        %v1035 = vld [vmem:[%s734 + $0xa0] sm:$0xff]
        %v1036 = vld [vmem:[%s734 + $0xa8] sm:$0xff]
        %v1037 = vld [vmem:[%s734 + $0xb0] sm:$0xff]
        %v1038 = vld [vmem:[%s734 + $0xb8] sm:$0xff]
        %v1039 = vld [vmem:[%s734 + $0xc0] sm:$0xff]
        %v1040 = vld [vmem:[%s734 + $0xc8] sm:$0xff]
        %v1041 = vld [vmem:[%s734 + $0xd0] sm:$0xff]
        %v1042 = vld [vmem:[%s734 + $0xd8] sm:$0xff]
        %v1043 = vld [vmem:[%s734 + $0xe0] sm:$0xff]
        %v1044 = vld [vmem:[%s734 + $0xe8] sm:$0xff]
        %v1045 = vld [vmem:[%s734 + $0xf0] sm:$0xff]
        %v1046 = vld [vmem:[%s734 + $0xf8] sm:$0xff]
        %v1047 = vld [vmem:[%s734 + $0x100] sm:$0xff]
        %v1048 = vld [vmem:[%s734 + $0x108] sm:$0xff]
        %v1049 = vld [vmem:[%s734 + $0x110] sm:$0xff]
        %v1050 = vld [vmem:[%s734 + $0x118] sm:$0xff]
        %v1051 = vld [vmem:[%s734 + $0x120] sm:$0xff]
        %v1052 = vld [vmem:[%s734 + $0x128] sm:$0xff]
        %v1053 = vld [vmem:[%s734 + $0x130] sm:$0xff]
        %v1054 = vld [vmem:[%s734 + $0x138] sm:$0xff]
        %v1055 = vld [vmem:[%s734 + $0x140] sm:$0xff]
        %v1056 = vld [vmem:[%s734 + $0x148] sm:$0xff]
        %v1057 = vld [vmem:[%s734 + $0x150] sm:$0xff]
        %v1058 = vld [vmem:[%s734 + $0x158] sm:$0xff]
        %v1059 = vld [vmem:[%s734 + $0x160] sm:$0xff]
        %v1060 = vld [vmem:[%s734 + $0x168] sm:$0xff]
        %v1061 = vld [vmem:[%s734 + $0x170] sm:$0xff]
        %v1062 = vld [vmem:[%s734 + $0x178] sm:$0xff]
        %v1063 = vld [vmem:[%s734 + $0x180] sm:$0xff]
        %v1064 = vld [vmem:[%s734 + $0x188] sm:$0xff]
        %v1065 = vld [vmem:[%s734 + $0x190] sm:$0xff]
        %v1066 = vld [vmem:[%s734 + $0x198] sm:$0xff]
        %v1067 = vld [vmem:[%s734 + $0x1a0] sm:$0xff]
        %v1068 = vld [vmem:[%s734 + $0x1a8] sm:$0xff]
        %v1069 = vld [vmem:[%s734 + $0x1b0] sm:$0xff]
        %v1070 = vld [vmem:[%s734 + $0x1b8] sm:$0xff]
        %v1071 = vld [vmem:[%s734 + $0x1c0] sm:$0xff]
        %v1072 = vld [vmem:[%s734 + $0x1c8] sm:$0xff]
        %v1073 = vld [vmem:[%s734 + $0x1d0] sm:$0xff]
        %v1074 = vld [vmem:[%s734 + $0x1d8] sm:$0xff]
        %v1075 = vld [vmem:[%s734 + $0x1e0] sm:$0xff]
        %v1076 = vld [vmem:[%s734 + $0x1e8] sm:$0xff]
        %v1077 = vld [vmem:[%s734 + $0x1f0] sm:$0xff]
        %v1078 = vld [vmem:[%s734 + $0x1f8] sm:$0xff]
        %v1079 = vld [vmem:[%s734 + $0x200] sm:$0xff]
        %v1080 = vld [vmem:[%s734 + $0x208] sm:$0xff]
        %v1081 = vld [vmem:[%s734 + $0x210] sm:$0xff]
        %v1082 = vld [vmem:[%s734 + $0x218] sm:$0xff]
        %v1083 = vld [vmem:[%s734 + $0x220] sm:$0xff]
        %v1084 = vld [vmem:[%s734 + $0x228] sm:$0xff]
        %v1085 = vld [vmem:[%s734 + $0x230] sm:$0xff]
        %v1086 = vld [vmem:[%s734 + $0x238] sm:$0xff]
        %v1087 = vld [vmem:[%s734 + $0x240] sm:$0xff]
        %v1088 = vld [vmem:[%s734 + $0x248] sm:$0xff]
        %v1089 = vld [vmem:[%s734 + $0x250] sm:$0xff]
        %v1090 = vld [vmem:[%s734 + $0x258] sm:$0xff]
        %v1091 = vld [vmem:[%s734 + $0x260] sm:$0xff]
        %v1092 = vld [vmem:[%s734 + $0x268] sm:$0xff]
        %v1093 = vld [vmem:[%s734 + $0x270] sm:$0xff]
        %v1094 = vld [vmem:[%s734 + $0x278] sm:$0xff]
        %v1095 = vld [vmem:[%s734 + $0x280] sm:$0xff]
        %v1096 = vld [vmem:[%s734 + $0x288] sm:$0xff]
        %v1097 = vld [vmem:[%s734 + $0x290] sm:$0xff]
        %v1098 = vld [vmem:[%s734 + $0x298] sm:$0xff]
        %v1099 = vld [vmem:[%s734 + $0x2a0] sm:$0xff]
        %v1100 = vld [vmem:[%s734 + $0x2a8] sm:$0xff]
        %v1101 = vld [vmem:[%s734 + $0x2b0] sm:$0xff]
        %v1102 = vld [vmem:[%s734 + $0x2b8] sm:$0xff]
        %v1103 = vld [vmem:[%s734 + $0x2c0] sm:$0xff]
        %v1104 = vld [vmem:[%s734 + $0x2c8] sm:$0xff]
        %v1105 = vld [vmem:[%s734 + $0x2d0] sm:$0xff]
        %v1106 = vld [vmem:[%s734 + $0x2d8] sm:$0xff]
        %v1107 = vld [vmem:[%s734 + $0x2e0] sm:$0xff]
        %v1108 = vld [vmem:[%s734 + $0x2e8] sm:$0xff]
        %v1109 = vld [vmem:[%s734 + $0x2f0] sm:$0xff]
        %v1110 = vld [vmem:[%s734 + $0x2f8] sm:$0xff]
        %v1111 = vld [vmem:[%s734 + $0x300] sm:$0xff]
        %v1112 = vld [vmem:[%s734 + $0x308] sm:$0xff]
        %v1113 = vld [vmem:[%s734 + $0x310] sm:$0xff]
        %v1114 = vld [vmem:[%s734 + $0x318] sm:$0xff]
        %v1115 = vld [vmem:[%s734 + $0x320] sm:$0xff]
        %v1116 = vld [vmem:[%s734 + $0x328] sm:$0xff]
        %v1117 = vld [vmem:[%s734 + $0x330] sm:$0xff]
        %v1118 = vld [vmem:[%s734 + $0x338] sm:$0xff]
        %v1119 = vld [vmem:[%s734 + $0x340] sm:$0xff]
        %v1120 = vld [vmem:[%s734 + $0x348] sm:$0xff]
        %v1121 = vld [vmem:[%s734 + $0x350] sm:$0xff]
        %v1122 = vld [vmem:[%s734 + $0x358] sm:$0xff]
        %v1123 = vld [vmem:[%s734 + $0x360] sm:$0xff]
        %v1124 = vld [vmem:[%s734 + $0x368] sm:$0xff]
        %v1125 = vld [vmem:[%s734 + $0x370] sm:$0xff]
        %v1126 = vld [vmem:[%s734 + $0x378] sm:$0xff]
        %v1127 = vld [vmem:[%s734 + $0x380] sm:$0xff]
        %v1128 = vld [vmem:[%s734 + $0x388] sm:$0xff]
        %v1129 = vld [vmem:[%s734 + $0x390] sm:$0xff]
        %v1130 = vld [vmem:[%s734 + $0x398] sm:$0xff]
        %v1131 = vld [vmem:[%s734 + $0x3a0] sm:$0xff]
        %v1132 = vld [vmem:[%s734 + $0x3a8] sm:$0xff]
        %v1133 = vld [vmem:[%s734 + $0x3b0] sm:$0xff]
        %v1134 = vld [vmem:[%s734 + $0x3b8] sm:$0xff]
        %v1135 = vld [vmem:[%s734 + $0x3c0] sm:$0xff]
        %v1136 = vld [vmem:[%s734 + $0x3c8] sm:$0xff]
        %v1137 = vld [vmem:[%s734 + $0x3d0] sm:$0xff]
        %v1138 = vld [vmem:[%s734 + $0x3d8] sm:$0xff]
        %v1139 = vld [vmem:[%s734 + $0x3e0] sm:$0xff]
        %v1140 = vld [vmem:[%s734 + $0x3e8] sm:$0xff]
        %v1141 = vld [vmem:[%s734 + $0x3f0] sm:$0xff]
        %v1142 = vld [vmem:[%s734 + $0x3f8] sm:$0xff]
        %v1143 = vld [vmem:[%s743] sm:$0xff]
        %v1144 = vld [vmem:[%s752] sm:$0xff]
        %v1145 = vld [vmem:[%s752 + $0x8] sm:$0xff]
        %v1146 = vld [vmem:[%s752 + $0x10] sm:$0xff]
        %v1147 = vld [vmem:[%s752 + $0x18] sm:$0xff]
        %v1148 = vld [vmem:[%s752 + $0x20] sm:$0xff]
        %v1149 = vld [vmem:[%s752 + $0x28] sm:$0xff]
        %v1150 = vld [vmem:[%s752 + $0x30] sm:$0xff]
        %v1151 = vld [vmem:[%s752 + $0x38] sm:$0xff]
        %v1152 = vld [vmem:[%s752 + $0x40] sm:$0xff]
        %v1153 = vld [vmem:[%s752 + $0x48] sm:$0xff]
        %v1154 = vld [vmem:[%s752 + $0x50] sm:$0xff]
        %v1155 = vld [vmem:[%s752 + $0x58] sm:$0xff]
        %v1156 = vld [vmem:[%s752 + $0x60] sm:$0xff]
        %v1157 = vld [vmem:[%s752 + $0x68] sm:$0xff]
        %v1158 = vld [vmem:[%s752 + $0x70] sm:$0xff]
        %v1159 = vld [vmem:[%s752 + $0x78] sm:$0xff]
        %v1160 = vld [vmem:[%s752 + $0x80] sm:$0xff]
        %v1161 = vld [vmem:[%s752 + $0x88] sm:$0xff]
        %v1162 = vld [vmem:[%s752 + $0x90] sm:$0xff]
        %v1163 = vld [vmem:[%s752 + $0x98] sm:$0xff]
        %v1164 = vld [vmem:[%s752 + $0xa0] sm:$0xff]
        %v1165 = vld [vmem:[%s752 + $0xa8] sm:$0xff]
        %v1166 = vld [vmem:[%s752 + $0xb0] sm:$0xff]
        %v1167 = vld [vmem:[%s752 + $0xb8] sm:$0xff]
        %v1168 = vld [vmem:[%s752 + $0xc0] sm:$0xff]
        %v1169 = vld [vmem:[%s752 + $0xc8] sm:$0xff]
        %v1170 = vld [vmem:[%s752 + $0xd0] sm:$0xff]
        %v1171 = vld [vmem:[%s752 + $0xd8] sm:$0xff]
        %v1172 = vld [vmem:[%s752 + $0xe0] sm:$0xff]
        %v1173 = vld [vmem:[%s752 + $0xe8] sm:$0xff]
        %v1174 = vld [vmem:[%s752 + $0xf0] sm:$0xff]
        %v1175 = vld [vmem:[%s752 + $0xf8] sm:$0xff]
        %v1176 = vld [vmem:[%s752 + $0x100] sm:$0xff]
        %v1177 = vld [vmem:[%s752 + $0x108] sm:$0xff]
        %v1178 = vld [vmem:[%s752 + $0x110] sm:$0xff]
        %v1179 = vld [vmem:[%s752 + $0x118] sm:$0xff]
        %v1180 = vld [vmem:[%s752 + $0x120] sm:$0xff]
        %v1181 = vld [vmem:[%s752 + $0x128] sm:$0xff]
        %v1182 = vld [vmem:[%s752 + $0x130] sm:$0xff]
        %v1183 = vld [vmem:[%s752 + $0x138] sm:$0xff]
        %v1184 = vld [vmem:[%s752 + $0x140] sm:$0xff]
        %v1185 = vld [vmem:[%s752 + $0x148] sm:$0xff]
        %v1186 = vld [vmem:[%s752 + $0x150] sm:$0xff]
        %v1187 = vld [vmem:[%s752 + $0x158] sm:$0xff]
        %v1188 = vld [vmem:[%s752 + $0x160] sm:$0xff]
        %v1189 = vld [vmem:[%s752 + $0x168] sm:$0xff]
        %v1190 = vld [vmem:[%s752 + $0x170] sm:$0xff]
        %v1191 = vld [vmem:[%s752 + $0x178] sm:$0xff]
        %v1192 = vld [vmem:[%s752 + $0x180] sm:$0xff]
        %v1193 = vld [vmem:[%s752 + $0x188] sm:$0xff]
        %v1194 = vld [vmem:[%s752 + $0x190] sm:$0xff]
        %v1195 = vld [vmem:[%s752 + $0x198] sm:$0xff]
        %v1196 = vld [vmem:[%s752 + $0x1a0] sm:$0xff]
        %v1197 = vld [vmem:[%s752 + $0x1a8] sm:$0xff]
        %v1198 = vld [vmem:[%s752 + $0x1b0] sm:$0xff]
        %v1199 = vld [vmem:[%s752 + $0x1b8] sm:$0xff]
        %v1200 = vld [vmem:[%s752 + $0x1c0] sm:$0xff]
        %v1201 = vld [vmem:[%s752 + $0x1c8] sm:$0xff]
        %v1202 = vld [vmem:[%s752 + $0x1d0] sm:$0xff]
        %v1203 = vld [vmem:[%s752 + $0x1d8] sm:$0xff]
        %v1204 = vld [vmem:[%s752 + $0x1e0] sm:$0xff]
        %v1205 = vld [vmem:[%s752 + $0x1e8] sm:$0xff]
        %v1206 = vld [vmem:[%s752 + $0x1f0] sm:$0xff]
        %v1207 = vld [vmem:[%s752 + $0x1f8] sm:$0xff]
        %v1208 = vld [vmem:[%s752 + $0x200] sm:$0xff]
        %v1209 = vld [vmem:[%s752 + $0x208] sm:$0xff]
        %v1210 = vld [vmem:[%s752 + $0x210] sm:$0xff]
        %v1211 = vld [vmem:[%s752 + $0x218] sm:$0xff]
        %v1212 = vld [vmem:[%s752 + $0x220] sm:$0xff]
        %v1213 = vld [vmem:[%s752 + $0x228] sm:$0xff]
        %v1214 = vld [vmem:[%s752 + $0x230] sm:$0xff]
        %v1215 = vld [vmem:[%s752 + $0x238] sm:$0xff]
        %v1216 = vld [vmem:[%s752 + $0x240] sm:$0xff]
        %v1217 = vld [vmem:[%s752 + $0x248] sm:$0xff]
        %v1218 = vld [vmem:[%s752 + $0x250] sm:$0xff]
        %v1219 = vld [vmem:[%s752 + $0x258] sm:$0xff]
        %v1220 = vld [vmem:[%s752 + $0x260] sm:$0xff]
        %v1221 = vld [vmem:[%s752 + $0x268] sm:$0xff]
        %v1222 = vld [vmem:[%s752 + $0x270] sm:$0xff]
        %v1223 = vld [vmem:[%s752 + $0x278] sm:$0xff]
        %v1224 = vld [vmem:[%s752 + $0x280] sm:$0xff]
        %v1225 = vld [vmem:[%s752 + $0x288] sm:$0xff]
        %v1226 = vld [vmem:[%s752 + $0x290] sm:$0xff]
        %v1227 = vld [vmem:[%s752 + $0x298] sm:$0xff]
        %v1228 = vld [vmem:[%s752 + $0x2a0] sm:$0xff]
        %v1229 = vld [vmem:[%s752 + $0x2a8] sm:$0xff]
        %v1230 = vld [vmem:[%s752 + $0x2b0] sm:$0xff]
        %v1231 = vld [vmem:[%s752 + $0x2b8] sm:$0xff]
        %v1232 = vld [vmem:[%s752 + $0x2c0] sm:$0xff]
        %v1233 = vld [vmem:[%s752 + $0x2c8] sm:$0xff]
        %v1234 = vld [vmem:[%s752 + $0x2d0] sm:$0xff]
        %v1235 = vld [vmem:[%s752 + $0x2d8] sm:$0xff]
        %v1236 = vld [vmem:[%s752 + $0x2e0] sm:$0xff]
        %v1237 = vld [vmem:[%s752 + $0x2e8] sm:$0xff]
        %v1238 = vld [vmem:[%s752 + $0x2f0] sm:$0xff]
        %v1239 = vld [vmem:[%s752 + $0x2f8] sm:$0xff]
        %v1240 = vld [vmem:[%s752 + $0x300] sm:$0xff]
        %v1241 = vld [vmem:[%s752 + $0x308] sm:$0xff]
        %v1242 = vld [vmem:[%s752 + $0x310] sm:$0xff]
        %v1243 = vld [vmem:[%s752 + $0x318] sm:$0xff]
        %v1244 = vld [vmem:[%s752 + $0x320] sm:$0xff]
        %v1245 = vld [vmem:[%s752 + $0x328] sm:$0xff]
        %v1246 = vld [vmem:[%s752 + $0x330] sm:$0xff]
        %v1247 = vld [vmem:[%s752 + $0x338] sm:$0xff]
        %v1248 = vld [vmem:[%s752 + $0x340] sm:$0xff]
        %v1249 = vld [vmem:[%s752 + $0x348] sm:$0xff]
        %v1250 = vld [vmem:[%s752 + $0x350] sm:$0xff]
        %v1251 = vld [vmem:[%s752 + $0x358] sm:$0xff]
        %v1252 = vld [vmem:[%s752 + $0x360] sm:$0xff]
        %v1253 = vld [vmem:[%s752 + $0x368] sm:$0xff]
        %v1254 = vld [vmem:[%s752 + $0x370] sm:$0xff]
        %v1255 = vld [vmem:[%s752 + $0x378] sm:$0xff]
        %v1256 = vld [vmem:[%s752 + $0x380] sm:$0xff]
        %v1257 = vld [vmem:[%s752 + $0x388] sm:$0xff]
        %v1258 = vld [vmem:[%s752 + $0x390] sm:$0xff]
        %v1259 = vld [vmem:[%s752 + $0x398] sm:$0xff]
        %v1260 = vld [vmem:[%s752 + $0x3a0] sm:$0xff]
        %v1261 = vld [vmem:[%s752 + $0x3a8] sm:$0xff]
        %v1262 = vld [vmem:[%s752 + $0x3b0] sm:$0xff]
        %v1263 = vld [vmem:[%s752 + $0x3b8] sm:$0xff]
        %v1264 = vld [vmem:[%s752 + $0x3c0] sm:$0xff]
        %v1265 = vld [vmem:[%s752 + $0x3c8] sm:$0xff]
        %v1266 = vld [vmem:[%s752 + $0x3d0] sm:$0xff]
        %v1267 = vld [vmem:[%s752 + $0x3d8] sm:$0xff]
        %v1268 = vld [vmem:[%s752 + $0x3e0] sm:$0xff]
        %v1269 = vld [vmem:[%s752 + $0x3e8] sm:$0xff]
        %v1270 = vld [vmem:[%s752 + $0x3f0] sm:$0xff]
        %v1271 = vld [vmem:[%s752 + $0x3f8] sm:$0xff]
        %v1272 = vld [vmem:[%s761] sm:$0x3]
        %v1273 = vld [vmem:[%s770] sm:$0x3]
        %v1274 = vld [vmem:[%s779] sm:$0x3]
        %v1275 = vld [vmem:[#allocation2] sm:$0xff]
        %v1276 = vld [vmem:[#allocation2 + $0x8] sm:$0xff]
        %v1277 = vld [vmem:[#allocation2 + $0x10] sm:$0xff]
        %v1278 = vld [vmem:[#allocation2 + $0x18] sm:$0xff]
        %v1279 = vpack.c.bf16 %v1277, %v1275
        %v1280 = vpack.c.bf16 %v1278, %v1276
        %v1313 = vunpack.c.l.b16 %v885
        %v1314 = vunpack.c.h.b16 %v885
        %v1315 = vunpack.c.l.b16 %v886
        %v1316 = vunpack.c.h.b16 %v886
        %v1317 = vunpack.c.l.b16 %v887
        %v1318 = vunpack.c.h.b16 %v887
        %v1319 = vunpack.c.l.b16 %v888
        %v1320 = vunpack.c.h.b16 %v888
        %v1321 = vunpack.c.l.b16 %v889
        %v1322 = vunpack.c.h.b16 %v889
        %v1323 = vunpack.c.l.b16 %v890
        %v1324 = vunpack.c.h.b16 %v890
        %v1325 = vunpack.c.l.b16 %v891
        %v1326 = vunpack.c.h.b16 %v891
        %v1327 = vunpack.c.l.b16 %v892
        %v1328 = vunpack.c.h.b16 %v892
        %v1329 = vunpack.c.l.b16 %v893
        %v1330 = vunpack.c.h.b16 %v893
        %v1331 = vunpack.c.l.b16 %v894
        %v1332 = vunpack.c.h.b16 %v894
        %v1333 = vunpack.c.l.b16 %v895
        %v1334 = vunpack.c.h.b16 %v895
        %v1335 = vunpack.c.l.b16 %v896
        %v1336 = vunpack.c.h.b16 %v896
        %v1337 = vunpack.c.l.b16 %v897
        %v1338 = vunpack.c.h.b16 %v897
        %v1339 = vunpack.c.l.b16 %v898
        %v1340 = vunpack.c.h.b16 %v898
        %v1341 = vunpack.c.l.b16 %v899
        %v1342 = vunpack.c.h.b16 %v899
        %v1343 = vunpack.c.l.b16 %v900
        %v1344 = vunpack.c.h.b16 %v900
        %v1345 = vunpack.c.l.b16 %v901
        %v1346 = vunpack.c.h.b16 %v901
        %v1347 = vunpack.c.l.b16 %v902
        %v1348 = vunpack.c.h.b16 %v902
        %v1349 = vunpack.c.l.b16 %v903
        %v1350 = vunpack.c.h.b16 %v903
        %v1351 = vunpack.c.l.b16 %v904
        %v1352 = vunpack.c.h.b16 %v904
        %v1353 = vunpack.c.l.b16 %v905
        %v1354 = vunpack.c.h.b16 %v905
        %v1355 = vunpack.c.l.b16 %v906
        %v1356 = vunpack.c.h.b16 %v906
        %v1357 = vunpack.c.l.b16 %v907
        %v1358 = vunpack.c.h.b16 %v907
        %v1359 = vunpack.c.l.b16 %v908
        %v1360 = vunpack.c.h.b16 %v908
        %v1361 = vunpack.c.l.b16 %v909
        %v1362 = vunpack.c.h.b16 %v909
        %v1363 = vunpack.c.l.b16 %v910
        %v1364 = vunpack.c.h.b16 %v910
        %v1365 = vunpack.c.l.b16 %v911
        %v1366 = vunpack.c.h.b16 %v911
        %v1367 = vunpack.c.l.b16 %v912
        %v1368 = vunpack.c.h.b16 %v912
        %v1369 = vunpack.c.l.b16 %v913
        %v1370 = vunpack.c.h.b16 %v913
        %v1371 = vunpack.c.l.b16 %v914
        %v1372 = vunpack.c.h.b16 %v914
        %v1373 = vunpack.c.l.b16 %v915
        %v1374 = vunpack.c.h.b16 %v915
        %v1375 = vunpack.c.l.b16 %v916
        %v1376 = vunpack.c.h.b16 %v916
        %v1377 = vpack.c.b16 %v1315, %v1313
        %v1378 = vpack.c.b16 %v1316, %v1314
        %v1379 = vpack.c.b16 %v1319, %v1317
        %v1380 = vpack.c.b16 %v1320, %v1318
        %v1381 = vpack.c.b16 %v1323, %v1321
        %v1382 = vpack.c.b16 %v1324, %v1322
        %v1383 = vpack.c.b16 %v1327, %v1325
        %v1384 = vpack.c.b16 %v1328, %v1326
        %v1385 = vpack.c.b16 %v1331, %v1329
        %v1386 = vpack.c.b16 %v1332, %v1330
        %v1387 = vpack.c.b16 %v1335, %v1333
        %v1388 = vpack.c.b16 %v1336, %v1334
        %v1389 = vpack.c.b16 %v1339, %v1337
        %v1390 = vpack.c.b16 %v1340, %v1338
        %v1391 = vpack.c.b16 %v1343, %v1341
        %v1392 = vpack.c.b16 %v1344, %v1342
        %v1393 = vpack.c.b16 %v1347, %v1345
        %v1394 = vpack.c.b16 %v1348, %v1346
        %v1395 = vpack.c.b16 %v1351, %v1349
        %v1396 = vpack.c.b16 %v1352, %v1350
        %v1397 = vpack.c.b16 %v1355, %v1353
        %v1398 = vpack.c.b16 %v1356, %v1354
        %v1399 = vpack.c.b16 %v1359, %v1357
        %v1400 = vpack.c.b16 %v1360, %v1358
        %v1401 = vpack.c.b16 %v1363, %v1361
        %v1402 = vpack.c.b16 %v1364, %v1362
        %v1403 = vpack.c.b16 %v1367, %v1365
        %v1404 = vpack.c.b16 %v1368, %v1366
        %v1405 = vpack.c.b16 %v1371, %v1369
        %v1406 = vpack.c.b16 %v1372, %v1370
        %v1407 = vpack.c.b16 %v1375, %v1373
        %v1408 = vpack.c.b16 %v1376, %v1374
        %1441 = vmatprep.subr.bf16.mxu0 %v1392
        %1442 = vmatpush1.bf16.msra.mxu0 %v1391
        %1443 = vmatprep.subr.bf16.mxu0 %v1390
        %1444 = vmatpush1.bf16.msra.mxu0 %v1389
        %1445 = vmatprep.subr.bf16.mxu0 %v1388
        %1446 = vmatpush1.bf16.msra.mxu0 %v1387
        %1447 = vmatprep.subr.bf16.mxu0 %v1386
        %1448 = vmatpush1.bf16.msra.mxu0 %v1385
        %1449 = vmatprep.subr.bf16.mxu0 %v1384
        %1450 = vmatpush1.bf16.msra.mxu0 %v1383
        %1451 = vmatprep.subr.bf16.mxu0 %v1382
        %1452 = vmatpush1.bf16.msra.mxu0 %v1381
        %1453 = vmatprep.subr.bf16.mxu0 %v1380
        %1454 = vmatpush1.bf16.msra.mxu0 %v1379
        %1455 = vmatprep.subr.bf16.mxu0 %v1378
        %1456 = vmatpush1.bf16.msra.mxu0 %v1377
        %1457 = vmatprep.subr.bf16.mxu0 %v1408
        %1458 = vmatpush2.bf16.msra.mxu0 %v1407
        %1459 = vmatprep.subr.bf16.mxu0 %v1406
        %1460 = vmatpush2.bf16.msra.mxu0 %v1405
        %1461 = vmatprep.subr.bf16.mxu0 %v1404
        %1462 = vmatpush2.bf16.msra.mxu0 %v1403
        %1463 = vmatprep.subr.bf16.mxu0 %v1402
        %1464 = vmatpush2.bf16.msra.mxu0 %v1401
        %1465 = vmatprep.subr.bf16.mxu0 %v1400
        %1466 = vmatpush2.bf16.msra.mxu0 %v1399
        %1467 = vmatprep.subr.bf16.mxu0 %v1398
        %1468 = vmatpush2.bf16.msra.mxu0 %v1397
        %1469 = vmatprep.subr.bf16.mxu0 %v1396
        %1470 = vmatpush2.bf16.msra.mxu0 %v1395
        %1471 = vmatprep.subr.bf16.mxu0 %v1394
        %1472 = vmatpush2.bf16.msra.mxu0 %v1393
        %1473 = vmatprep.mubr.bf16.mxu0 %v1280
        %1474 = vmatmul.mubr.bf16.gmra.mxu0 %v1279
        %v1475 = vpop.f32.mrf.mxu0
        %v1476 = vadd.f32 0.0, %v1475
        %v1477 = vpop.f32.mrf.mxu0
        %v1478 = vadd.f32 0.0, %v1477
        %v1479 = vpop.f32.mrf.mxu0
        %v1480 = vadd.f32 0.0, %v1479
        %v1481 = vpop.f32.mrf.mxu0
        %v1482 = vadd.f32 0.0, %v1481
        %1483 = vdwg.mxu0
        %v1516 = vunpack.c.l.b16 %v917
        %v1517 = vunpack.c.h.b16 %v917
        %v1518 = vunpack.c.l.b16 %v918
        %v1519 = vunpack.c.h.b16 %v918
        %v1520 = vunpack.c.l.b16 %v919
        %v1521 = vunpack.c.h.b16 %v919
        %v1522 = vunpack.c.l.b16 %v920
        %v1523 = vunpack.c.h.b16 %v920
        %v1524 = vunpack.c.l.b16 %v921
        %v1525 = vunpack.c.h.b16 %v921
        %v1526 = vunpack.c.l.b16 %v922
        %v1527 = vunpack.c.h.b16 %v922
        %v1528 = vunpack.c.l.b16 %v923
        %v1529 = vunpack.c.h.b16 %v923
        %v1530 = vunpack.c.l.b16 %v924
        %v1531 = vunpack.c.h.b16 %v924
        %v1532 = vunpack.c.l.b16 %v925
        %v1533 = vunpack.c.h.b16 %v925
        %v1534 = vunpack.c.l.b16 %v926
        %v1535 = vunpack.c.h.b16 %v926
        %v1536 = vunpack.c.l.b16 %v927
        %v1537 = vunpack.c.h.b16 %v927
        %v1538 = vunpack.c.l.b16 %v928
        %v1539 = vunpack.c.h.b16 %v928
        %v1540 = vunpack.c.l.b16 %v929
        %v1541 = vunpack.c.h.b16 %v929
        %v1542 = vunpack.c.l.b16 %v930
        %v1543 = vunpack.c.h.b16 %v930
        %v1544 = vunpack.c.l.b16 %v931
        %v1545 = vunpack.c.h.b16 %v931
        %v1546 = vunpack.c.l.b16 %v932
        %v1547 = vunpack.c.h.b16 %v932
        %v1548 = vunpack.c.l.b16 %v933
        %v1549 = vunpack.c.h.b16 %v933
        %v1550 = vunpack.c.l.b16 %v934
        %v1551 = vunpack.c.h.b16 %v934
        %v1552 = vunpack.c.l.b16 %v935
        %v1553 = vunpack.c.h.b16 %v935
        %v1554 = vunpack.c.l.b16 %v936
        %v1555 = vunpack.c.h.b16 %v936
        %v1556 = vunpack.c.l.b16 %v937
        %v1557 = vunpack.c.h.b16 %v937
        %v1558 = vunpack.c.l.b16 %v938
        %v1559 = vunpack.c.h.b16 %v938
        %v1560 = vunpack.c.l.b16 %v939
        %v1561 = vunpack.c.h.b16 %v939
        %v1562 = vunpack.c.l.b16 %v940
        %v1563 = vunpack.c.h.b16 %v940
        %v1564 = vunpack.c.l.b16 %v941
        %v1565 = vunpack.c.h.b16 %v941
        %v1566 = vunpack.c.l.b16 %v942
        %v1567 = vunpack.c.h.b16 %v942
        %v1568 = vunpack.c.l.b16 %v943
        %v1569 = vunpack.c.h.b16 %v943
        %v1570 = vunpack.c.l.b16 %v944
        %v1571 = vunpack.c.h.b16 %v944
        %v1572 = vunpack.c.l.b16 %v945
        %v1573 = vunpack.c.h.b16 %v945
        %v1574 = vunpack.c.l.b16 %v946
        %v1575 = vunpack.c.h.b16 %v946
        %v1576 = vunpack.c.l.b16 %v947
        %v1577 = vunpack.c.h.b16 %v947
        %v1578 = vunpack.c.l.b16 %v948
        %v1579 = vunpack.c.h.b16 %v948
        %v1580 = vpack.c.b16 %v1518, %v1516
        %v1581 = vpack.c.b16 %v1519, %v1517
        %v1582 = vpack.c.b16 %v1522, %v1520
        %v1583 = vpack.c.b16 %v1523, %v1521
        %v1584 = vpack.c.b16 %v1526, %v1524
        %v1585 = vpack.c.b16 %v1527, %v1525
        %v1586 = vpack.c.b16 %v1530, %v1528
        %v1587 = vpack.c.b16 %v1531, %v1529
        %v1588 = vpack.c.b16 %v1534, %v1532
        %v1589 = vpack.c.b16 %v1535, %v1533
        %v1590 = vpack.c.b16 %v1538, %v1536
        %v1591 = vpack.c.b16 %v1539, %v1537
        %v1592 = vpack.c.b16 %v1542, %v1540
        %v1593 = vpack.c.b16 %v1543, %v1541
        %v1594 = vpack.c.b16 %v1546, %v1544
        %v1595 = vpack.c.b16 %v1547, %v1545
        %v1596 = vpack.c.b16 %v1550, %v1548
        %v1597 = vpack.c.b16 %v1551, %v1549
        %v1598 = vpack.c.b16 %v1554, %v1552
        %v1599 = vpack.c.b16 %v1555, %v1553
        %v1600 = vpack.c.b16 %v1558, %v1556
        %v1601 = vpack.c.b16 %v1559, %v1557
        %v1602 = vpack.c.b16 %v1562, %v1560
        %v1603 = vpack.c.b16 %v1563, %v1561
        %v1604 = vpack.c.b16 %v1566, %v1564
        %v1605 = vpack.c.b16 %v1567, %v1565
        %v1606 = vpack.c.b16 %v1570, %v1568
        %v1607 = vpack.c.b16 %v1571, %v1569
        %v1608 = vpack.c.b16 %v1574, %v1572
        %v1609 = vpack.c.b16 %v1575, %v1573
        %v1610 = vpack.c.b16 %v1578, %v1576
        %v1611 = vpack.c.b16 %v1579, %v1577
        %1644 = vmatprep.subr.bf16.mxu0 %v1595
        %1645 = vmatpush1.bf16.msra.mxu0 %v1594
        %1646 = vmatprep.subr.bf16.mxu0 %v1593
        %1647 = vmatpush1.bf16.msra.mxu0 %v1592
        %1648 = vmatprep.subr.bf16.mxu0 %v1591
        %1649 = vmatpush1.bf16.msra.mxu0 %v1590
        %1650 = vmatprep.subr.bf16.mxu0 %v1589
        %1651 = vmatpush1.bf16.msra.mxu0 %v1588
        %1652 = vmatprep.subr.bf16.mxu0 %v1587
        %1653 = vmatpush1.bf16.msra.mxu0 %v1586
        %1654 = vmatprep.subr.bf16.mxu0 %v1585
        %1655 = vmatpush1.bf16.msra.mxu0 %v1584
        %1656 = vmatprep.subr.bf16.mxu0 %v1583
        %1657 = vmatpush1.bf16.msra.mxu0 %v1582
        %1658 = vmatprep.subr.bf16.mxu0 %v1581
        %1659 = vmatpush1.bf16.msra.mxu0 %v1580
        %1660 = vmatprep.subr.bf16.mxu0 %v1611
        %1661 = vmatpush2.bf16.msra.mxu0 %v1610
        %1662 = vmatprep.subr.bf16.mxu0 %v1609
        %1663 = vmatpush2.bf16.msra.mxu0 %v1608
        %1664 = vmatprep.subr.bf16.mxu0 %v1607
        %1665 = vmatpush2.bf16.msra.mxu0 %v1606
        %1666 = vmatprep.subr.bf16.mxu0 %v1605
        %1667 = vmatpush2.bf16.msra.mxu0 %v1604
        %1668 = vmatprep.subr.bf16.mxu0 %v1603
        %1669 = vmatpush2.bf16.msra.mxu0 %v1602
        %1670 = vmatprep.subr.bf16.mxu0 %v1601
        %1671 = vmatpush2.bf16.msra.mxu0 %v1600
        %1672 = vmatprep.subr.bf16.mxu0 %v1599
        %1673 = vmatpush2.bf16.msra.mxu0 %v1598
        %1674 = vmatprep.subr.bf16.mxu0 %v1597
        %1675 = vmatpush2.bf16.msra.mxu0 %v1596
        %1676 = vmatprep.mubr.bf16.mxu0 %v1280
        %1677 = vmatmul.mubr.bf16.gmra.mxu0 %v1279
        %v1678 = vpop.f32.mrf.mxu0
        %v1679 = vadd.f32 0.0, %v1678
        %v1680 = vpop.f32.mrf.mxu0
        %v1681 = vadd.f32 0.0, %v1680
        %v1682 = vpop.f32.mrf.mxu0
        %v1683 = vadd.f32 0.0, %v1682
        %v1684 = vpop.f32.mrf.mxu0
        %v1685 = vadd.f32 0.0, %v1684
        %1686 = vdwg.mxu0
        %v1719 = vunpack.c.l.b16 %v949
        %v1720 = vunpack.c.h.b16 %v949
        %v1721 = vunpack.c.l.b16 %v950
        %v1722 = vunpack.c.h.b16 %v950
        %v1723 = vunpack.c.l.b16 %v951
        %v1724 = vunpack.c.h.b16 %v951
        %v1725 = vunpack.c.l.b16 %v952
        %v1726 = vunpack.c.h.b16 %v952
        %v1727 = vunpack.c.l.b16 %v953
        %v1728 = vunpack.c.h.b16 %v953
        %v1729 = vunpack.c.l.b16 %v954
        %v1730 = vunpack.c.h.b16 %v954
        %v1731 = vunpack.c.l.b16 %v955
        %v1732 = vunpack.c.h.b16 %v955
        %v1733 = vunpack.c.l.b16 %v956
        %v1734 = vunpack.c.h.b16 %v956
        %v1735 = vunpack.c.l.b16 %v957
        %v1736 = vunpack.c.h.b16 %v957
        %v1737 = vunpack.c.l.b16 %v958
        %v1738 = vunpack.c.h.b16 %v958
        %v1739 = vunpack.c.l.b16 %v959
        %v1740 = vunpack.c.h.b16 %v959
        %v1741 = vunpack.c.l.b16 %v960
        %v1742 = vunpack.c.h.b16 %v960
        %v1743 = vunpack.c.l.b16 %v961
        %v1744 = vunpack.c.h.b16 %v961
        %v1745 = vunpack.c.l.b16 %v962
        %v1746 = vunpack.c.h.b16 %v962
        %v1747 = vunpack.c.l.b16 %v963
        %v1748 = vunpack.c.h.b16 %v963
        %v1749 = vunpack.c.l.b16 %v964
        %v1750 = vunpack.c.h.b16 %v964
        %v1751 = vunpack.c.l.b16 %v965
        %v1752 = vunpack.c.h.b16 %v965
        %v1753 = vunpack.c.l.b16 %v966
        %v1754 = vunpack.c.h.b16 %v966
        %v1755 = vunpack.c.l.b16 %v967
        %v1756 = vunpack.c.h.b16 %v967
        %v1757 = vunpack.c.l.b16 %v968
        %v1758 = vunpack.c.h.b16 %v968
        %v1759 = vunpack.c.l.b16 %v969
        %v1760 = vunpack.c.h.b16 %v969
        %v1761 = vunpack.c.l.b16 %v970
        %v1762 = vunpack.c.h.b16 %v970
        %v1763 = vunpack.c.l.b16 %v971
        %v1764 = vunpack.c.h.b16 %v971
        %v1765 = vunpack.c.l.b16 %v972
        %v1766 = vunpack.c.h.b16 %v972
        %v1767 = vunpack.c.l.b16 %v973
        %v1768 = vunpack.c.h.b16 %v973
        %v1769 = vunpack.c.l.b16 %v974
        %v1770 = vunpack.c.h.b16 %v974
        %v1771 = vunpack.c.l.b16 %v975
        %v1772 = vunpack.c.h.b16 %v975
        %v1773 = vunpack.c.l.b16 %v976
        %v1774 = vunpack.c.h.b16 %v976
        %v1775 = vunpack.c.l.b16 %v977
        %v1776 = vunpack.c.h.b16 %v977
        %v1777 = vunpack.c.l.b16 %v978
        %v1778 = vunpack.c.h.b16 %v978
        %v1779 = vunpack.c.l.b16 %v979
        %v1780 = vunpack.c.h.b16 %v979
        %v1781 = vunpack.c.l.b16 %v980
        %v1782 = vunpack.c.h.b16 %v980
        %v1783 = vpack.c.b16 %v1721, %v1719
        %v1784 = vpack.c.b16 %v1722, %v1720
        %v1785 = vpack.c.b16 %v1725, %v1723
        %v1786 = vpack.c.b16 %v1726, %v1724
        %v1787 = vpack.c.b16 %v1729, %v1727
        %v1788 = vpack.c.b16 %v1730, %v1728
        %v1789 = vpack.c.b16 %v1733, %v1731
        %v1790 = vpack.c.b16 %v1734, %v1732
        %v1791 = vpack.c.b16 %v1737, %v1735
        %v1792 = vpack.c.b16 %v1738, %v1736
        %v1793 = vpack.c.b16 %v1741, %v1739
        %v1794 = vpack.c.b16 %v1742, %v1740
        %v1795 = vpack.c.b16 %v1745, %v1743
        %v1796 = vpack.c.b16 %v1746, %v1744
        %v1797 = vpack.c.b16 %v1749, %v1747
        %v1798 = vpack.c.b16 %v1750, %v1748
        %v1799 = vpack.c.b16 %v1753, %v1751
        %v1800 = vpack.c.b16 %v1754, %v1752
        %v1801 = vpack.c.b16 %v1757, %v1755
        %v1802 = vpack.c.b16 %v1758, %v1756
        %v1803 = vpack.c.b16 %v1761, %v1759
        %v1804 = vpack.c.b16 %v1762, %v1760
        %v1805 = vpack.c.b16 %v1765, %v1763
        %v1806 = vpack.c.b16 %v1766, %v1764
        %v1807 = vpack.c.b16 %v1769, %v1767
        %v1808 = vpack.c.b16 %v1770, %v1768
        %v1809 = vpack.c.b16 %v1773, %v1771
        %v1810 = vpack.c.b16 %v1774, %v1772
        %v1811 = vpack.c.b16 %v1777, %v1775
        %v1812 = vpack.c.b16 %v1778, %v1776
        %v1813 = vpack.c.b16 %v1781, %v1779
        %v1814 = vpack.c.b16 %v1782, %v1780
        %1847 = vmatprep.subr.bf16.mxu0 %v1798
        %1848 = vmatpush1.bf16.msra.mxu0 %v1797
        %1849 = vmatprep.subr.bf16.mxu0 %v1796
        %1850 = vmatpush1.bf16.msra.mxu0 %v1795
        %1851 = vmatprep.subr.bf16.mxu0 %v1794
        %1852 = vmatpush1.bf16.msra.mxu0 %v1793
        %1853 = vmatprep.subr.bf16.mxu0 %v1792
        %1854 = vmatpush1.bf16.msra.mxu0 %v1791
        %1855 = vmatprep.subr.bf16.mxu0 %v1790
        %1856 = vmatpush1.bf16.msra.mxu0 %v1789
        %1857 = vmatprep.subr.bf16.mxu0 %v1788
        %1858 = vmatpush1.bf16.msra.mxu0 %v1787
        %1859 = vmatprep.subr.bf16.mxu0 %v1786
        %1860 = vmatpush1.bf16.msra.mxu0 %v1785
        %1861 = vmatprep.subr.bf16.mxu0 %v1784
        %1862 = vmatpush1.bf16.msra.mxu0 %v1783
        %1863 = vmatprep.subr.bf16.mxu0 %v1814
        %1864 = vmatpush2.bf16.msra.mxu0 %v1813
        %1865 = vmatprep.subr.bf16.mxu0 %v1812
        %1866 = vmatpush2.bf16.msra.mxu0 %v1811
        %1867 = vmatprep.subr.bf16.mxu0 %v1810
        %1868 = vmatpush2.bf16.msra.mxu0 %v1809
        %1869 = vmatprep.subr.bf16.mxu0 %v1808
        %1870 = vmatpush2.bf16.msra.mxu0 %v1807
        %1871 = vmatprep.subr.bf16.mxu0 %v1806
        %1872 = vmatpush2.bf16.msra.mxu0 %v1805
        %1873 = vmatprep.subr.bf16.mxu0 %v1804
        %1874 = vmatpush2.bf16.msra.mxu0 %v1803
        %1875 = vmatprep.subr.bf16.mxu0 %v1802
        %1876 = vmatpush2.bf16.msra.mxu0 %v1801
        %1877 = vmatprep.subr.bf16.mxu0 %v1800
        %1878 = vmatpush2.bf16.msra.mxu0 %v1799
        %1879 = vmatprep.mubr.bf16.mxu0 %v1280
        %1880 = vmatmul.mubr.bf16.gmra.mxu0 %v1279
        %v1881 = vpop.f32.mrf.mxu0
        %v1882 = vadd.f32 0.0, %v1881
        %v1883 = vpop.f32.mrf.mxu0
        %v1884 = vadd.f32 0.0, %v1883
        %v1885 = vpop.f32.mrf.mxu0
        %v1886 = vadd.f32 0.0, %v1885
        %v1887 = vpop.f32.mrf.mxu0
        %v1888 = vadd.f32 0.0, %v1887
        %1889 = vdwg.mxu0
        %v1890 = vpack.c.bf16 %v1480, %v1476
        %v1891 = vpack.c.bf16 %v1482, %v1478
        %v1893 = vunpack.c.l.b16 %v1890
        %v1894 = vunpack.c.h.b16 %v1890
        %v1895 = vpack.c.b16 %v1893, %v1893
        %v1896 = vpack.c.b16 %v1894, %v1894
        %v1900 = vunpack.c.l.b16 %v1891
        %v1901 = vunpack.c.h.b16 %v1891
        %v1902 = vpack.c.b16 %v1900, %v1900
        %v1903 = vpack.c.b16 %v1901, %v1901
        %v1906 = vpack.c.bf16 %v1683, %v1679
        %v1907 = vpack.c.bf16 %v1685, %v1681
        %v1909 = vunpack.c.l.b16 %v1906
        %v1910 = vunpack.c.h.b16 %v1906
        %v1911 = vpack.c.b16 %v1909, %v1909
        %v1912 = vpack.c.b16 %v1910, %v1910
        %v1916 = vunpack.c.l.b16 %v1907
        %v1917 = vunpack.c.h.b16 %v1907
        %v1918 = vpack.c.b16 %v1916, %v1916
        %v1919 = vpack.c.b16 %v1917, %v1917
        %v1922 = vpack.c.bf16 %v1886, %v1882
        %v1923 = vpack.c.bf16 %v1888, %v1884
        %v1925 = vunpack.c.l.b16 %v1922
        %v1926 = vunpack.c.h.b16 %v1922
        %v1927 = vpack.c.b16 %v1925, %v1925
        %v1928 = vpack.c.b16 %v1926, %v1926
        %v1930 = vunpack.c.l.b16 %v1923
        %v1931 = vunpack.c.h.b16 %v1923
        %v1932 = vpack.c.b16 %v1930, %v1930
        %v1933 = vpack.c.b16 %v1931, %v1931
        %1934 = vmatprep.subr.bf16.mxu0 0
        %1935 = vmatpush1.bf16.xpose.msra.mxu0 0
        %1936 = vmatprep.subr.bf16.mxu0 0
        %1937 = vmatpush1.bf16.xpose.msra.mxu0 0
        %1938 = vmatprep.subr.bf16.mxu0 0
        %1939 = vmatpush1.bf16.xpose.msra.mxu0 0
        %1940 = vmatprep.subr.bf16.mxu0 0
        %1941 = vmatpush1.bf16.xpose.msra.mxu0 0
        %1942 = vmatprep.subr.bf16.mxu0 0
        %1943 = vmatpush1.bf16.xpose.msra.mxu0 0
        %1944 = vmatprep.subr.bf16.mxu0 0
        %1945 = vmatpush1.bf16.xpose.msra.mxu0 0
        %1946 = vmatprep.subr.bf16.mxu0 0
        %1947 = vmatpush1.bf16.xpose.msra.mxu0 0
        %1948 = vmatprep.subr.bf16.mxu0 0
        %1949 = vmatpush1.bf16.xpose.msra.mxu0 %v1911
        %1950 = vmatprep.subr.bf16.mxu0 0
        %1951 = vmatpush2.bf16.xpose.msra.mxu0 0
        %1952 = vmatprep.subr.bf16.mxu0 0
        %1953 = vmatpush2.bf16.xpose.msra.mxu0 0
        %1954 = vmatprep.subr.bf16.mxu0 0
        %1955 = vmatpush2.bf16.xpose.msra.mxu0 0
        %1956 = vmatprep.subr.bf16.mxu0 0
        %1957 = vmatpush2.bf16.xpose.msra.mxu0 0
        %1958 = vmatprep.subr.bf16.mxu0 0
        %1959 = vmatpush2.bf16.xpose.msra.mxu0 0
        %1960 = vmatprep.subr.bf16.mxu0 0
        %1961 = vmatpush2.bf16.xpose.msra.mxu0 0
        %1962 = vmatprep.subr.bf16.mxu0 0
        %1963 = vmatpush2.bf16.xpose.msra.mxu0 0
        %1964 = vmatprep.subr.bf16.mxu0 0
        %1965 = vmatpush2.bf16.xpose.msra.mxu0 0
        %1966 = vmatprep.mubr.bf16.mxu0 0
        %1967 = vmatmul.mubr.bf16.gmra.mxu0 %v1895
        %v1968 = vpop.f32.mrf.mxu0
        %v1969 = vadd.f32 0.0, %v1968
        %v1970 = vpop.f32.mrf.mxu0
        %v1971 = vpop.f32.mrf.mxu0
        %v1972 = vpop.f32.mrf.mxu0
        %1973 = vdwg.mxu0
        %1974 = vmatprep.subr.bf16.mxu0 0
        %1975 = vmatpush1.bf16.xpose.msra.mxu0 0
        %1976 = vmatprep.subr.bf16.mxu0 0
        %1977 = vmatpush1.bf16.xpose.msra.mxu0 0
        %1978 = vmatprep.subr.bf16.mxu0 0
        %1979 = vmatpush1.bf16.xpose.msra.mxu0 0
        %1980 = vmatprep.subr.bf16.mxu0 0
        %1981 = vmatpush1.bf16.xpose.msra.mxu0 0
        %1982 = vmatprep.subr.bf16.mxu0 0
        %1983 = vmatpush1.bf16.xpose.msra.mxu0 0
        %1984 = vmatprep.subr.bf16.mxu0 0
        %1985 = vmatpush1.bf16.xpose.msra.mxu0 0
        %1986 = vmatprep.subr.bf16.mxu0 0
        %1987 = vmatpush1.bf16.xpose.msra.mxu0 0
        %1988 = vmatprep.subr.bf16.mxu0 0
        %1989 = vmatpush1.bf16.xpose.msra.mxu0 %v1912
        %1990 = vmatprep.subr.bf16.mxu0 0
        %1991 = vmatpush2.bf16.xpose.msra.mxu0 0
        %1992 = vmatprep.subr.bf16.mxu0 0
        %1993 = vmatpush2.bf16.xpose.msra.mxu0 0
        %1994 = vmatprep.subr.bf16.mxu0 0
        %1995 = vmatpush2.bf16.xpose.msra.mxu0 0
        %1996 = vmatprep.subr.bf16.mxu0 0
        %1997 = vmatpush2.bf16.xpose.msra.mxu0 0
        %1998 = vmatprep.subr.bf16.mxu0 0
        %1999 = vmatpush2.bf16.xpose.msra.mxu0 0
        %2000 = vmatprep.subr.bf16.mxu0 0
        %2001 = vmatpush2.bf16.xpose.msra.mxu0 0
        %2002 = vmatprep.subr.bf16.mxu0 0
        %2003 = vmatpush2.bf16.xpose.msra.mxu0 0
        %2004 = vmatprep.subr.bf16.mxu0 0
        %2005 = vmatpush2.bf16.xpose.msra.mxu0 0
        %2006 = vmatprep.mubr.bf16.mxu0 0
        %2007 = vmatmul.mubr.bf16.gmra.mxu0 %v1896
        %v2008 = vpop.f32.mrf.mxu0
        %v2009 = vadd.f32 0.0, %v2008
        %v2010 = vpop.f32.mrf.mxu0
        %v2011 = vpop.f32.mrf.mxu0
        %v2012 = vpop.f32.mrf.mxu0
        %2013 = vdwg.mxu0
        %2014 = vmatprep.subr.bf16.mxu0 0
        %2015 = vmatpush1.bf16.xpose.msra.mxu0 0
        %2016 = vmatprep.subr.bf16.mxu0 0
        %2017 = vmatpush1.bf16.xpose.msra.mxu0 0
        %2018 = vmatprep.subr.bf16.mxu0 0
        %2019 = vmatpush1.bf16.xpose.msra.mxu0 0
        %2020 = vmatprep.subr.bf16.mxu0 0
        %2021 = vmatpush1.bf16.xpose.msra.mxu0 0
        %2022 = vmatprep.subr.bf16.mxu0 0
        %2023 = vmatpush1.bf16.xpose.msra.mxu0 0
        %2024 = vmatprep.subr.bf16.mxu0 0
        %2025 = vmatpush1.bf16.xpose.msra.mxu0 0
        %2026 = vmatprep.subr.bf16.mxu0 0
        %2027 = vmatpush1.bf16.xpose.msra.mxu0 0
        %2028 = vmatprep.subr.bf16.mxu0 0
        %2029 = vmatpush1.bf16.xpose.msra.mxu0 %v1918
        %2030 = vmatprep.subr.bf16.mxu0 0
        %2031 = vmatpush2.bf16.xpose.msra.mxu0 0
        %2032 = vmatprep.subr.bf16.mxu0 0
        %2033 = vmatpush2.bf16.xpose.msra.mxu0 0
        %2034 = vmatprep.subr.bf16.mxu0 0
        %2035 = vmatpush2.bf16.xpose.msra.mxu0 0
        %2036 = vmatprep.subr.bf16.mxu0 0
        %2037 = vmatpush2.bf16.xpose.msra.mxu0 0
        %2038 = vmatprep.subr.bf16.mxu0 0
        %2039 = vmatpush2.bf16.xpose.msra.mxu0 0
        %2040 = vmatprep.subr.bf16.mxu0 0
        %2041 = vmatpush2.bf16.xpose.msra.mxu0 0
        %2042 = vmatprep.subr.bf16.mxu0 0
        %2043 = vmatpush2.bf16.xpose.msra.mxu0 0
        %2044 = vmatprep.subr.bf16.mxu0 0
        %2045 = vmatpush2.bf16.xpose.msra.mxu0 0
        %2046 = vmatprep.mubr.bf16.mxu0 0
        %2047 = vmatmul.mubr.bf16.gmra.mxu0 %v1902
        %v2048 = vpop.f32.mrf.mxu0
        %v2049 = vadd.f32 0.0, %v2048
        %v2050 = vpop.f32.mrf.mxu0
        %v2051 = vpop.f32.mrf.mxu0
        %v2052 = vpop.f32.mrf.mxu0
        %2053 = vdwg.mxu0
        %2054 = vmatprep.subr.bf16.mxu0 0
        %2055 = vmatpush1.bf16.xpose.msra.mxu0 0
        %2056 = vmatprep.subr.bf16.mxu0 0
        %2057 = vmatpush1.bf16.xpose.msra.mxu0 0
        %2058 = vmatprep.subr.bf16.mxu0 0
        %2059 = vmatpush1.bf16.xpose.msra.mxu0 0
        %2060 = vmatprep.subr.bf16.mxu0 0
        %2061 = vmatpush1.bf16.xpose.msra.mxu0 0
        %2062 = vmatprep.subr.bf16.mxu0 0
        %2063 = vmatpush1.bf16.xpose.msra.mxu0 0
        %2064 = vmatprep.subr.bf16.mxu0 0
        %2065 = vmatpush1.bf16.xpose.msra.mxu0 0
        %2066 = vmatprep.subr.bf16.mxu0 0
        %2067 = vmatpush1.bf16.xpose.msra.mxu0 0
        %2068 = vmatprep.subr.bf16.mxu0 0
        %2069 = vmatpush1.bf16.xpose.msra.mxu0 %v1919
        %2070 = vmatprep.subr.bf16.mxu0 0
        %2071 = vmatpush2.bf16.xpose.msra.mxu0 0
        %2072 = vmatprep.subr.bf16.mxu0 0
        %2073 = vmatpush2.bf16.xpose.msra.mxu0 0
        %2074 = vmatprep.subr.bf16.mxu0 0
        %2075 = vmatpush2.bf16.xpose.msra.mxu0 0
        %2076 = vmatprep.subr.bf16.mxu0 0
        %2077 = vmatpush2.bf16.xpose.msra.mxu0 0
        %2078 = vmatprep.subr.bf16.mxu0 0
        %2079 = vmatpush2.bf16.xpose.msra.mxu0 0
        %2080 = vmatprep.subr.bf16.mxu0 0
        %2081 = vmatpush2.bf16.xpose.msra.mxu0 0
        %2082 = vmatprep.subr.bf16.mxu0 0
        %2083 = vmatpush2.bf16.xpose.msra.mxu0 0
        %2084 = vmatprep.subr.bf16.mxu0 0
        %2085 = vmatpush2.bf16.xpose.msra.mxu0 0
        %2086 = vmatprep.mubr.bf16.mxu0 0
        %2087 = vmatmul.mubr.bf16.gmra.mxu0 %v1903
        %v2088 = vpop.f32.mrf.mxu0
        %v2089 = vadd.f32 0.0, %v2088
        %v2090 = vpop.f32.mrf.mxu0
        %v2091 = vpop.f32.mrf.mxu0
        %v2092 = vpop.f32.mrf.mxu0
        %2093 = vdwg.mxu0
        %vm2094 = vcmask 64512
        %v2095 = vsel %vm2094, %v1969, -inf
        %2096 = vmax.xlane.f32.xlu0 %v2095
        %v2097 = vpop.xlane.xlu0 %2096
        %v2098 = vsel %vm2094, %v2009, -inf
        %2099 = vmax.xlane.f32.xlu0 %v2098
        %v2100 = vpop.xlane.xlu0 %2099
        %v2101 = vsel %vm2094, %v2049, -inf
        %2102 = vmax.xlane.f32.xlu0 %v2101
        %v2103 = vpop.xlane.xlu0 %2102
        %v2104 = vsel %vm2094, %v2089, -inf
        %2105 = vmax.xlane.f32.xlu0 %v2104
        %v2106 = vpop.xlane.xlu0 %2105
        %v2107 = vsub.f32 %v1969, %v2097
        %v2108 = vsub.f32 %v2009, %v2100
        %v2109 = vsub.f32 %v2049, %v2103
        %v2110 = vsub.f32 %v2089, %v2106
        %v2111 = vmul.f32 %v2107, 1.442695
        %v2112 = vpow.pop %v2111
        %v2113 = vmul.f32 %v2108, 1.442695
        %v2114 = vpow.pop %v2113
        %v2115 = vmul.f32 %v2109, 1.442695
        %v2116 = vpow.pop %v2115
        %v2117 = vmul.f32 %v2110, 1.442695
        %v2118 = vpow.pop %v2117
        %v2119 = vsel %vm2094, %v2112, 0.0
        %2120 = vadd.xlane.f32.xlu0 %v2119
        %v2121 = vpop.xlane.xlu0 %2120
        %v2122 = vsel %vm2094, %v2114, 0.0
        %2123 = vadd.xlane.f32.xlu0 %v2122
        %v2124 = vpop.xlane.xlu0 %2123
        %v2125 = vsel %vm2094, %v2116, 0.0
        %2126 = vadd.xlane.f32.xlu0 %v2125
        %v2127 = vpop.xlane.xlu0 %2126
        %v2128 = vsel %vm2094, %v2118, 0.0
        %2129 = vadd.xlane.f32.xlu0 %v2128
        %v2130 = vpop.xlane.xlu0 %2129
        %v2131 = vrcp.pop %v2121
        %v2132 = vmul.f32 %v2112, %v2131
        %v2133 = vrcp.pop %v2124
        %v2134 = vmul.f32 %v2114, %v2133
        %v2135 = vrcp.pop %v2127
        %v2136 = vmul.f32 %v2116, %v2135
        %v2137 = vrcp.pop %v2130
        %v2138 = vmul.f32 %v2118, %v2137
        %v2139 = vpack.c.bf16 %v2132, %v2132
        %v2140 = vpack.c.bf16 %v2134, %v2134
        %v2141 = vpack.c.bf16 %v2136, %v2136
        %v2142 = vpack.c.bf16 %v2138, %v2138
        %v2144 = vsel %vm2094, %v2139, 0
        %vm2146 = vcmask 1043456
        %v2148 = vsel %vm2146, %v1927, 0
        %2150 = vmatprep.subr.bf16.mxu0 0
        %2151 = vmatpush1.bf16.msra.mxu0 0
        %2152 = vmatprep.subr.bf16.mxu0 0
        %2153 = vmatpush1.bf16.msra.mxu0 0
        %2154 = vmatprep.subr.bf16.mxu0 0
        %2155 = vmatpush1.bf16.msra.mxu0 0
        %2156 = vmatprep.subr.bf16.mxu0 0
        %2157 = vmatpush1.bf16.msra.mxu0 0
        %2158 = vmatprep.subr.bf16.mxu0 0
        %2159 = vmatpush1.bf16.msra.mxu0 0
        %2160 = vmatprep.subr.bf16.mxu0 0
        %2161 = vmatpush1.bf16.msra.mxu0 0
        %2162 = vmatprep.subr.bf16.mxu0 0
        %2163 = vmatpush1.bf16.msra.mxu0 0
        %2164 = vmatprep.subr.bf16.mxu0 0
        %2165 = vmatpush1.bf16.msra.mxu0 %v2148
        %2166 = vmatprep.subr.bf16.mxu0 0
        %2167 = vmatpush2.bf16.msra.mxu0 0
        %2168 = vmatprep.subr.bf16.mxu0 0
        %2169 = vmatpush2.bf16.msra.mxu0 0
        %2170 = vmatprep.subr.bf16.mxu0 0
        %2171 = vmatpush2.bf16.msra.mxu0 0
        %2172 = vmatprep.subr.bf16.mxu0 0
        %2173 = vmatpush2.bf16.msra.mxu0 0
        %2174 = vmatprep.subr.bf16.mxu0 0
        %2175 = vmatpush2.bf16.msra.mxu0 0
        %2176 = vmatprep.subr.bf16.mxu0 0
        %2177 = vmatpush2.bf16.msra.mxu0 0
        %2178 = vmatprep.subr.bf16.mxu0 0
        %2179 = vmatpush2.bf16.msra.mxu0 0
        %2180 = vmatprep.subr.bf16.mxu0 0
        %2181 = vmatpush2.bf16.msra.mxu0 0
        %2182 = vmatprep.mubr.bf16.mxu0 0
        %2183 = vmatmul.mubr.bf16.gmra.mxu0 %v2144
        %v2184 = vpop.f32.mrf.mxu0
        %v2185 = vadd.f32 0.0, %v2184
        %v2186 = vpop.f32.mrf.mxu0
        %v2187 = vpop.f32.mrf.mxu0
        %v2188 = vpop.f32.mrf.mxu0
        %2189 = vdwg.mxu0
        %v2191 = vsel %vm2094, %v2140, 0
        %v2194 = vsel %vm2146, %v1928, 0
        %2196 = vmatprep.subr.bf16.mxu0 0
        %2197 = vmatpush1.bf16.msra.mxu0 0
        %2198 = vmatprep.subr.bf16.mxu0 0
        %2199 = vmatpush1.bf16.msra.mxu0 0
        %2200 = vmatprep.subr.bf16.mxu0 0
        %2201 = vmatpush1.bf16.msra.mxu0 0
        %2202 = vmatprep.subr.bf16.mxu0 0
        %2203 = vmatpush1.bf16.msra.mxu0 0
        %2204 = vmatprep.subr.bf16.mxu0 0
        %2205 = vmatpush1.bf16.msra.mxu0 0
        %2206 = vmatprep.subr.bf16.mxu0 0
        %2207 = vmatpush1.bf16.msra.mxu0 0
        %2208 = vmatprep.subr.bf16.mxu0 0
        %2209 = vmatpush1.bf16.msra.mxu0 0
        %2210 = vmatprep.subr.bf16.mxu0 0
        %2211 = vmatpush1.bf16.msra.mxu0 %v2194
        %2212 = vmatprep.subr.bf16.mxu0 0
        %2213 = vmatpush2.bf16.msra.mxu0 0
        %2214 = vmatprep.subr.bf16.mxu0 0
        %2215 = vmatpush2.bf16.msra.mxu0 0
        %2216 = vmatprep.subr.bf16.mxu0 0
        %2217 = vmatpush2.bf16.msra.mxu0 0
        %2218 = vmatprep.subr.bf16.mxu0 0
        %2219 = vmatpush2.bf16.msra.mxu0 0
        %2220 = vmatprep.subr.bf16.mxu0 0
        %2221 = vmatpush2.bf16.msra.mxu0 0
        %2222 = vmatprep.subr.bf16.mxu0 0
        %2223 = vmatpush2.bf16.msra.mxu0 0
        %2224 = vmatprep.subr.bf16.mxu0 0
        %2225 = vmatpush2.bf16.msra.mxu0 0
        %2226 = vmatprep.subr.bf16.mxu0 0
        %2227 = vmatpush2.bf16.msra.mxu0 0
        %2228 = vmatprep.mubr.bf16.mxu0 0
        %2229 = vmatmul.mubr.bf16.gmra.mxu0 %v2191
        %v2230 = vpop.f32.mrf.mxu0
        %v2231 = vadd.f32 0.0, %v2230
        %v2232 = vpop.f32.mrf.mxu0
        %v2233 = vpop.f32.mrf.mxu0
        %v2234 = vpop.f32.mrf.mxu0
        %2235 = vdwg.mxu0
        %v2237 = vsel %vm2094, %v2141, 0
        %v2240 = vsel %vm2146, %v1932, 0
        %2242 = vmatprep.subr.bf16.mxu0 0
        %2243 = vmatpush1.bf16.msra.mxu0 0
        %2244 = vmatprep.subr.bf16.mxu0 0
        %2245 = vmatpush1.bf16.msra.mxu0 0
        %2246 = vmatprep.subr.bf16.mxu0 0
        %2247 = vmatpush1.bf16.msra.mxu0 0
        %2248 = vmatprep.subr.bf16.mxu0 0
        %2249 = vmatpush1.bf16.msra.mxu0 0
        %2250 = vmatprep.subr.bf16.mxu0 0
        %2251 = vmatpush1.bf16.msra.mxu0 0
        %2252 = vmatprep.subr.bf16.mxu0 0
        %2253 = vmatpush1.bf16.msra.mxu0 0
        %2254 = vmatprep.subr.bf16.mxu0 0
        %2255 = vmatpush1.bf16.msra.mxu0 0
        %2256 = vmatprep.subr.bf16.mxu0 0
        %2257 = vmatpush1.bf16.msra.mxu0 %v2240
        %2258 = vmatprep.subr.bf16.mxu0 0
        %2259 = vmatpush2.bf16.msra.mxu0 0
        %2260 = vmatprep.subr.bf16.mxu0 0
        %2261 = vmatpush2.bf16.msra.mxu0 0
        %2262 = vmatprep.subr.bf16.mxu0 0
        %2263 = vmatpush2.bf16.msra.mxu0 0
        %2264 = vmatprep.subr.bf16.mxu0 0
        %2265 = vmatpush2.bf16.msra.mxu0 0
        %2266 = vmatprep.subr.bf16.mxu0 0
        %2267 = vmatpush2.bf16.msra.mxu0 0
        %2268 = vmatprep.subr.bf16.mxu0 0
        %2269 = vmatpush2.bf16.msra.mxu0 0
        %2270 = vmatprep.subr.bf16.mxu0 0
        %2271 = vmatpush2.bf16.msra.mxu0 0
        %2272 = vmatprep.subr.bf16.mxu0 0
        %2273 = vmatpush2.bf16.msra.mxu0 0
        %2274 = vmatprep.mubr.bf16.mxu0 0
        %2275 = vmatmul.mubr.bf16.gmra.mxu0 %v2237
        %v2276 = vpop.f32.mrf.mxu0
        %v2277 = vadd.f32 0.0, %v2276
        %v2278 = vpop.f32.mrf.mxu0
        %v2279 = vpop.f32.mrf.mxu0
        %v2280 = vpop.f32.mrf.mxu0
        %2281 = vdwg.mxu0
        %v2283 = vsel %vm2094, %v2142, 0
        %v2286 = vsel %vm2146, %v1933, 0
        %2288 = vmatprep.subr.bf16.mxu0 0
        %2289 = vmatpush1.bf16.msra.mxu0 0
        %2290 = vmatprep.subr.bf16.mxu0 0
        %2291 = vmatpush1.bf16.msra.mxu0 0
        %2292 = vmatprep.subr.bf16.mxu0 0
        %2293 = vmatpush1.bf16.msra.mxu0 0
        %2294 = vmatprep.subr.bf16.mxu0 0
        %2295 = vmatpush1.bf16.msra.mxu0 0
        %2296 = vmatprep.subr.bf16.mxu0 0
        %2297 = vmatpush1.bf16.msra.mxu0 0
        %2298 = vmatprep.subr.bf16.mxu0 0
        %2299 = vmatpush1.bf16.msra.mxu0 0
        %2300 = vmatprep.subr.bf16.mxu0 0
        %2301 = vmatpush1.bf16.msra.mxu0 0
        %2302 = vmatprep.subr.bf16.mxu0 0
        %2303 = vmatpush1.bf16.msra.mxu0 %v2286
        %2304 = vmatprep.subr.bf16.mxu0 0
        %2305 = vmatpush2.bf16.msra.mxu0 0
        %2306 = vmatprep.subr.bf16.mxu0 0
        %2307 = vmatpush2.bf16.msra.mxu0 0
        %2308 = vmatprep.subr.bf16.mxu0 0
        %2309 = vmatpush2.bf16.msra.mxu0 0
        %2310 = vmatprep.subr.bf16.mxu0 0
        %2311 = vmatpush2.bf16.msra.mxu0 0
        %2312 = vmatprep.subr.bf16.mxu0 0
        %2313 = vmatpush2.bf16.msra.mxu0 0
        %2314 = vmatprep.subr.bf16.mxu0 0
        %2315 = vmatpush2.bf16.msra.mxu0 0
        %2316 = vmatprep.subr.bf16.mxu0 0
        %2317 = vmatpush2.bf16.msra.mxu0 0
        %2318 = vmatprep.subr.bf16.mxu0 0
        %2319 = vmatpush2.bf16.msra.mxu0 0
        %2320 = vmatprep.mubr.bf16.mxu0 0
        %2321 = vmatmul.mubr.bf16.gmra.mxu0 %v2283
        %v2322 = vpop.f32.mrf.mxu0
        %v2323 = vadd.f32 0.0, %v2322
        %v2324 = vpop.f32.mrf.mxu0
        %v2325 = vpop.f32.mrf.mxu0
        %v2326 = vpop.f32.mrf.mxu0
        %2327 = vdwg.mxu0
        %v2328 = vpack.c.bf16 %v2231, %v2185
        %v2329 = vpack.c.bf16 %v2323, %v2277
        %v2346 = vunpack.c.l.b16 %v981
        %v2347 = vunpack.c.h.b16 %v981
        %v2348 = vunpack.c.l.b16 %v982
        %v2349 = vunpack.c.h.b16 %v982
        %v2350 = vunpack.c.l.b16 %v983
        %v2351 = vunpack.c.h.b16 %v983
        %v2352 = vunpack.c.l.b16 %v984
        %v2353 = vunpack.c.h.b16 %v984
        %v2354 = vunpack.c.l.b16 %v985
        %v2355 = vunpack.c.h.b16 %v985
        %v2356 = vunpack.c.l.b16 %v986
        %v2357 = vunpack.c.h.b16 %v986
        %v2358 = vunpack.c.l.b16 %v987
        %v2359 = vunpack.c.h.b16 %v987
        %v2360 = vunpack.c.l.b16 %v988
        %v2361 = vunpack.c.h.b16 %v988
        %v2362 = vunpack.c.l.b16 %v989
        %v2363 = vunpack.c.h.b16 %v989
        %v2364 = vunpack.c.l.b16 %v990
        %v2365 = vunpack.c.h.b16 %v990
        %v2366 = vunpack.c.l.b16 %v991
        %v2367 = vunpack.c.h.b16 %v991
        %v2368 = vunpack.c.l.b16 %v992
        %v2369 = vunpack.c.h.b16 %v992
        %v2370 = vunpack.c.l.b16 %v993
        %v2371 = vunpack.c.h.b16 %v993
        %v2372 = vunpack.c.l.b16 %v994
        %v2373 = vunpack.c.h.b16 %v994
        %v2374 = vunpack.c.l.b16 %v995
        %v2375 = vunpack.c.h.b16 %v995
        %v2376 = vunpack.c.l.b16 %v996
        %v2377 = vunpack.c.h.b16 %v996
        %v2378 = vpack.c.b16 %v2348, %v2346
        %v2379 = vpack.c.b16 %v2349, %v2347
        %v2380 = vpack.c.b16 %v2352, %v2350
        %v2381 = vpack.c.b16 %v2353, %v2351
        %v2382 = vpack.c.b16 %v2356, %v2354
        %v2383 = vpack.c.b16 %v2357, %v2355
        %v2384 = vpack.c.b16 %v2360, %v2358
        %v2385 = vpack.c.b16 %v2361, %v2359
        %v2386 = vpack.c.b16 %v2364, %v2362
        %v2387 = vpack.c.b16 %v2365, %v2363
        %v2388 = vpack.c.b16 %v2368, %v2366
        %v2389 = vpack.c.b16 %v2369, %v2367
        %v2390 = vpack.c.b16 %v2372, %v2370
        %v2391 = vpack.c.b16 %v2373, %v2371
        %v2392 = vpack.c.b16 %v2376, %v2374
        %v2393 = vpack.c.b16 %v2377, %v2375
        %2410 = vmatprep.subr.bf16.mxu0 %v2393
        %2411 = vmatpush1.bf16.msra.mxu0 %v2392
        %2412 = vmatprep.subr.bf16.mxu0 %v2391
        %2413 = vmatpush1.bf16.msra.mxu0 %v2390
        %2414 = vmatprep.subr.bf16.mxu0 %v2389
        %2415 = vmatpush1.bf16.msra.mxu0 %v2388
        %2416 = vmatprep.subr.bf16.mxu0 %v2387
        %2417 = vmatpush1.bf16.msra.mxu0 %v2386
        %2418 = vmatprep.subr.bf16.mxu0 %v2385
        %2419 = vmatpush1.bf16.msra.mxu0 %v2384
        %2420 = vmatprep.subr.bf16.mxu0 %v2383
        %2421 = vmatpush1.bf16.msra.mxu0 %v2382
        %2422 = vmatprep.subr.bf16.mxu0 %v2381
        %2423 = vmatpush1.bf16.msra.mxu0 %v2380
        %2424 = vmatprep.subr.bf16.mxu0 %v2379
        %2425 = vmatpush1.bf16.msra.mxu0 %v2378
        %2426 = vmatprep.subr.bf16.mxu0 0
        %2427 = vmatpush2.bf16.msra.mxu0 0
        %2428 = vmatprep.subr.bf16.mxu0 0
        %2429 = vmatpush2.bf16.msra.mxu0 0
        %2430 = vmatprep.subr.bf16.mxu0 0
        %2431 = vmatpush2.bf16.msra.mxu0 0
        %2432 = vmatprep.subr.bf16.mxu0 0
        %2433 = vmatpush2.bf16.msra.mxu0 0
        %2434 = vmatprep.subr.bf16.mxu0 0
        %2435 = vmatpush2.bf16.msra.mxu0 0
        %2436 = vmatprep.subr.bf16.mxu0 0
        %2437 = vmatpush2.bf16.msra.mxu0 0
        %2438 = vmatprep.subr.bf16.mxu0 0
        %2439 = vmatpush2.bf16.msra.mxu0 0
        %2440 = vmatprep.subr.bf16.mxu0 0
        %2441 = vmatpush2.bf16.msra.mxu0 0
        %2442 = vmatprep.mubr.bf16.mxu0 0
        %2443 = vmatmul.mubr.bf16.gmra.mxu0 %v2328
        %v2444 = vpop.f32.mrf.mxu0
        %v2445 = vadd.f32 0.0, %v2444
        %v2446 = vpop.f32.mrf.mxu0
        %v2447 = vadd.f32 0.0, %v2446
        %v2448 = vpop.f32.mrf.mxu0
        %v2449 = vadd.f32 0.0, %v2448
        %v2450 = vpop.f32.mrf.mxu0
        %v2451 = vadd.f32 0.0, %v2450
        %2452 = vdwg.mxu0
        %v2469 = vunpack.c.l.b16 %v997
        %v2470 = vunpack.c.h.b16 %v997
        %v2471 = vunpack.c.l.b16 %v998
        %v2472 = vunpack.c.h.b16 %v998
        %v2473 = vunpack.c.l.b16 %v999
        %v2474 = vunpack.c.h.b16 %v999
        %v2475 = vunpack.c.l.b16 %v1000
        %v2476 = vunpack.c.h.b16 %v1000
        %v2477 = vunpack.c.l.b16 %v1001
        %v2478 = vunpack.c.h.b16 %v1001
        %v2479 = vunpack.c.l.b16 %v1002
        %v2480 = vunpack.c.h.b16 %v1002
        %v2481 = vunpack.c.l.b16 %v1003
        %v2482 = vunpack.c.h.b16 %v1003
        %v2483 = vunpack.c.l.b16 %v1004
        %v2484 = vunpack.c.h.b16 %v1004
        %v2485 = vunpack.c.l.b16 %v1005
        %v2486 = vunpack.c.h.b16 %v1005
        %v2487 = vunpack.c.l.b16 %v1006
        %v2488 = vunpack.c.h.b16 %v1006
        %v2489 = vunpack.c.l.b16 %v1007
        %v2490 = vunpack.c.h.b16 %v1007
        %v2491 = vunpack.c.l.b16 %v1008
        %v2492 = vunpack.c.h.b16 %v1008
        %v2493 = vunpack.c.l.b16 %v1009
        %v2494 = vunpack.c.h.b16 %v1009
        %v2495 = vunpack.c.l.b16 %v1010
        %v2496 = vunpack.c.h.b16 %v1010
        %v2497 = vunpack.c.l.b16 %v1011
        %v2498 = vunpack.c.h.b16 %v1011
        %v2499 = vunpack.c.l.b16 %v1012
        %v2500 = vunpack.c.h.b16 %v1012
        %v2501 = vpack.c.b16 %v2471, %v2469
        %v2502 = vpack.c.b16 %v2472, %v2470
        %v2503 = vpack.c.b16 %v2475, %v2473
        %v2504 = vpack.c.b16 %v2476, %v2474
        %v2505 = vpack.c.b16 %v2479, %v2477
        %v2506 = vpack.c.b16 %v2480, %v2478
        %v2507 = vpack.c.b16 %v2483, %v2481
        %v2508 = vpack.c.b16 %v2484, %v2482
        %v2509 = vpack.c.b16 %v2487, %v2485
        %v2510 = vpack.c.b16 %v2488, %v2486
        %v2511 = vpack.c.b16 %v2491, %v2489
        %v2512 = vpack.c.b16 %v2492, %v2490
        %v2513 = vpack.c.b16 %v2495, %v2493
        %v2514 = vpack.c.b16 %v2496, %v2494
        %v2515 = vpack.c.b16 %v2499, %v2497
        %v2516 = vpack.c.b16 %v2500, %v2498
        %2533 = vmatprep.subr.bf16.mxu0 %v2516
        %2534 = vmatpush1.bf16.msra.mxu0 %v2515
        %2535 = vmatprep.subr.bf16.mxu0 %v2514
        %2536 = vmatpush1.bf16.msra.mxu0 %v2513
        %2537 = vmatprep.subr.bf16.mxu0 %v2512
        %2538 = vmatpush1.bf16.msra.mxu0 %v2511
        %2539 = vmatprep.subr.bf16.mxu0 %v2510
        %2540 = vmatpush1.bf16.msra.mxu0 %v2509
        %2541 = vmatprep.subr.bf16.mxu0 %v2508
        %2542 = vmatpush1.bf16.msra.mxu0 %v2507
        %2543 = vmatprep.subr.bf16.mxu0 %v2506
        %2544 = vmatpush1.bf16.msra.mxu0 %v2505
        %2545 = vmatprep.subr.bf16.mxu0 %v2504
        %2546 = vmatpush1.bf16.msra.mxu0 %v2503
        %2547 = vmatprep.subr.bf16.mxu0 %v2502
        %2548 = vmatpush1.bf16.msra.mxu0 %v2501
        %2549 = vmatprep.subr.bf16.mxu0 0
        %2550 = vmatpush2.bf16.msra.mxu0 0
        %2551 = vmatprep.subr.bf16.mxu0 0
        %2552 = vmatpush2.bf16.msra.mxu0 0
        %2553 = vmatprep.subr.bf16.mxu0 0
        %2554 = vmatpush2.bf16.msra.mxu0 0
        %2555 = vmatprep.subr.bf16.mxu0 0
        %2556 = vmatpush2.bf16.msra.mxu0 0
        %2557 = vmatprep.subr.bf16.mxu0 0
        %2558 = vmatpush2.bf16.msra.mxu0 0
        %2559 = vmatprep.subr.bf16.mxu0 0
        %2560 = vmatpush2.bf16.msra.mxu0 0
        %2561 = vmatprep.subr.bf16.mxu0 0
        %2562 = vmatpush2.bf16.msra.mxu0 0
        %2563 = vmatprep.subr.bf16.mxu0 0
        %2564 = vmatpush2.bf16.msra.mxu0 0
        %2565 = vmatprep.mubr.bf16.mxu0 0
        %2566 = vmatmul.mubr.bf16.gmra.mxu0 %v2329
        %v2567 = vpop.f32.mrf.mxu0
        %v2568 = vadd.f32 0.0, %v2567
        %v2569 = vpop.f32.mrf.mxu0
        %v2570 = vadd.f32 0.0, %v2569
        %v2571 = vpop.f32.mrf.mxu0
        %v2572 = vadd.f32 0.0, %v2571
        %v2573 = vpop.f32.mrf.mxu0
        %v2574 = vadd.f32 0.0, %v2573
        %2575 = vdwg.mxu0
        %v2576 = vadd.f32 %v2445, %v2568
        %v2577 = vadd.f32 %v2447, %v2570
        %v2578 = vadd.f32 %v2449, %v2572
        %v2579 = vadd.f32 %v2451, %v2574
        %v2580 = vadd.f32 %v1275, %v2576
        %v2581 = vadd.f32 %v1276, %v2577
        %v2582 = vadd.f32 %v1277, %v2578
        %v2583 = vadd.f32 %v1278, %v2579
        %v2584 = vadd.f32 %v2580, %v2581
        %2585 = vadd.xlane.f32.xlu0 %v2584
        %v2586 = vpop.xlane.xlu0 %2585
        %v2587 = vadd.f32 %v2582, %v2583
        %2588 = vadd.xlane.f32.xlu0 %v2587
        %v2589 = vpop.xlane.xlu0 %2588
        %v2590 = vrcp.pop 256.0
        %v2591 = vmul.f32 %v2586, %v2590
        %v2592 = vmul.f32 %v2589, %v2590
        %v2593 = vsub.f32 %v2580, %v2591
        %v2594 = vsub.f32 %v2581, %v2591
        %v2595 = vsub.f32 %v2582, %v2592
        %v2596 = vsub.f32 %v2583, %v2592
        %v2597 = vmul.f32 %v2593, %v2593
        %v2598 = vmul.f32 %v2594, %v2594
        %v2599 = vmul.f32 %v2595, %v2595
        %v2600 = vmul.f32 %v2596, %v2596
        %v2601 = vadd.f32 %v2597, %v2598
        %2602 = vadd.xlane.f32.xlu0 %v2601
        %v2603 = vpop.xlane.xlu0 %2602
        %v2604 = vadd.f32 %v2599, %v2600
        %2605 = vadd.xlane.f32.xlu0 %v2604
        %v2606 = vpop.xlane.xlu0 %2605
        %v2607 = vmul.f32 %v2603, %v2590
        %v2608 = vmul.f32 %v2606, %v2590
        %v2609 = vadd.f32 %v2607, 1e-06
        %v2610 = vadd.f32 %v2608, 1e-06
        %v2611 = vrsqrt.pop %v2609
        %v2612 = vrsqrt.pop %v2610
        %v2613 = vmul.f32 %v2593, %v2611
        %v2614 = vmul.f32 %v2594, %v2611
        %v2615 = vmul.f32 %v2595, %v2612
        %v2616 = vmul.f32 %v2596, %v2612
        %v2618 = vlaneseq
        %v2619 = vshrl.u32 %v2618, 7
        %v2620 = vsub.s32 0, %v2619
        %v2621 = vrot.slane %v1013, %v2620
        %v2622 = vlaneseq
        %v2623 = vshrl.u32 %v2622, 7
        %v2624 = vsub.s32 1, %v2623
        %v2625 = vrot.slane %v1013, %v2624
        %v2628 = vmul.f32 %v2613, %v2621
        %v2629 = vmul.f32 %v2614, %v2625
        %v2630 = vmul.f32 %v2615, %v2621
        %v2631 = vmul.f32 %v2616, %v2625
        %v2633 = vlaneseq
        %v2634 = vshrl.u32 %v2633, 7
        %v2635 = vsub.s32 0, %v2634
        %v2636 = vrot.slane %v1014, %v2635
        %v2637 = vlaneseq
        %v2638 = vshrl.u32 %v2637, 7
        %v2639 = vsub.s32 1, %v2638
        %v2640 = vrot.slane %v1014, %v2639
        %v2643 = vadd.f32 %v2628, %v2636
        %v2644 = vadd.f32 %v2629, %v2640
        %v2645 = vadd.f32 %v2630, %v2636
        %v2646 = vadd.f32 %v2631, %v2640
        %v2647 = vpack.c.bf16 %v2645, %v2643
        %v2648 = vpack.c.bf16 %v2646, %v2644
        %v2650 = vlaneseq
        %v2651 = vshrl.u32 %v2650, 7
        %v2652 = vsub.s32 0, %v2651
        %v2653 = vrot.slane %v1143, %v2652
        %v2654 = vlaneseq
        %v2655 = vshrl.u32 %v2654, 7
        %v2656 = vsub.s32 1, %v2655
        %v2657 = vrot.slane %v1143, %v2656
        %v2658 = vlaneseq
        %v2659 = vshrl.u32 %v2658, 7
        %v2660 = vsub.s32 2, %v2659
        %v2661 = vrot.slane %v1143, %v2660
        %v2662 = vlaneseq
        %v2663 = vshrl.u32 %v2662, 7
        %v2664 = vsub.s32 3, %v2663
        %v2665 = vrot.slane %v1143, %v2664
        %v2666 = vlaneseq
        %v2667 = vshrl.u32 %v2666, 7
        %v2668 = vsub.s32 4, %v2667
        %v2669 = vrot.slane %v1143, %v2668
        %v2670 = vlaneseq
        %v2671 = vshrl.u32 %v2670, 7
        %v2672 = vsub.s32 5, %v2671
        %v2673 = vrot.slane %v1143, %v2672
        %v2674 = vlaneseq
        %v2675 = vshrl.u32 %v2674, 7
        %v2676 = vsub.s32 6, %v2675
        %v2677 = vrot.slane %v1143, %v2676
        %v2678 = vlaneseq
        %v2679 = vshrl.u32 %v2678, 7
        %v2680 = vsub.s32 7, %v2679
        %v2681 = vrot.slane %v1143, %v2680
        %v2818 = vunpack.c.l.b16 %v1015
        %v2819 = vunpack.c.h.b16 %v1015
        %v2820 = vunpack.c.l.b16 %v1016
        %v2821 = vunpack.c.h.b16 %v1016
        %v2822 = vunpack.c.l.b16 %v1017
        %v2823 = vunpack.c.h.b16 %v1017
        %v2824 = vunpack.c.l.b16 %v1018
        %v2825 = vunpack.c.h.b16 %v1018
        %v2826 = vunpack.c.l.b16 %v1019
        %v2827 = vunpack.c.h.b16 %v1019
        %v2828 = vunpack.c.l.b16 %v1020
        %v2829 = vunpack.c.h.b16 %v1020
        %v2830 = vunpack.c.l.b16 %v1021
        %v2831 = vunpack.c.h.b16 %v1021
        %v2832 = vunpack.c.l.b16 %v1022
        %v2833 = vunpack.c.h.b16 %v1022
        %v2834 = vunpack.c.l.b16 %v1023
        %v2835 = vunpack.c.h.b16 %v1023
        %v2836 = vunpack.c.l.b16 %v1024
        %v2837 = vunpack.c.h.b16 %v1024
        %v2838 = vunpack.c.l.b16 %v1025
        %v2839 = vunpack.c.h.b16 %v1025
        %v2840 = vunpack.c.l.b16 %v1026
        %v2841 = vunpack.c.h.b16 %v1026
        %v2842 = vunpack.c.l.b16 %v1027
        %v2843 = vunpack.c.h.b16 %v1027
        %v2844 = vunpack.c.l.b16 %v1028
        %v2845 = vunpack.c.h.b16 %v1028
        %v2846 = vunpack.c.l.b16 %v1029
        %v2847 = vunpack.c.h.b16 %v1029
        %v2848 = vunpack.c.l.b16 %v1030
        %v2849 = vunpack.c.h.b16 %v1030
        %v2850 = vunpack.c.l.b16 %v1031
        %v2851 = vunpack.c.h.b16 %v1031
        %v2852 = vunpack.c.l.b16 %v1032
        %v2853 = vunpack.c.h.b16 %v1032
        %v2854 = vunpack.c.l.b16 %v1033
        %v2855 = vunpack.c.h.b16 %v1033
        %v2856 = vunpack.c.l.b16 %v1034
        %v2857 = vunpack.c.h.b16 %v1034
        %v2858 = vunpack.c.l.b16 %v1035
        %v2859 = vunpack.c.h.b16 %v1035
        %v2860 = vunpack.c.l.b16 %v1036
        %v2861 = vunpack.c.h.b16 %v1036
        %v2862 = vunpack.c.l.b16 %v1037
        %v2863 = vunpack.c.h.b16 %v1037
        %v2864 = vunpack.c.l.b16 %v1038
        %v2865 = vunpack.c.h.b16 %v1038
        %v2866 = vunpack.c.l.b16 %v1039
        %v2867 = vunpack.c.h.b16 %v1039
        %v2868 = vunpack.c.l.b16 %v1040
        %v2869 = vunpack.c.h.b16 %v1040
        %v2870 = vunpack.c.l.b16 %v1041
        %v2871 = vunpack.c.h.b16 %v1041
        %v2872 = vunpack.c.l.b16 %v1042
        %v2873 = vunpack.c.h.b16 %v1042
        %v2874 = vunpack.c.l.b16 %v1043
        %v2875 = vunpack.c.h.b16 %v1043
        %v2876 = vunpack.c.l.b16 %v1044
        %v2877 = vunpack.c.h.b16 %v1044
        %v2878 = vunpack.c.l.b16 %v1045
        %v2879 = vunpack.c.h.b16 %v1045
        %v2880 = vunpack.c.l.b16 %v1046
        %v2881 = vunpack.c.h.b16 %v1046
        %v2882 = vunpack.c.l.b16 %v1047
        %v2883 = vunpack.c.h.b16 %v1047
        %v2884 = vunpack.c.l.b16 %v1048
        %v2885 = vunpack.c.h.b16 %v1048
        %v2886 = vunpack.c.l.b16 %v1049
        %v2887 = vunpack.c.h.b16 %v1049
        %v2888 = vunpack.c.l.b16 %v1050
        %v2889 = vunpack.c.h.b16 %v1050
        %v2890 = vunpack.c.l.b16 %v1051
        %v2891 = vunpack.c.h.b16 %v1051
        %v2892 = vunpack.c.l.b16 %v1052
        %v2893 = vunpack.c.h.b16 %v1052
        %v2894 = vunpack.c.l.b16 %v1053
        %v2895 = vunpack.c.h.b16 %v1053
        %v2896 = vunpack.c.l.b16 %v1054
        %v2897 = vunpack.c.h.b16 %v1054
        %v2898 = vunpack.c.l.b16 %v1055
        %v2899 = vunpack.c.h.b16 %v1055
        %v2900 = vunpack.c.l.b16 %v1056
        %v2901 = vunpack.c.h.b16 %v1056
        %v2902 = vunpack.c.l.b16 %v1057
        %v2903 = vunpack.c.h.b16 %v1057
        %v2904 = vunpack.c.l.b16 %v1058
        %v2905 = vunpack.c.h.b16 %v1058
        %v2906 = vunpack.c.l.b16 %v1059
        %v2907 = vunpack.c.h.b16 %v1059
        %v2908 = vunpack.c.l.b16 %v1060
        %v2909 = vunpack.c.h.b16 %v1060
        %v2910 = vunpack.c.l.b16 %v1061
        %v2911 = vunpack.c.h.b16 %v1061
        %v2912 = vunpack.c.l.b16 %v1062
        %v2913 = vunpack.c.h.b16 %v1062
        %v2914 = vunpack.c.l.b16 %v1063
        %v2915 = vunpack.c.h.b16 %v1063
        %v2916 = vunpack.c.l.b16 %v1064
        %v2917 = vunpack.c.h.b16 %v1064
        %v2918 = vunpack.c.l.b16 %v1065
        %v2919 = vunpack.c.h.b16 %v1065
        %v2920 = vunpack.c.l.b16 %v1066
        %v2921 = vunpack.c.h.b16 %v1066
        %v2922 = vunpack.c.l.b16 %v1067
        %v2923 = vunpack.c.h.b16 %v1067
        %v2924 = vunpack.c.l.b16 %v1068
        %v2925 = vunpack.c.h.b16 %v1068
        %v2926 = vunpack.c.l.b16 %v1069
        %v2927 = vunpack.c.h.b16 %v1069
        %v2928 = vunpack.c.l.b16 %v1070
        %v2929 = vunpack.c.h.b16 %v1070
        %v2930 = vunpack.c.l.b16 %v1071
        %v2931 = vunpack.c.h.b16 %v1071
        %v2932 = vunpack.c.l.b16 %v1072
        %v2933 = vunpack.c.h.b16 %v1072
        %v2934 = vunpack.c.l.b16 %v1073
        %v2935 = vunpack.c.h.b16 %v1073
        %v2936 = vunpack.c.l.b16 %v1074
        %v2937 = vunpack.c.h.b16 %v1074
        %v2938 = vunpack.c.l.b16 %v1075
        %v2939 = vunpack.c.h.b16 %v1075
        %v2940 = vunpack.c.l.b16 %v1076
        %v2941 = vunpack.c.h.b16 %v1076
        %v2942 = vunpack.c.l.b16 %v1077
        %v2943 = vunpack.c.h.b16 %v1077
        %v2944 = vunpack.c.l.b16 %v1078
        %v2945 = vunpack.c.h.b16 %v1078
        %v2946 = vunpack.c.l.b16 %v1079
        %v2947 = vunpack.c.h.b16 %v1079
        %v2948 = vunpack.c.l.b16 %v1080
        %v2949 = vunpack.c.h.b16 %v1080
        %v2950 = vunpack.c.l.b16 %v1081
        %v2951 = vunpack.c.h.b16 %v1081
        %v2952 = vunpack.c.l.b16 %v1082
        %v2953 = vunpack.c.h.b16 %v1082
        %v2954 = vunpack.c.l.b16 %v1083
        %v2955 = vunpack.c.h.b16 %v1083
        %v2956 = vunpack.c.l.b16 %v1084
        %v2957 = vunpack.c.h.b16 %v1084
        %v2958 = vunpack.c.l.b16 %v1085
        %v2959 = vunpack.c.h.b16 %v1085
        %v2960 = vunpack.c.l.b16 %v1086
        %v2961 = vunpack.c.h.b16 %v1086
        %v2962 = vunpack.c.l.b16 %v1087
        %v2963 = vunpack.c.h.b16 %v1087
        %v2964 = vunpack.c.l.b16 %v1088
        %v2965 = vunpack.c.h.b16 %v1088
        %v2966 = vunpack.c.l.b16 %v1089
        %v2967 = vunpack.c.h.b16 %v1089
        %v2968 = vunpack.c.l.b16 %v1090
        %v2969 = vunpack.c.h.b16 %v1090
        %v2970 = vunpack.c.l.b16 %v1091
        %v2971 = vunpack.c.h.b16 %v1091
        %v2972 = vunpack.c.l.b16 %v1092
        %v2973 = vunpack.c.h.b16 %v1092
        %v2974 = vunpack.c.l.b16 %v1093
        %v2975 = vunpack.c.h.b16 %v1093
        %v2976 = vunpack.c.l.b16 %v1094
        %v2977 = vunpack.c.h.b16 %v1094
        %v2978 = vunpack.c.l.b16 %v1095
        %v2979 = vunpack.c.h.b16 %v1095
        %v2980 = vunpack.c.l.b16 %v1096
        %v2981 = vunpack.c.h.b16 %v1096
        %v2982 = vunpack.c.l.b16 %v1097
        %v2983 = vunpack.c.h.b16 %v1097
        %v2984 = vunpack.c.l.b16 %v1098
        %v2985 = vunpack.c.h.b16 %v1098
        %v2986 = vunpack.c.l.b16 %v1099
        %v2987 = vunpack.c.h.b16 %v1099
        %v2988 = vunpack.c.l.b16 %v1100
        %v2989 = vunpack.c.h.b16 %v1100
        %v2990 = vunpack.c.l.b16 %v1101
        %v2991 = vunpack.c.h.b16 %v1101
        %v2992 = vunpack.c.l.b16 %v1102
        %v2993 = vunpack.c.h.b16 %v1102
        %v2994 = vunpack.c.l.b16 %v1103
        %v2995 = vunpack.c.h.b16 %v1103
        %v2996 = vunpack.c.l.b16 %v1104
        %v2997 = vunpack.c.h.b16 %v1104
        %v2998 = vunpack.c.l.b16 %v1105
        %v2999 = vunpack.c.h.b16 %v1105
        %v3000 = vunpack.c.l.b16 %v1106
        %v3001 = vunpack.c.h.b16 %v1106
        %v3002 = vunpack.c.l.b16 %v1107
        %v3003 = vunpack.c.h.b16 %v1107
        %v3004 = vunpack.c.l.b16 %v1108
        %v3005 = vunpack.c.h.b16 %v1108
        %v3006 = vunpack.c.l.b16 %v1109
        %v3007 = vunpack.c.h.b16 %v1109
        %v3008 = vunpack.c.l.b16 %v1110
        %v3009 = vunpack.c.h.b16 %v1110
        %v3010 = vunpack.c.l.b16 %v1111
        %v3011 = vunpack.c.h.b16 %v1111
        %v3012 = vunpack.c.l.b16 %v1112
        %v3013 = vunpack.c.h.b16 %v1112
        %v3014 = vunpack.c.l.b16 %v1113
        %v3015 = vunpack.c.h.b16 %v1113
        %v3016 = vunpack.c.l.b16 %v1114
        %v3017 = vunpack.c.h.b16 %v1114
        %v3018 = vunpack.c.l.b16 %v1115
        %v3019 = vunpack.c.h.b16 %v1115
        %v3020 = vunpack.c.l.b16 %v1116
        %v3021 = vunpack.c.h.b16 %v1116
        %v3022 = vunpack.c.l.b16 %v1117
        %v3023 = vunpack.c.h.b16 %v1117
        %v3024 = vunpack.c.l.b16 %v1118
        %v3025 = vunpack.c.h.b16 %v1118
        %v3026 = vunpack.c.l.b16 %v1119
        %v3027 = vunpack.c.h.b16 %v1119
        %v3028 = vunpack.c.l.b16 %v1120
        %v3029 = vunpack.c.h.b16 %v1120
        %v3030 = vunpack.c.l.b16 %v1121
        %v3031 = vunpack.c.h.b16 %v1121
        %v3032 = vunpack.c.l.b16 %v1122
        %v3033 = vunpack.c.h.b16 %v1122
        %v3034 = vunpack.c.l.b16 %v1123
        %v3035 = vunpack.c.h.b16 %v1123
        %v3036 = vunpack.c.l.b16 %v1124
        %v3037 = vunpack.c.h.b16 %v1124
        %v3038 = vunpack.c.l.b16 %v1125
        %v3039 = vunpack.c.h.b16 %v1125
        %v3040 = vunpack.c.l.b16 %v1126
        %v3041 = vunpack.c.h.b16 %v1126
        %v3042 = vunpack.c.l.b16 %v1127
        %v3043 = vunpack.c.h.b16 %v1127
        %v3044 = vunpack.c.l.b16 %v1128
        %v3045 = vunpack.c.h.b16 %v1128
        %v3046 = vunpack.c.l.b16 %v1129
        %v3047 = vunpack.c.h.b16 %v1129
        %v3048 = vunpack.c.l.b16 %v1130
        %v3049 = vunpack.c.h.b16 %v1130
        %v3050 = vunpack.c.l.b16 %v1131
        %v3051 = vunpack.c.h.b16 %v1131
        %v3052 = vunpack.c.l.b16 %v1132
        %v3053 = vunpack.c.h.b16 %v1132
        %v3054 = vunpack.c.l.b16 %v1133
        %v3055 = vunpack.c.h.b16 %v1133
        %v3056 = vunpack.c.l.b16 %v1134
        %v3057 = vunpack.c.h.b16 %v1134
        %v3058 = vunpack.c.l.b16 %v1135
        %v3059 = vunpack.c.h.b16 %v1135
        %v3060 = vunpack.c.l.b16 %v1136
        %v3061 = vunpack.c.h.b16 %v1136
        %v3062 = vunpack.c.l.b16 %v1137
        %v3063 = vunpack.c.h.b16 %v1137
        %v3064 = vunpack.c.l.b16 %v1138
        %v3065 = vunpack.c.h.b16 %v1138
        %v3066 = vunpack.c.l.b16 %v1139
        %v3067 = vunpack.c.h.b16 %v1139
        %v3068 = vunpack.c.l.b16 %v1140
        %v3069 = vunpack.c.h.b16 %v1140
        %v3070 = vunpack.c.l.b16 %v1141
        %v3071 = vunpack.c.h.b16 %v1141
        %v3072 = vunpack.c.l.b16 %v1142
        %v3073 = vunpack.c.h.b16 %v1142
        %v3074 = vpack.c.b16 %v2826, %v2818
        %v3075 = vpack.c.b16 %v2827, %v2819
        %v3076 = vpack.c.b16 %v2828, %v2820
        %v3077 = vpack.c.b16 %v2829, %v2821
        %v3078 = vpack.c.b16 %v2830, %v2822
        %v3079 = vpack.c.b16 %v2831, %v2823
        %v3080 = vpack.c.b16 %v2832, %v2824
        %v3081 = vpack.c.b16 %v2833, %v2825
        %v3082 = vpack.c.b16 %v2842, %v2834
        %v3083 = vpack.c.b16 %v2843, %v2835
        %v3084 = vpack.c.b16 %v2844, %v2836
        %v3085 = vpack.c.b16 %v2845, %v2837
        %v3086 = vpack.c.b16 %v2846, %v2838
        %v3087 = vpack.c.b16 %v2847, %v2839
        %v3088 = vpack.c.b16 %v2848, %v2840
        %v3089 = vpack.c.b16 %v2849, %v2841
        %v3090 = vpack.c.b16 %v2858, %v2850
        %v3091 = vpack.c.b16 %v2859, %v2851
        %v3092 = vpack.c.b16 %v2860, %v2852
        %v3093 = vpack.c.b16 %v2861, %v2853
        %v3094 = vpack.c.b16 %v2862, %v2854
        %v3095 = vpack.c.b16 %v2863, %v2855
        %v3096 = vpack.c.b16 %v2864, %v2856
        %v3097 = vpack.c.b16 %v2865, %v2857
        %v3098 = vpack.c.b16 %v2874, %v2866
        %v3099 = vpack.c.b16 %v2875, %v2867
        %v3100 = vpack.c.b16 %v2876, %v2868
        %v3101 = vpack.c.b16 %v2877, %v2869
        %v3102 = vpack.c.b16 %v2878, %v2870
        %v3103 = vpack.c.b16 %v2879, %v2871
        %v3104 = vpack.c.b16 %v2880, %v2872
        %v3105 = vpack.c.b16 %v2881, %v2873
        %v3106 = vpack.c.b16 %v2890, %v2882
        %v3107 = vpack.c.b16 %v2891, %v2883
        %v3108 = vpack.c.b16 %v2892, %v2884
        %v3109 = vpack.c.b16 %v2893, %v2885
        %v3110 = vpack.c.b16 %v2894, %v2886
        %v3111 = vpack.c.b16 %v2895, %v2887
        %v3112 = vpack.c.b16 %v2896, %v2888
        %v3113 = vpack.c.b16 %v2897, %v2889
        %v3114 = vpack.c.b16 %v2906, %v2898
        %v3115 = vpack.c.b16 %v2907, %v2899
        %v3116 = vpack.c.b16 %v2908, %v2900
        %v3117 = vpack.c.b16 %v2909, %v2901
        %v3118 = vpack.c.b16 %v2910, %v2902
        %v3119 = vpack.c.b16 %v2911, %v2903
        %v3120 = vpack.c.b16 %v2912, %v2904
        %v3121 = vpack.c.b16 %v2913, %v2905
        %v3122 = vpack.c.b16 %v2922, %v2914
        %v3123 = vpack.c.b16 %v2923, %v2915
        %v3124 = vpack.c.b16 %v2924, %v2916
        %v3125 = vpack.c.b16 %v2925, %v2917
        %v3126 = vpack.c.b16 %v2926, %v2918
        %v3127 = vpack.c.b16 %v2927, %v2919
        %v3128 = vpack.c.b16 %v2928, %v2920
        %v3129 = vpack.c.b16 %v2929, %v2921
        %v3130 = vpack.c.b16 %v2938, %v2930
        %v3131 = vpack.c.b16 %v2939, %v2931
        %v3132 = vpack.c.b16 %v2940, %v2932
        %v3133 = vpack.c.b16 %v2941, %v2933
        %v3134 = vpack.c.b16 %v2942, %v2934
        %v3135 = vpack.c.b16 %v2943, %v2935
        %v3136 = vpack.c.b16 %v2944, %v2936
        %v3137 = vpack.c.b16 %v2945, %v2937
        %v3138 = vpack.c.b16 %v2954, %v2946
        %v3139 = vpack.c.b16 %v2955, %v2947
        %v3140 = vpack.c.b16 %v2956, %v2948
        %v3141 = vpack.c.b16 %v2957, %v2949
        %v3142 = vpack.c.b16 %v2958, %v2950
        %v3143 = vpack.c.b16 %v2959, %v2951
        %v3144 = vpack.c.b16 %v2960, %v2952
        %v3145 = vpack.c.b16 %v2961, %v2953
        %v3146 = vpack.c.b16 %v2970, %v2962
        %v3147 = vpack.c.b16 %v2971, %v2963
        %v3148 = vpack.c.b16 %v2972, %v2964
        %v3149 = vpack.c.b16 %v2973, %v2965
        %v3150 = vpack.c.b16 %v2974, %v2966
        %v3151 = vpack.c.b16 %v2975, %v2967
        %v3152 = vpack.c.b16 %v2976, %v2968
        %v3153 = vpack.c.b16 %v2977, %v2969
        %v3154 = vpack.c.b16 %v2986, %v2978
        %v3155 = vpack.c.b16 %v2987, %v2979
        %v3156 = vpack.c.b16 %v2988, %v2980
        %v3157 = vpack.c.b16 %v2989, %v2981
        %v3158 = vpack.c.b16 %v2990, %v2982
        %v3159 = vpack.c.b16 %v2991, %v2983
        %v3160 = vpack.c.b16 %v2992, %v2984
        %v3161 = vpack.c.b16 %v2993, %v2985
        %v3162 = vpack.c.b16 %v3002, %v2994
        %v3163 = vpack.c.b16 %v3003, %v2995
        %v3164 = vpack.c.b16 %v3004, %v2996
        %v3165 = vpack.c.b16 %v3005, %v2997
        %v3166 = vpack.c.b16 %v3006, %v2998
        %v3167 = vpack.c.b16 %v3007, %v2999
        %v3168 = vpack.c.b16 %v3008, %v3000
        %v3169 = vpack.c.b16 %v3009, %v3001
        %v3170 = vpack.c.b16 %v3018, %v3010
        %v3171 = vpack.c.b16 %v3019, %v3011
        %v3172 = vpack.c.b16 %v3020, %v3012
        %v3173 = vpack.c.b16 %v3021, %v3013
        %v3174 = vpack.c.b16 %v3022, %v3014
        %v3175 = vpack.c.b16 %v3023, %v3015
        %v3176 = vpack.c.b16 %v3024, %v3016
        %v3177 = vpack.c.b16 %v3025, %v3017
        %v3178 = vpack.c.b16 %v3034, %v3026
        %v3179 = vpack.c.b16 %v3035, %v3027
        %v3180 = vpack.c.b16 %v3036, %v3028
        %v3181 = vpack.c.b16 %v3037, %v3029
        %v3182 = vpack.c.b16 %v3038, %v3030
        %v3183 = vpack.c.b16 %v3039, %v3031
        %v3184 = vpack.c.b16 %v3040, %v3032
        %v3185 = vpack.c.b16 %v3041, %v3033
        %v3186 = vpack.c.b16 %v3050, %v3042
        %v3187 = vpack.c.b16 %v3051, %v3043
        %v3188 = vpack.c.b16 %v3052, %v3044
        %v3189 = vpack.c.b16 %v3053, %v3045
        %v3190 = vpack.c.b16 %v3054, %v3046
        %v3191 = vpack.c.b16 %v3055, %v3047
        %v3192 = vpack.c.b16 %v3056, %v3048
        %v3193 = vpack.c.b16 %v3057, %v3049
        %v3194 = vpack.c.b16 %v3066, %v3058
        %v3195 = vpack.c.b16 %v3067, %v3059
        %v3196 = vpack.c.b16 %v3068, %v3060
        %v3197 = vpack.c.b16 %v3069, %v3061
        %v3198 = vpack.c.b16 %v3070, %v3062
        %v3199 = vpack.c.b16 %v3071, %v3063
        %v3200 = vpack.c.b16 %v3072, %v3064
        %v3201 = vpack.c.b16 %v3073, %v3065
        %3330 = vmatprep.subr.bf16.mxu0 %v3131
        %3331 = vmatpush1.bf16.msra.mxu0 %v3130
        %3332 = vmatprep.subr.bf16.mxu0 %v3123
        %3333 = vmatpush1.bf16.msra.mxu0 %v3122
        %3334 = vmatprep.subr.bf16.mxu0 %v3115
        %3335 = vmatpush1.bf16.msra.mxu0 %v3114
        %3336 = vmatprep.subr.bf16.mxu0 %v3107
        %3337 = vmatpush1.bf16.msra.mxu0 %v3106
        %3338 = vmatprep.subr.bf16.mxu0 %v3099
        %3339 = vmatpush1.bf16.msra.mxu0 %v3098
        %3340 = vmatprep.subr.bf16.mxu0 %v3091
        %3341 = vmatpush1.bf16.msra.mxu0 %v3090
        %3342 = vmatprep.subr.bf16.mxu0 %v3083
        %3343 = vmatpush1.bf16.msra.mxu0 %v3082
        %3344 = vmatprep.subr.bf16.mxu0 %v3075
        %3345 = vmatpush1.bf16.msra.mxu0 %v3074
        %3346 = vmatprep.subr.bf16.mxu0 %v3195
        %3347 = vmatpush2.bf16.msra.mxu0 %v3194
        %3348 = vmatprep.subr.bf16.mxu0 %v3187
        %3349 = vmatpush2.bf16.msra.mxu0 %v3186
        %3350 = vmatprep.subr.bf16.mxu0 %v3179
        %3351 = vmatpush2.bf16.msra.mxu0 %v3178
        %3352 = vmatprep.subr.bf16.mxu0 %v3171
        %3353 = vmatpush2.bf16.msra.mxu0 %v3170
        %3354 = vmatprep.subr.bf16.mxu0 %v3163
        %3355 = vmatpush2.bf16.msra.mxu0 %v3162
        %3356 = vmatprep.subr.bf16.mxu0 %v3155
        %3357 = vmatpush2.bf16.msra.mxu0 %v3154
        %3358 = vmatprep.subr.bf16.mxu0 %v3147
        %3359 = vmatpush2.bf16.msra.mxu0 %v3146
        %3360 = vmatprep.subr.bf16.mxu0 %v3139
        %3361 = vmatpush2.bf16.msra.mxu0 %v3138
        %3362 = vmatprep.mubr.bf16.mxu0 %v2648
        %3363 = vmatmul.mubr.bf16.gmra.mxu0 %v2647
        %v3364 = vpop.f32.mrf.mxu0
        %v3365 = vadd.f32 %v2653, %v3364
        %v3366 = vpop.f32.mrf.mxu0
        %v3367 = vadd.f32 %v2657, %v3366
        %v3368 = vpop.f32.mrf.mxu0
        %v3369 = vadd.f32 %v2653, %v3368
        %v3370 = vpop.f32.mrf.mxu0
        %v3371 = vadd.f32 %v2657, %v3370
        %3372 = vdwg.mxu0
        %3373 = vmatprep.subr.bf16.mxu0 %v3133
        %3374 = vmatpush1.bf16.msra.mxu0 %v3132
        %3375 = vmatprep.subr.bf16.mxu0 %v3125
        %3376 = vmatpush1.bf16.msra.mxu0 %v3124
        %3377 = vmatprep.subr.bf16.mxu0 %v3117
        %3378 = vmatpush1.bf16.msra.mxu0 %v3116
        %3379 = vmatprep.subr.bf16.mxu0 %v3109
        %3380 = vmatpush1.bf16.msra.mxu0 %v3108
        %3381 = vmatprep.subr.bf16.mxu0 %v3101
        %3382 = vmatpush1.bf16.msra.mxu0 %v3100
        %3383 = vmatprep.subr.bf16.mxu0 %v3093
        %3384 = vmatpush1.bf16.msra.mxu0 %v3092
        %3385 = vmatprep.subr.bf16.mxu0 %v3085
        %3386 = vmatpush1.bf16.msra.mxu0 %v3084
        %3387 = vmatprep.subr.bf16.mxu0 %v3077
        %3388 = vmatpush1.bf16.msra.mxu0 %v3076
        %3389 = vmatprep.subr.bf16.mxu0 %v3197
        %3390 = vmatpush2.bf16.msra.mxu0 %v3196
        %3391 = vmatprep.subr.bf16.mxu0 %v3189
        %3392 = vmatpush2.bf16.msra.mxu0 %v3188
        %3393 = vmatprep.subr.bf16.mxu0 %v3181
        %3394 = vmatpush2.bf16.msra.mxu0 %v3180
        %3395 = vmatprep.subr.bf16.mxu0 %v3173
        %3396 = vmatpush2.bf16.msra.mxu0 %v3172
        %3397 = vmatprep.subr.bf16.mxu0 %v3165
        %3398 = vmatpush2.bf16.msra.mxu0 %v3164
        %3399 = vmatprep.subr.bf16.mxu0 %v3157
        %3400 = vmatpush2.bf16.msra.mxu0 %v3156
        %3401 = vmatprep.subr.bf16.mxu0 %v3149
        %3402 = vmatpush2.bf16.msra.mxu0 %v3148
        %3403 = vmatprep.subr.bf16.mxu0 %v3141
        %3404 = vmatpush2.bf16.msra.mxu0 %v3140
        %3405 = vmatprep.mubr.bf16.mxu0 %v2648
        %3406 = vmatmul.mubr.bf16.gmra.mxu0 %v2647
        %v3407 = vpop.f32.mrf.mxu0
        %v3408 = vadd.f32 %v2661, %v3407
        %v3409 = vpop.f32.mrf.mxu0
        %v3410 = vadd.f32 %v2665, %v3409
        %v3411 = vpop.f32.mrf.mxu0
        %v3412 = vadd.f32 %v2661, %v3411
        %v3413 = vpop.f32.mrf.mxu0
        %v3414 = vadd.f32 %v2665, %v3413
        %3415 = vdwg.mxu0
        %3416 = vmatprep.subr.bf16.mxu0 %v3135
        %3417 = vmatpush1.bf16.msra.mxu0 %v3134
        %3418 = vmatprep.subr.bf16.mxu0 %v3127
        %3419 = vmatpush1.bf16.msra.mxu0 %v3126
        %3420 = vmatprep.subr.bf16.mxu0 %v3119
        %3421 = vmatpush1.bf16.msra.mxu0 %v3118
        %3422 = vmatprep.subr.bf16.mxu0 %v3111
        %3423 = vmatpush1.bf16.msra.mxu0 %v3110
        %3424 = vmatprep.subr.bf16.mxu0 %v3103
        %3425 = vmatpush1.bf16.msra.mxu0 %v3102
        %3426 = vmatprep.subr.bf16.mxu0 %v3095
        %3427 = vmatpush1.bf16.msra.mxu0 %v3094
        %3428 = vmatprep.subr.bf16.mxu0 %v3087
        %3429 = vmatpush1.bf16.msra.mxu0 %v3086
        %3430 = vmatprep.subr.bf16.mxu0 %v3079
        %3431 = vmatpush1.bf16.msra.mxu0 %v3078
        %3432 = vmatprep.subr.bf16.mxu0 %v3199
        %3433 = vmatpush2.bf16.msra.mxu0 %v3198
        %3434 = vmatprep.subr.bf16.mxu0 %v3191
        %3435 = vmatpush2.bf16.msra.mxu0 %v3190
        %3436 = vmatprep.subr.bf16.mxu0 %v3183
        %3437 = vmatpush2.bf16.msra.mxu0 %v3182
        %3438 = vmatprep.subr.bf16.mxu0 %v3175
        %3439 = vmatpush2.bf16.msra.mxu0 %v3174
        %3440 = vmatprep.subr.bf16.mxu0 %v3167
        %3441 = vmatpush2.bf16.msra.mxu0 %v3166
        %3442 = vmatprep.subr.bf16.mxu0 %v3159
        %3443 = vmatpush2.bf16.msra.mxu0 %v3158
        %3444 = vmatprep.subr.bf16.mxu0 %v3151
        %3445 = vmatpush2.bf16.msra.mxu0 %v3150
        %3446 = vmatprep.subr.bf16.mxu0 %v3143
        %3447 = vmatpush2.bf16.msra.mxu0 %v3142
        %3448 = vmatprep.mubr.bf16.mxu0 %v2648
        %3449 = vmatmul.mubr.bf16.gmra.mxu0 %v2647
        %v3450 = vpop.f32.mrf.mxu0
        %v3451 = vadd.f32 %v2669, %v3450
        %v3452 = vpop.f32.mrf.mxu0
        %v3453 = vadd.f32 %v2673, %v3452
        %v3454 = vpop.f32.mrf.mxu0
        %v3455 = vadd.f32 %v2669, %v3454
        %v3456 = vpop.f32.mrf.mxu0
        %v3457 = vadd.f32 %v2673, %v3456
        %3458 = vdwg.mxu0
        %3459 = vmatprep.subr.bf16.mxu0 %v3137
        %3460 = vmatpush1.bf16.msra.mxu0 %v3136
        %3461 = vmatprep.subr.bf16.mxu0 %v3129
        %3462 = vmatpush1.bf16.msra.mxu0 %v3128
        %3463 = vmatprep.subr.bf16.mxu0 %v3121
        %3464 = vmatpush1.bf16.msra.mxu0 %v3120
        %3465 = vmatprep.subr.bf16.mxu0 %v3113
        %3466 = vmatpush1.bf16.msra.mxu0 %v3112
        %3467 = vmatprep.subr.bf16.mxu0 %v3105
        %3468 = vmatpush1.bf16.msra.mxu0 %v3104
        %3469 = vmatprep.subr.bf16.mxu0 %v3097
        %3470 = vmatpush1.bf16.msra.mxu0 %v3096
        %3471 = vmatprep.subr.bf16.mxu0 %v3089
        %3472 = vmatpush1.bf16.msra.mxu0 %v3088
        %3473 = vmatprep.subr.bf16.mxu0 %v3081
        %3474 = vmatpush1.bf16.msra.mxu0 %v3080
        %3475 = vmatprep.subr.bf16.mxu0 %v3201
        %3476 = vmatpush2.bf16.msra.mxu0 %v3200
        %3477 = vmatprep.subr.bf16.mxu0 %v3193
        %3478 = vmatpush2.bf16.msra.mxu0 %v3192
        %3479 = vmatprep.subr.bf16.mxu0 %v3185
        %3480 = vmatpush2.bf16.msra.mxu0 %v3184
        %3481 = vmatprep.subr.bf16.mxu0 %v3177
        %3482 = vmatpush2.bf16.msra.mxu0 %v3176
        %3483 = vmatprep.subr.bf16.mxu0 %v3169
        %3484 = vmatpush2.bf16.msra.mxu0 %v3168
        %3485 = vmatprep.subr.bf16.mxu0 %v3161
        %3486 = vmatpush2.bf16.msra.mxu0 %v3160
        %3487 = vmatprep.subr.bf16.mxu0 %v3153
        %3488 = vmatpush2.bf16.msra.mxu0 %v3152
        %3489 = vmatprep.subr.bf16.mxu0 %v3145
        %3490 = vmatpush2.bf16.msra.mxu0 %v3144
        %3491 = vmatprep.mubr.bf16.mxu0 %v2648
        %3492 = vmatmul.mubr.bf16.gmra.mxu0 %v2647
        %v3493 = vpop.f32.mrf.mxu0
        %v3494 = vadd.f32 %v2677, %v3493
        %v3495 = vpop.f32.mrf.mxu0
        %v3496 = vadd.f32 %v2681, %v3495
        %v3497 = vpop.f32.mrf.mxu0
        %v3498 = vadd.f32 %v2677, %v3497
        %v3499 = vpop.f32.mrf.mxu0
        %v3500 = vadd.f32 %v2681, %v3499
        %3501 = vdwg.mxu0
        %v3502 = vmax.f32 %v3365, 0.0
        %v3503 = vmax.f32 %v3367, 0.0
        %v3504 = vmax.f32 %v3408, 0.0
        %v3505 = vmax.f32 %v3410, 0.0
        %v3506 = vmax.f32 %v3451, 0.0
        %v3507 = vmax.f32 %v3453, 0.0
        %v3508 = vmax.f32 %v3494, 0.0
        %v3509 = vmax.f32 %v3496, 0.0
        %v3510 = vmax.f32 %v3369, 0.0
        %v3511 = vmax.f32 %v3371, 0.0
        %v3512 = vmax.f32 %v3412, 0.0
        %v3513 = vmax.f32 %v3414, 0.0
        %v3514 = vmax.f32 %v3455, 0.0
        %v3515 = vmax.f32 %v3457, 0.0
        %v3516 = vmax.f32 %v3498, 0.0
        %v3517 = vmax.f32 %v3500, 0.0
        %v3518 = vpack.c.bf16 %v3510, %v3502
        %v3519 = vpack.c.bf16 %v3511, %v3503
        %v3520 = vpack.c.bf16 %v3512, %v3504
        %v3521 = vpack.c.bf16 %v3513, %v3505
        %v3522 = vpack.c.bf16 %v3514, %v3506
        %v3523 = vpack.c.bf16 %v3515, %v3507
        %v3524 = vpack.c.bf16 %v3516, %v3508
        %v3525 = vpack.c.bf16 %v3517, %v3509
        %v3527 = vlaneseq
        %v3528 = vshrl.u32 %v3527, 7
        %v3529 = vsub.s32 0, %v3528
        %v3530 = vrot.slane %v1272, %v3529
        %v3531 = vlaneseq
        %v3532 = vshrl.u32 %v3531, 7
        %v3533 = vsub.s32 1, %v3532
        %v3534 = vrot.slane %v1272, %v3533
        %v3665 = vunpack.c.l.b16 %v1144
        %v3666 = vunpack.c.h.b16 %v1144
        %v3667 = vunpack.c.l.b16 %v1145
        %v3668 = vunpack.c.h.b16 %v1145
        %v3669 = vunpack.c.l.b16 %v1146
        %v3670 = vunpack.c.h.b16 %v1146
        %v3671 = vunpack.c.l.b16 %v1147
        %v3672 = vunpack.c.h.b16 %v1147
        %v3673 = vunpack.c.l.b16 %v1148
        %v3674 = vunpack.c.h.b16 %v1148
        %v3675 = vunpack.c.l.b16 %v1149
        %v3676 = vunpack.c.h.b16 %v1149
        %v3677 = vunpack.c.l.b16 %v1150
        %v3678 = vunpack.c.h.b16 %v1150
        %v3679 = vunpack.c.l.b16 %v1151
        %v3680 = vunpack.c.h.b16 %v1151
        %v3681 = vunpack.c.l.b16 %v1152
        %v3682 = vunpack.c.h.b16 %v1152
        %v3683 = vunpack.c.l.b16 %v1153
        %v3684 = vunpack.c.h.b16 %v1153
        %v3685 = vunpack.c.l.b16 %v1154
        %v3686 = vunpack.c.h.b16 %v1154
        %v3687 = vunpack.c.l.b16 %v1155
        %v3688 = vunpack.c.h.b16 %v1155
        %v3689 = vunpack.c.l.b16 %v1156
        %v3690 = vunpack.c.h.b16 %v1156
        %v3691 = vunpack.c.l.b16 %v1157
        %v3692 = vunpack.c.h.b16 %v1157
        %v3693 = vunpack.c.l.b16 %v1158
        %v3694 = vunpack.c.h.b16 %v1158
        %v3695 = vunpack.c.l.b16 %v1159
        %v3696 = vunpack.c.h.b16 %v1159
        %v3697 = vunpack.c.l.b16 %v1160
        %v3698 = vunpack.c.h.b16 %v1160
        %v3699 = vunpack.c.l.b16 %v1161
        %v3700 = vunpack.c.h.b16 %v1161
        %v3701 = vunpack.c.l.b16 %v1162
        %v3702 = vunpack.c.h.b16 %v1162
        %v3703 = vunpack.c.l.b16 %v1163
        %v3704 = vunpack.c.h.b16 %v1163
        %v3705 = vunpack.c.l.b16 %v1164
        %v3706 = vunpack.c.h.b16 %v1164
        %v3707 = vunpack.c.l.b16 %v1165
        %v3708 = vunpack.c.h.b16 %v1165
        %v3709 = vunpack.c.l.b16 %v1166
        %v3710 = vunpack.c.h.b16 %v1166
        %v3711 = vunpack.c.l.b16 %v1167
        %v3712 = vunpack.c.h.b16 %v1167
        %v3713 = vunpack.c.l.b16 %v1168
        %v3714 = vunpack.c.h.b16 %v1168
        %v3715 = vunpack.c.l.b16 %v1169
        %v3716 = vunpack.c.h.b16 %v1169
        %v3717 = vunpack.c.l.b16 %v1170
        %v3718 = vunpack.c.h.b16 %v1170
        %v3719 = vunpack.c.l.b16 %v1171
        %v3720 = vunpack.c.h.b16 %v1171
        %v3721 = vunpack.c.l.b16 %v1172
        %v3722 = vunpack.c.h.b16 %v1172
        %v3723 = vunpack.c.l.b16 %v1173
        %v3724 = vunpack.c.h.b16 %v1173
        %v3725 = vunpack.c.l.b16 %v1174
        %v3726 = vunpack.c.h.b16 %v1174
        %v3727 = vunpack.c.l.b16 %v1175
        %v3728 = vunpack.c.h.b16 %v1175
        %v3729 = vunpack.c.l.b16 %v1176
        %v3730 = vunpack.c.h.b16 %v1176
        %v3731 = vunpack.c.l.b16 %v1177
        %v3732 = vunpack.c.h.b16 %v1177
        %v3733 = vunpack.c.l.b16 %v1178
        %v3734 = vunpack.c.h.b16 %v1178
        %v3735 = vunpack.c.l.b16 %v1179
        %v3736 = vunpack.c.h.b16 %v1179
        %v3737 = vunpack.c.l.b16 %v1180
        %v3738 = vunpack.c.h.b16 %v1180
        %v3739 = vunpack.c.l.b16 %v1181
        %v3740 = vunpack.c.h.b16 %v1181
        %v3741 = vunpack.c.l.b16 %v1182
        %v3742 = vunpack.c.h.b16 %v1182
        %v3743 = vunpack.c.l.b16 %v1183
        %v3744 = vunpack.c.h.b16 %v1183
        %v3745 = vunpack.c.l.b16 %v1184
        %v3746 = vunpack.c.h.b16 %v1184
        %v3747 = vunpack.c.l.b16 %v1185
        %v3748 = vunpack.c.h.b16 %v1185
        %v3749 = vunpack.c.l.b16 %v1186
        %v3750 = vunpack.c.h.b16 %v1186
        %v3751 = vunpack.c.l.b16 %v1187
        %v3752 = vunpack.c.h.b16 %v1187
        %v3753 = vunpack.c.l.b16 %v1188
        %v3754 = vunpack.c.h.b16 %v1188
        %v3755 = vunpack.c.l.b16 %v1189
        %v3756 = vunpack.c.h.b16 %v1189
        %v3757 = vunpack.c.l.b16 %v1190
        %v3758 = vunpack.c.h.b16 %v1190
        %v3759 = vunpack.c.l.b16 %v1191
        %v3760 = vunpack.c.h.b16 %v1191
        %v3761 = vunpack.c.l.b16 %v1192
        %v3762 = vunpack.c.h.b16 %v1192
        %v3763 = vunpack.c.l.b16 %v1193
        %v3764 = vunpack.c.h.b16 %v1193
        %v3765 = vunpack.c.l.b16 %v1194
        %v3766 = vunpack.c.h.b16 %v1194
        %v3767 = vunpack.c.l.b16 %v1195
        %v3768 = vunpack.c.h.b16 %v1195
        %v3769 = vunpack.c.l.b16 %v1196
        %v3770 = vunpack.c.h.b16 %v1196
        %v3771 = vunpack.c.l.b16 %v1197
        %v3772 = vunpack.c.h.b16 %v1197
        %v3773 = vunpack.c.l.b16 %v1198
        %v3774 = vunpack.c.h.b16 %v1198
        %v3775 = vunpack.c.l.b16 %v1199
        %v3776 = vunpack.c.h.b16 %v1199
        %v3777 = vunpack.c.l.b16 %v1200
        %v3778 = vunpack.c.h.b16 %v1200
        %v3779 = vunpack.c.l.b16 %v1201
        %v3780 = vunpack.c.h.b16 %v1201
        %v3781 = vunpack.c.l.b16 %v1202
        %v3782 = vunpack.c.h.b16 %v1202
        %v3783 = vunpack.c.l.b16 %v1203
        %v3784 = vunpack.c.h.b16 %v1203
        %v3785 = vunpack.c.l.b16 %v1204
        %v3786 = vunpack.c.h.b16 %v1204
        %v3787 = vunpack.c.l.b16 %v1205
        %v3788 = vunpack.c.h.b16 %v1205
        %v3789 = vunpack.c.l.b16 %v1206
        %v3790 = vunpack.c.h.b16 %v1206
        %v3791 = vunpack.c.l.b16 %v1207
        %v3792 = vunpack.c.h.b16 %v1207
        %v3793 = vunpack.c.l.b16 %v1208
        %v3794 = vunpack.c.h.b16 %v1208
        %v3795 = vunpack.c.l.b16 %v1209
        %v3796 = vunpack.c.h.b16 %v1209
        %v3797 = vunpack.c.l.b16 %v1210
        %v3798 = vunpack.c.h.b16 %v1210
        %v3799 = vunpack.c.l.b16 %v1211
        %v3800 = vunpack.c.h.b16 %v1211
        %v3801 = vunpack.c.l.b16 %v1212
        %v3802 = vunpack.c.h.b16 %v1212
        %v3803 = vunpack.c.l.b16 %v1213
        %v3804 = vunpack.c.h.b16 %v1213
        %v3805 = vunpack.c.l.b16 %v1214
        %v3806 = vunpack.c.h.b16 %v1214
        %v3807 = vunpack.c.l.b16 %v1215
        %v3808 = vunpack.c.h.b16 %v1215
        %v3809 = vunpack.c.l.b16 %v1216
        %v3810 = vunpack.c.h.b16 %v1216
        %v3811 = vunpack.c.l.b16 %v1217
        %v3812 = vunpack.c.h.b16 %v1217
        %v3813 = vunpack.c.l.b16 %v1218
        %v3814 = vunpack.c.h.b16 %v1218
        %v3815 = vunpack.c.l.b16 %v1219
        %v3816 = vunpack.c.h.b16 %v1219
        %v3817 = vunpack.c.l.b16 %v1220
        %v3818 = vunpack.c.h.b16 %v1220
        %v3819 = vunpack.c.l.b16 %v1221
        %v3820 = vunpack.c.h.b16 %v1221
        %v3821 = vunpack.c.l.b16 %v1222
        %v3822 = vunpack.c.h.b16 %v1222
        %v3823 = vunpack.c.l.b16 %v1223
        %v3824 = vunpack.c.h.b16 %v1223
        %v3825 = vunpack.c.l.b16 %v1224
        %v3826 = vunpack.c.h.b16 %v1224
        %v3827 = vunpack.c.l.b16 %v1225
        %v3828 = vunpack.c.h.b16 %v1225
        %v3829 = vunpack.c.l.b16 %v1226
        %v3830 = vunpack.c.h.b16 %v1226
        %v3831 = vunpack.c.l.b16 %v1227
        %v3832 = vunpack.c.h.b16 %v1227
        %v3833 = vunpack.c.l.b16 %v1228
        %v3834 = vunpack.c.h.b16 %v1228
        %v3835 = vunpack.c.l.b16 %v1229
        %v3836 = vunpack.c.h.b16 %v1229
        %v3837 = vunpack.c.l.b16 %v1230
        %v3838 = vunpack.c.h.b16 %v1230
        %v3839 = vunpack.c.l.b16 %v1231
        %v3840 = vunpack.c.h.b16 %v1231
        %v3841 = vunpack.c.l.b16 %v1232
        %v3842 = vunpack.c.h.b16 %v1232
        %v3843 = vunpack.c.l.b16 %v1233
        %v3844 = vunpack.c.h.b16 %v1233
        %v3845 = vunpack.c.l.b16 %v1234
        %v3846 = vunpack.c.h.b16 %v1234
        %v3847 = vunpack.c.l.b16 %v1235
        %v3848 = vunpack.c.h.b16 %v1235
        %v3849 = vunpack.c.l.b16 %v1236
        %v3850 = vunpack.c.h.b16 %v1236
        %v3851 = vunpack.c.l.b16 %v1237
        %v3852 = vunpack.c.h.b16 %v1237
        %v3853 = vunpack.c.l.b16 %v1238
        %v3854 = vunpack.c.h.b16 %v1238
        %v3855 = vunpack.c.l.b16 %v1239
        %v3856 = vunpack.c.h.b16 %v1239
        %v3857 = vunpack.c.l.b16 %v1240
        %v3858 = vunpack.c.h.b16 %v1240
        %v3859 = vunpack.c.l.b16 %v1241
        %v3860 = vunpack.c.h.b16 %v1241
        %v3861 = vunpack.c.l.b16 %v1242
        %v3862 = vunpack.c.h.b16 %v1242
        %v3863 = vunpack.c.l.b16 %v1243
        %v3864 = vunpack.c.h.b16 %v1243
        %v3865 = vunpack.c.l.b16 %v1244
        %v3866 = vunpack.c.h.b16 %v1244
        %v3867 = vunpack.c.l.b16 %v1245
        %v3868 = vunpack.c.h.b16 %v1245
        %v3869 = vunpack.c.l.b16 %v1246
        %v3870 = vunpack.c.h.b16 %v1246
        %v3871 = vunpack.c.l.b16 %v1247
        %v3872 = vunpack.c.h.b16 %v1247
        %v3873 = vunpack.c.l.b16 %v1248
        %v3874 = vunpack.c.h.b16 %v1248
        %v3875 = vunpack.c.l.b16 %v1249
        %v3876 = vunpack.c.h.b16 %v1249
        %v3877 = vunpack.c.l.b16 %v1250
        %v3878 = vunpack.c.h.b16 %v1250
        %v3879 = vunpack.c.l.b16 %v1251
        %v3880 = vunpack.c.h.b16 %v1251
        %v3881 = vunpack.c.l.b16 %v1252
        %v3882 = vunpack.c.h.b16 %v1252
        %v3883 = vunpack.c.l.b16 %v1253
        %v3884 = vunpack.c.h.b16 %v1253
        %v3885 = vunpack.c.l.b16 %v1254
        %v3886 = vunpack.c.h.b16 %v1254
        %v3887 = vunpack.c.l.b16 %v1255
        %v3888 = vunpack.c.h.b16 %v1255
        %v3889 = vunpack.c.l.b16 %v1256
        %v3890 = vunpack.c.h.b16 %v1256
        %v3891 = vunpack.c.l.b16 %v1257
        %v3892 = vunpack.c.h.b16 %v1257
        %v3893 = vunpack.c.l.b16 %v1258
        %v3894 = vunpack.c.h.b16 %v1258
        %v3895 = vunpack.c.l.b16 %v1259
        %v3896 = vunpack.c.h.b16 %v1259
        %v3897 = vunpack.c.l.b16 %v1260
        %v3898 = vunpack.c.h.b16 %v1260
        %v3899 = vunpack.c.l.b16 %v1261
        %v3900 = vunpack.c.h.b16 %v1261
        %v3901 = vunpack.c.l.b16 %v1262
        %v3902 = vunpack.c.h.b16 %v1262
        %v3903 = vunpack.c.l.b16 %v1263
        %v3904 = vunpack.c.h.b16 %v1263
        %v3905 = vunpack.c.l.b16 %v1264
        %v3906 = vunpack.c.h.b16 %v1264
        %v3907 = vunpack.c.l.b16 %v1265
        %v3908 = vunpack.c.h.b16 %v1265
        %v3909 = vunpack.c.l.b16 %v1266
        %v3910 = vunpack.c.h.b16 %v1266
        %v3911 = vunpack.c.l.b16 %v1267
        %v3912 = vunpack.c.h.b16 %v1267
        %v3913 = vunpack.c.l.b16 %v1268
        %v3914 = vunpack.c.h.b16 %v1268
        %v3915 = vunpack.c.l.b16 %v1269
        %v3916 = vunpack.c.h.b16 %v1269
        %v3917 = vunpack.c.l.b16 %v1270
        %v3918 = vunpack.c.h.b16 %v1270
        %v3919 = vunpack.c.l.b16 %v1271
        %v3920 = vunpack.c.h.b16 %v1271
        %v3921 = vpack.c.b16 %v3667, %v3665
        %v3922 = vpack.c.b16 %v3668, %v3666
        %v3923 = vpack.c.b16 %v3671, %v3669
        %v3924 = vpack.c.b16 %v3672, %v3670
        %v3925 = vpack.c.b16 %v3675, %v3673
        %v3926 = vpack.c.b16 %v3676, %v3674
        %v3927 = vpack.c.b16 %v3679, %v3677
        %v3928 = vpack.c.b16 %v3680, %v3678
        %v3929 = vpack.c.b16 %v3683, %v3681
        %v3930 = vpack.c.b16 %v3684, %v3682
        %v3931 = vpack.c.b16 %v3687, %v3685
        %v3932 = vpack.c.b16 %v3688, %v3686
        %v3933 = vpack.c.b16 %v3691, %v3689
        %v3934 = vpack.c.b16 %v3692, %v3690
        %v3935 = vpack.c.b16 %v3695, %v3693
        %v3936 = vpack.c.b16 %v3696, %v3694
        %v3937 = vpack.c.b16 %v3699, %v3697
        %v3938 = vpack.c.b16 %v3700, %v3698
        %v3939 = vpack.c.b16 %v3703, %v3701
        %v3940 = vpack.c.b16 %v3704, %v3702
        %v3941 = vpack.c.b16 %v3707, %v3705
        %v3942 = vpack.c.b16 %v3708, %v3706
        %v3943 = vpack.c.b16 %v3711, %v3709
        %v3944 = vpack.c.b16 %v3712, %v3710
        %v3945 = vpack.c.b16 %v3715, %v3713
        %v3946 = vpack.c.b16 %v3716, %v3714
        %v3947 = vpack.c.b16 %v3719, %v3717
        %v3948 = vpack.c.b16 %v3720, %v3718
        %v3949 = vpack.c.b16 %v3723, %v3721
        %v3950 = vpack.c.b16 %v3724, %v3722
        %v3951 = vpack.c.b16 %v3727, %v3725
        %v3952 = vpack.c.b16 %v3728, %v3726
        %v3953 = vpack.c.b16 %v3731, %v3729
        %v3954 = vpack.c.b16 %v3732, %v3730
        %v3955 = vpack.c.b16 %v3735, %v3733
        %v3956 = vpack.c.b16 %v3736, %v3734
        %v3957 = vpack.c.b16 %v3739, %v3737
        %v3958 = vpack.c.b16 %v3740, %v3738
        %v3959 = vpack.c.b16 %v3743, %v3741
        %v3960 = vpack.c.b16 %v3744, %v3742
        %v3961 = vpack.c.b16 %v3747, %v3745
        %v3962 = vpack.c.b16 %v3748, %v3746
        %v3963 = vpack.c.b16 %v3751, %v3749
        %v3964 = vpack.c.b16 %v3752, %v3750
        %v3965 = vpack.c.b16 %v3755, %v3753
        %v3966 = vpack.c.b16 %v3756, %v3754
        %v3967 = vpack.c.b16 %v3759, %v3757
        %v3968 = vpack.c.b16 %v3760, %v3758
        %v3969 = vpack.c.b16 %v3763, %v3761
        %v3970 = vpack.c.b16 %v3764, %v3762
        %v3971 = vpack.c.b16 %v3767, %v3765
        %v3972 = vpack.c.b16 %v3768, %v3766
        %v3973 = vpack.c.b16 %v3771, %v3769
        %v3974 = vpack.c.b16 %v3772, %v3770
        %v3975 = vpack.c.b16 %v3775, %v3773
        %v3976 = vpack.c.b16 %v3776, %v3774
        %v3977 = vpack.c.b16 %v3779, %v3777
        %v3978 = vpack.c.b16 %v3780, %v3778
        %v3979 = vpack.c.b16 %v3783, %v3781
        %v3980 = vpack.c.b16 %v3784, %v3782
        %v3981 = vpack.c.b16 %v3787, %v3785
        %v3982 = vpack.c.b16 %v3788, %v3786
        %v3983 = vpack.c.b16 %v3791, %v3789
        %v3984 = vpack.c.b16 %v3792, %v3790
        %v3985 = vpack.c.b16 %v3795, %v3793
        %v3986 = vpack.c.b16 %v3796, %v3794
        %v3987 = vpack.c.b16 %v3799, %v3797
        %v3988 = vpack.c.b16 %v3800, %v3798
        %v3989 = vpack.c.b16 %v3803, %v3801
        %v3990 = vpack.c.b16 %v3804, %v3802
        %v3991 = vpack.c.b16 %v3807, %v3805
        %v3992 = vpack.c.b16 %v3808, %v3806
        %v3993 = vpack.c.b16 %v3811, %v3809
        %v3994 = vpack.c.b16 %v3812, %v3810
        %v3995 = vpack.c.b16 %v3815, %v3813
        %v3996 = vpack.c.b16 %v3816, %v3814
        %v3997 = vpack.c.b16 %v3819, %v3817
        %v3998 = vpack.c.b16 %v3820, %v3818
        %v3999 = vpack.c.b16 %v3823, %v3821
        %v4000 = vpack.c.b16 %v3824, %v3822
        %v4001 = vpack.c.b16 %v3827, %v3825
        %v4002 = vpack.c.b16 %v3828, %v3826
        %v4003 = vpack.c.b16 %v3831, %v3829
        %v4004 = vpack.c.b16 %v3832, %v3830
        %v4005 = vpack.c.b16 %v3835, %v3833
        %v4006 = vpack.c.b16 %v3836, %v3834
        %v4007 = vpack.c.b16 %v3839, %v3837
        %v4008 = vpack.c.b16 %v3840, %v3838
        %v4009 = vpack.c.b16 %v3843, %v3841
        %v4010 = vpack.c.b16 %v3844, %v3842
        %v4011 = vpack.c.b16 %v3847, %v3845
        %v4012 = vpack.c.b16 %v3848, %v3846
        %v4013 = vpack.c.b16 %v3851, %v3849
        %v4014 = vpack.c.b16 %v3852, %v3850
        %v4015 = vpack.c.b16 %v3855, %v3853
        %v4016 = vpack.c.b16 %v3856, %v3854
        %v4017 = vpack.c.b16 %v3859, %v3857
        %v4018 = vpack.c.b16 %v3860, %v3858
        %v4019 = vpack.c.b16 %v3863, %v3861
        %v4020 = vpack.c.b16 %v3864, %v3862
        %v4021 = vpack.c.b16 %v3867, %v3865
        %v4022 = vpack.c.b16 %v3868, %v3866
        %v4023 = vpack.c.b16 %v3871, %v3869
        %v4024 = vpack.c.b16 %v3872, %v3870
        %v4025 = vpack.c.b16 %v3875, %v3873
        %v4026 = vpack.c.b16 %v3876, %v3874
        %v4027 = vpack.c.b16 %v3879, %v3877
        %v4028 = vpack.c.b16 %v3880, %v3878
        %v4029 = vpack.c.b16 %v3883, %v3881
        %v4030 = vpack.c.b16 %v3884, %v3882
        %v4031 = vpack.c.b16 %v3887, %v3885
        %v4032 = vpack.c.b16 %v3888, %v3886
        %v4033 = vpack.c.b16 %v3891, %v3889
        %v4034 = vpack.c.b16 %v3892, %v3890
        %v4035 = vpack.c.b16 %v3895, %v3893
        %v4036 = vpack.c.b16 %v3896, %v3894
        %v4037 = vpack.c.b16 %v3899, %v3897
        %v4038 = vpack.c.b16 %v3900, %v3898
        %v4039 = vpack.c.b16 %v3903, %v3901
        %v4040 = vpack.c.b16 %v3904, %v3902
        %v4041 = vpack.c.b16 %v3907, %v3905
        %v4042 = vpack.c.b16 %v3908, %v3906
        %v4043 = vpack.c.b16 %v3911, %v3909
        %v4044 = vpack.c.b16 %v3912, %v3910
        %v4045 = vpack.c.b16 %v3915, %v3913
        %v4046 = vpack.c.b16 %v3916, %v3914
        %v4047 = vpack.c.b16 %v3919, %v3917
        %v4048 = vpack.c.b16 %v3920, %v3918
        %4177 = vmatprep.subr.bf16.mxu0 %v3936
        %4178 = vmatpush1.bf16.msra.mxu0 %v3935
        %4179 = vmatprep.subr.bf16.mxu0 %v3934
        %4180 = vmatpush1.bf16.msra.mxu0 %v3933
        %4181 = vmatprep.subr.bf16.mxu0 %v3932
        %4182 = vmatpush1.bf16.msra.mxu0 %v3931
        %4183 = vmatprep.subr.bf16.mxu0 %v3930
        %4184 = vmatpush1.bf16.msra.mxu0 %v3929
        %4185 = vmatprep.subr.bf16.mxu0 %v3928
        %4186 = vmatpush1.bf16.msra.mxu0 %v3927
        %4187 = vmatprep.subr.bf16.mxu0 %v3926
        %4188 = vmatpush1.bf16.msra.mxu0 %v3925
        %4189 = vmatprep.subr.bf16.mxu0 %v3924
        %4190 = vmatpush1.bf16.msra.mxu0 %v3923
        %4191 = vmatprep.subr.bf16.mxu0 %v3922
        %4192 = vmatpush1.bf16.msra.mxu0 %v3921
        %4193 = vmatprep.subr.bf16.mxu0 %v3952
        %4194 = vmatpush2.bf16.msra.mxu0 %v3951
        %4195 = vmatprep.subr.bf16.mxu0 %v3950
        %4196 = vmatpush2.bf16.msra.mxu0 %v3949
        %4197 = vmatprep.subr.bf16.mxu0 %v3948
        %4198 = vmatpush2.bf16.msra.mxu0 %v3947
        %4199 = vmatprep.subr.bf16.mxu0 %v3946
        %4200 = vmatpush2.bf16.msra.mxu0 %v3945
        %4201 = vmatprep.subr.bf16.mxu0 %v3944
        %4202 = vmatpush2.bf16.msra.mxu0 %v3943
        %4203 = vmatprep.subr.bf16.mxu0 %v3942
        %4204 = vmatpush2.bf16.msra.mxu0 %v3941
        %4205 = vmatprep.subr.bf16.mxu0 %v3940
        %4206 = vmatpush2.bf16.msra.mxu0 %v3939
        %4207 = vmatprep.subr.bf16.mxu0 %v3938
        %4208 = vmatpush2.bf16.msra.mxu0 %v3937
        %4209 = vmatprep.mubr.bf16.mxu0 %v3519
        %4210 = vmatmul.mubr.bf16.gmra.mxu0 %v3518
        %v4211 = vpop.f32.mrf.mxu0
        %v4212 = vadd.f32 %v3530, %v4211
        %v4213 = vpop.f32.mrf.mxu0
        %v4214 = vadd.f32 %v3534, %v4213
        %v4215 = vpop.f32.mrf.mxu0
        %v4216 = vadd.f32 %v3530, %v4215
        %v4217 = vpop.f32.mrf.mxu0
        %v4218 = vadd.f32 %v3534, %v4217
        %4219 = vdwg.mxu0
        %4220 = vmatprep.subr.bf16.mxu0 %v3968
        %4221 = vmatpush1.bf16.msra.mxu0 %v3967
        %4222 = vmatprep.subr.bf16.mxu0 %v3966
        %4223 = vmatpush1.bf16.msra.mxu0 %v3965
        %4224 = vmatprep.subr.bf16.mxu0 %v3964
        %4225 = vmatpush1.bf16.msra.mxu0 %v3963
        %4226 = vmatprep.subr.bf16.mxu0 %v3962
        %4227 = vmatpush1.bf16.msra.mxu0 %v3961
        %4228 = vmatprep.subr.bf16.mxu0 %v3960
        %4229 = vmatpush1.bf16.msra.mxu0 %v3959
        %4230 = vmatprep.subr.bf16.mxu0 %v3958
        %4231 = vmatpush1.bf16.msra.mxu0 %v3957
        %4232 = vmatprep.subr.bf16.mxu0 %v3956
        %4233 = vmatpush1.bf16.msra.mxu0 %v3955
        %4234 = vmatprep.subr.bf16.mxu0 %v3954
        %4235 = vmatpush1.bf16.msra.mxu0 %v3953
        %4236 = vmatprep.subr.bf16.mxu0 %v3984
        %4237 = vmatpush2.bf16.msra.mxu0 %v3983
        %4238 = vmatprep.subr.bf16.mxu0 %v3982
        %4239 = vmatpush2.bf16.msra.mxu0 %v3981
        %4240 = vmatprep.subr.bf16.mxu0 %v3980
        %4241 = vmatpush2.bf16.msra.mxu0 %v3979
        %4242 = vmatprep.subr.bf16.mxu0 %v3978
        %4243 = vmatpush2.bf16.msra.mxu0 %v3977
        %4244 = vmatprep.subr.bf16.mxu0 %v3976
        %4245 = vmatpush2.bf16.msra.mxu0 %v3975
        %4246 = vmatprep.subr.bf16.mxu0 %v3974
        %4247 = vmatpush2.bf16.msra.mxu0 %v3973
        %4248 = vmatprep.subr.bf16.mxu0 %v3972
        %4249 = vmatpush2.bf16.msra.mxu0 %v3971
        %4250 = vmatprep.subr.bf16.mxu0 %v3970
        %4251 = vmatpush2.bf16.msra.mxu0 %v3969
        %4252 = vmatprep.mubr.bf16.mxu0 %v3521
        %4253 = vmatmul.mubr.bf16.gmra.mxu0 %v3520
        %v4254 = vpop.f32.mrf.mxu0
        %v4255 = vadd.f32 %v4212, %v4254
        %v4256 = vpop.f32.mrf.mxu0
        %v4257 = vadd.f32 %v4214, %v4256
        %v4258 = vpop.f32.mrf.mxu0
        %v4259 = vadd.f32 %v4216, %v4258
        %v4260 = vpop.f32.mrf.mxu0
        %v4261 = vadd.f32 %v4218, %v4260
        %4262 = vdwg.mxu0
        %4263 = vmatprep.subr.bf16.mxu0 %v4000
        %4264 = vmatpush1.bf16.msra.mxu0 %v3999
        %4265 = vmatprep.subr.bf16.mxu0 %v3998
        %4266 = vmatpush1.bf16.msra.mxu0 %v3997
        %4267 = vmatprep.subr.bf16.mxu0 %v3996
        %4268 = vmatpush1.bf16.msra.mxu0 %v3995
        %4269 = vmatprep.subr.bf16.mxu0 %v3994
        %4270 = vmatpush1.bf16.msra.mxu0 %v3993
        %4271 = vmatprep.subr.bf16.mxu0 %v3992
        %4272 = vmatpush1.bf16.msra.mxu0 %v3991
        %4273 = vmatprep.subr.bf16.mxu0 %v3990
        %4274 = vmatpush1.bf16.msra.mxu0 %v3989
        %4275 = vmatprep.subr.bf16.mxu0 %v3988
        %4276 = vmatpush1.bf16.msra.mxu0 %v3987
        %4277 = vmatprep.subr.bf16.mxu0 %v3986
        %4278 = vmatpush1.bf16.msra.mxu0 %v3985
        %4279 = vmatprep.subr.bf16.mxu0 %v4016
        %4280 = vmatpush2.bf16.msra.mxu0 %v4015
        %4281 = vmatprep.subr.bf16.mxu0 %v4014
        %4282 = vmatpush2.bf16.msra.mxu0 %v4013
        %4283 = vmatprep.subr.bf16.mxu0 %v4012
        %4284 = vmatpush2.bf16.msra.mxu0 %v4011
        %4285 = vmatprep.subr.bf16.mxu0 %v4010
        %4286 = vmatpush2.bf16.msra.mxu0 %v4009
        %4287 = vmatprep.subr.bf16.mxu0 %v4008
        %4288 = vmatpush2.bf16.msra.mxu0 %v4007
        %4289 = vmatprep.subr.bf16.mxu0 %v4006
        %4290 = vmatpush2.bf16.msra.mxu0 %v4005
        %4291 = vmatprep.subr.bf16.mxu0 %v4004
        %4292 = vmatpush2.bf16.msra.mxu0 %v4003
        %4293 = vmatprep.subr.bf16.mxu0 %v4002
        %4294 = vmatpush2.bf16.msra.mxu0 %v4001
        %4295 = vmatprep.mubr.bf16.mxu0 %v3523
        %4296 = vmatmul.mubr.bf16.gmra.mxu0 %v3522
        %v4297 = vpop.f32.mrf.mxu0
        %v4298 = vadd.f32 %v4255, %v4297
        %v4299 = vpop.f32.mrf.mxu0
        %v4300 = vadd.f32 %v4257, %v4299
        %v4301 = vpop.f32.mrf.mxu0
        %v4302 = vadd.f32 %v4259, %v4301
        %v4303 = vpop.f32.mrf.mxu0
        %v4304 = vadd.f32 %v4261, %v4303
        %4305 = vdwg.mxu0
        %4306 = vmatprep.subr.bf16.mxu0 %v4032
        %4307 = vmatpush1.bf16.msra.mxu0 %v4031
        %4308 = vmatprep.subr.bf16.mxu0 %v4030
        %4309 = vmatpush1.bf16.msra.mxu0 %v4029
        %4310 = vmatprep.subr.bf16.mxu0 %v4028
        %4311 = vmatpush1.bf16.msra.mxu0 %v4027
        %4312 = vmatprep.subr.bf16.mxu0 %v4026
        %4313 = vmatpush1.bf16.msra.mxu0 %v4025
        %4314 = vmatprep.subr.bf16.mxu0 %v4024
        %4315 = vmatpush1.bf16.msra.mxu0 %v4023
        %4316 = vmatprep.subr.bf16.mxu0 %v4022
        %4317 = vmatpush1.bf16.msra.mxu0 %v4021
        %4318 = vmatprep.subr.bf16.mxu0 %v4020
        %4319 = vmatpush1.bf16.msra.mxu0 %v4019
        %4320 = vmatprep.subr.bf16.mxu0 %v4018
        %4321 = vmatpush1.bf16.msra.mxu0 %v4017
        %4322 = vmatprep.subr.bf16.mxu0 %v4048
        %4323 = vmatpush2.bf16.msra.mxu0 %v4047
        %4324 = vmatprep.subr.bf16.mxu0 %v4046
        %4325 = vmatpush2.bf16.msra.mxu0 %v4045
        %4326 = vmatprep.subr.bf16.mxu0 %v4044
        %4327 = vmatpush2.bf16.msra.mxu0 %v4043
        %4328 = vmatprep.subr.bf16.mxu0 %v4042
        %4329 = vmatpush2.bf16.msra.mxu0 %v4041
        %4330 = vmatprep.subr.bf16.mxu0 %v4040
        %4331 = vmatpush2.bf16.msra.mxu0 %v4039
        %4332 = vmatprep.subr.bf16.mxu0 %v4038
        %4333 = vmatpush2.bf16.msra.mxu0 %v4037
        %4334 = vmatprep.subr.bf16.mxu0 %v4036
        %4335 = vmatpush2.bf16.msra.mxu0 %v4035
        %4336 = vmatprep.subr.bf16.mxu0 %v4034
        %4337 = vmatpush2.bf16.msra.mxu0 %v4033
        %4338 = vmatprep.mubr.bf16.mxu0 %v3525
        %4339 = vmatmul.mubr.bf16.gmra.mxu0 %v3524
        %v4340 = vpop.f32.mrf.mxu0
        %v4341 = vadd.f32 %v4298, %v4340
        %v4342 = vpop.f32.mrf.mxu0
        %v4343 = vadd.f32 %v4300, %v4342
        %v4344 = vpop.f32.mrf.mxu0
        %v4345 = vadd.f32 %v4302, %v4344
        %v4346 = vpop.f32.mrf.mxu0
        %v4347 = vadd.f32 %v4304, %v4346
        %4348 = vdwg.mxu0
        %v4349 = vadd.f32 %v2643, %v4341
        %v4350 = vadd.f32 %v2644, %v4343
        %v4351 = vadd.f32 %v2645, %v4345
        %v4352 = vadd.f32 %v2646, %v4347
        %v4353 = vadd.f32 %v4349, %v4350
        %4354 = vadd.xlane.f32.xlu0 %v4353
        %v4355 = vpop.xlane.xlu0 %4354
        %v4356 = vadd.f32 %v4351, %v4352
        %4357 = vadd.xlane.f32.xlu0 %v4356
        %v4358 = vpop.xlane.xlu0 %4357
        %v4359 = vmul.f32 %v4355, %v2590
        %v4360 = vmul.f32 %v4358, %v2590
        %v4361 = vsub.f32 %v4349, %v4359
        %v4362 = vsub.f32 %v4350, %v4359
        %v4363 = vsub.f32 %v4351, %v4360
        %v4364 = vsub.f32 %v4352, %v4360
        %v4365 = vmul.f32 %v4361, %v4361
        %v4366 = vmul.f32 %v4362, %v4362
        %v4367 = vmul.f32 %v4363, %v4363
        %v4368 = vmul.f32 %v4364, %v4364
        %v4369 = vadd.f32 %v4365, %v4366
        %4370 = vadd.xlane.f32.xlu0 %v4369
        %v4371 = vpop.xlane.xlu0 %4370
        %v4372 = vadd.f32 %v4367, %v4368
        %4373 = vadd.xlane.f32.xlu0 %v4372
        %v4374 = vpop.xlane.xlu0 %4373
        %v4375 = vmul.f32 %v4371, %v2590
        %v4376 = vmul.f32 %v4374, %v2590
        %v4377 = vadd.f32 %v4375, 1e-06
        %v4378 = vadd.f32 %v4376, 1e-06
        %v4379 = vrsqrt.pop %v4377
        %v4380 = vrsqrt.pop %v4378
        %v4381 = vmul.f32 %v4361, %v4379
        %v4382 = vmul.f32 %v4362, %v4379
        %v4383 = vmul.f32 %v4363, %v4380
        %v4384 = vmul.f32 %v4364, %v4380
        %v4386 = vlaneseq
        %v4387 = vshrl.u32 %v4386, 7
        %v4388 = vsub.s32 0, %v4387
        %v4389 = vrot.slane %v1273, %v4388
        %v4390 = vlaneseq
        %v4391 = vshrl.u32 %v4390, 7
        %v4392 = vsub.s32 1, %v4391
        %v4393 = vrot.slane %v1273, %v4392
        %v4396 = vmul.f32 %v4381, %v4389
        %v4397 = vmul.f32 %v4382, %v4393
        %v4398 = vmul.f32 %v4383, %v4389
        %v4399 = vmul.f32 %v4384, %v4393
        %v4401 = vlaneseq
        %v4402 = vshrl.u32 %v4401, 7
        %v4403 = vsub.s32 0, %v4402
        %v4404 = vrot.slane %v1274, %v4403
        %v4405 = vlaneseq
        %v4406 = vshrl.u32 %v4405, 7
        %v4407 = vsub.s32 1, %v4406
        %v4408 = vrot.slane %v1274, %v4407
        %v4411 = vadd.f32 %v4396, %v4404
        %v4412 = vadd.f32 %v4397, %v4408
        %v4413 = vadd.f32 %v4398, %v4404
        %v4414 = vadd.f32 %v4399, %v4408
        %4415 = vst [vmem:[#allocation2] sm:$0xff] %v4411
        %4416 = vst [vmem:[#allocation2 + $0x8] sm:$0xff] %v4412
        %4417 = vst [vmem:[#allocation2 + $0x10] sm:$0xff] %v4413
        %4418 = vst [vmem:[#allocation2 + $0x18] sm:$0xff] %v4414
        %p4419 = scmp.eq.s32.totalorder %s44, 2
        // Predicated region
        $region129: #{tpu_custom_call.1} parent=71 // pred_check
          %p4420 = pneg %p4419
        $region130: #{tpu_custom_call.1} parent=71 // pred_check_branch
          %4422 = sbr.rel (%p4420) target = $region132
        $region131: #{tpu_custom_call.1} parent=71 // pred_region
          %4423 = vst [vmem:[#allocation24] sm:$0xff] %v4411
          %4424 = vst [vmem:[#allocation24 + $0x8] sm:$0xff] %v4412
          %4425 = vst [vmem:[#allocation24 + $0x10] sm:$0xff] %v4413
          %4426 = vst [vmem:[#allocation24 + $0x18] sm:$0xff] %v4414
        $region132: #{tpu_custom_call.1} parent=71 // pred_fallthru
          _
        // Predicated region
        $region133: #{tpu_custom_call.1} parent=71 // pred_check
          %p4427 = pneg %p390
        $region134: #{tpu_custom_call.1} parent=71 // pred_check_branch
          %4429 = sbr.rel (%p4427) target = $region136
        $region135: #{tpu_custom_call.1} parent=71 // pred_region
          %s4431 = ssub.s32 512, 512
          %4432 = vsyncadd [#allocation5], %s4431
          %s4433 = sshll.u32 [#allocation24], 4
          %s4434 = int_to_ptr.vmem [resolvable:$true] %s4433
          %4439 = dma.vmem_to_hbm [thread:$0]  %s4434, 512, %s13, [#allocation5], 256, 256, 16
        $region136: #{tpu_custom_call.1} parent=71 // pred_fallthru
          _
        // Predicated region
        $region137: #{tpu_custom_call.1} parent=71 // pred_check
          %p4440 = pneg %p390
        $region138: #{tpu_custom_call.1} parent=71 // pred_check_branch
          %4442 = sbr.rel (%p4440) target = $region140
        $region139: #{tpu_custom_call.1} parent=71 // pred_region
          %4443 = dma.done [#allocation5], 512
        $region140: #{tpu_custom_call.1} parent=71 // pred_fallthru
          _
      $region72: #{tpu_custom_call.1} parent=5 // pred_fallthru
        _
      %p4444 = scmp.le.s32.totalorder 2, %s39
      // Predicated region
      $region141: #{tpu_custom_call.1} parent=5 // pred_check
        %p4445 = pneg %p4444
      $region142: #{tpu_custom_call.1} parent=5 // pred_check_branch
        %4447 = sbr.rel (%p4445) target = $region144
      $region143: #{tpu_custom_call.1} parent=5 // pred_region
        %s4448 = ssub.s32 %s39, 2
      $region144: #{tpu_custom_call.1} parent=5 // pred_fallthru
        _
    $region6: #{tpu_custom_call.1} parent=1 // loop_footer
      %s43 = sadd.s32 1, %s39
    $region7: #{tpu_custom_call.1} parent=1 // loop_footer_branch
      %38 = sbr.rel target = $region3
    $region8: #{tpu_custom_call.1} parent=1 // loop_exit
      _
    %4449 = vsyncpa [#allocation4], 1
    %s4450 = scalar_lea.sflag [#allocation4], 1
    %4451 = vsyncpa %s4450, 1
    %4452 = vsyncpa [#allocation7], 1
    %s4453 = scalar_lea.sflag [#allocation7], 1
    %4454 = vsyncpa %s4453, 1
    %4455 = vsyncpa [#allocation10], 1
    %s4456 = scalar_lea.sflag [#allocation10], 1
    %4457 = vsyncpa %s4456, 1
    %4458 = vsyncpa [#allocation13], 1
    %s4459 = scalar_lea.sflag [#allocation13], 1
    %4460 = vsyncpa %s4459, 1
    %4461 = vsyncpa [#allocation16], 1
    %s4462 = scalar_lea.sflag [#allocation16], 1
    %4463 = vsyncpa %s4462, 1
    %4464 = vsyncpa [#allocation19], 1
    %s4465 = scalar_lea.sflag [#allocation19], 1
    %4466 = vsyncpa %s4465, 1
    %4467 = vsyncpa [#allocation22], 1
    %s4468 = scalar_lea.sflag [#allocation22], 1
    %4469 = vsyncpa %s4468, 1
    %4470 = vsyncpa [#allocation5], 1
    %s4471 = scalar_lea.sflag [#allocation5], 1
    %4472 = vsyncpa %s4471, 1

</llo_original>
